<compile_context>
chip_gen: v7x
topology: tpu7x:2x2x1
jax: 0.10.0
libtpu: 0.0.40
codegen_flags: <defaults>
</compile_context>

<pallas_src>
import functools
import math

import jax
import jax.numpy as jnp
from jax.experimental import pallas as pl
from jax.experimental.pallas import tpu as pltpu


# --------------------------------------------------------------------------
# Kernel 1: LSTM recurrence, returns last hidden state h_T.
# Grid: (batch_blocks "parallel", time_chunks "arbitrary").
#   x_ref:   (1, Tc, 8, 1)  x column view for this batch block / time chunk
#   whh_ref: (H, 4H)        W_hh^T (constant index map -> resident in VMEM)
#   wih_ref: (1, 4H)        W_ih^T (input_size == 1)
#   b_ref:   (1, 4H)        b_ih + b_hh
#   out_ref: (8, H)         last hidden state for this batch block
#   h_scr/c_scr: (8, H)     persistent state across time chunks
# --------------------------------------------------------------------------
def lstm_kernel(x_ref, whh_ref, wih_ref, b_ref, out_ref, h_scr, c_scr,
                *, t_valid, mask_tail):
    tci = pl.program_id(1)
    tc = x_ref.shape[1]
    H = whh_ref.shape[0]

    @pl.when(tci == 0)
    def _():
        h_scr[...] = jnp.zeros_like(h_scr)
        c_scr[...] = jnp.zeros_like(c_scr)

    wih = wih_ref[...]                       # (1, 4H)
    bias = b_ref[...]                        # (1, 4H)
    base = tci * tc

    def step(t, carry):
        h, c = carry
        # input_size == 1: x_t is an (8, 1) column; its projection is a
        # broadcast FMA (no HBM slab, no extra MXU push).
        xz = x_ref[0, t] * wih + bias                                 # (8, 4H)
        z = jnp.dot(h, whh_ref[...], preferred_element_type=jnp.float32) + xz
        i = jax.nn.sigmoid(z[:, 0:H])
        f = jax.nn.sigmoid(z[:, H:2 * H])
        g = jnp.tanh(z[:, 2 * H:3 * H])
        o = jax.nn.sigmoid(z[:, 3 * H:4 * H])
        c_new = f * c + i * g
        h_new = o * jnp.tanh(c_new)
        if mask_tail:                        # only traced when T was padded
            keep = (base + t) < t_valid
            h_new = jnp.where(keep, h_new, h)
            c_new = jnp.where(keep, c_new, c)
        return (h_new, c_new)

    # moderate unroll for LLO visibility; drop to 4 if the bundle shows spills
    unroll = True if tc <= 32 else 8
    h, c = jax.lax.fori_loop(0, tc, step, (h_scr[...], c_scr[...]),
                             unroll=unroll)
    h_scr[...] = h
    c_scr[...] = c
    out_ref[...] = h


def lstm_last(x, kp, *, batch_block=8, time_chunk=128):
    B, T = x.shape
    H = kp["whh_t"].shape[0]
    bb = batch_block
    B_pad = -(-B // bb) * bb
    n_bb = B_pad // bb
    tc = T if T <= time_chunk else time_chunk
    T_pad = -(-T // tc) * tc
    n_tc = T_pad // tc

    x_p = jnp.pad(x, ((0, B_pad - B), (0, T_pad - T)))
    # (n_bb, T_pad, 8, 1): per-step access x_ref[0, t] is a ready-made (8, 1)
    # sublane column (leading-dim dynamic index only).
    x_cols = x_p.reshape(n_bb, bb, T_pad).transpose(0, 2, 1)[..., None]

    kern = functools.partial(lstm_kernel, t_valid=T, mask_tail=(T_pad != T))
    out = pl.pallas_call(
        kern,
        out_shape=jax.ShapeDtypeStruct((B_pad, H), jnp.float32),
        grid=(n_bb, n_tc),
        in_specs=[
            pl.BlockSpec((1, tc, bb, 1), lambda b, t: (b, t, 0, 0)),
            pl.BlockSpec((H, 4 * H), lambda b, t: (0, 0)),    # resident weights
            pl.BlockSpec((1, 4 * H), lambda b, t: (0, 0)),
            pl.BlockSpec((1, 4 * H), lambda b, t: (0, 0)),
        ],
        out_specs=pl.BlockSpec((bb, H), lambda b, t: (b, 0)),
        scratch_shapes=[pltpu.VMEM((bb, H), jnp.float32),
                        pltpu.VMEM((bb, H), jnp.float32)],
        compiler_params=pltpu.CompilerParams(
            dimension_semantics=("parallel", "arbitrary")),
    )(x_cols, kp["whh_t"], kp["wih_t"], kp["lstm_b"])
    return out[:B]


# --------------------------------------------------------------------------
# Kernel 2: fused FCN branch (conv1 -> conv2 -> conv3 -> GAP), one batch
# element per grid step.  BN folded into weights; output is the (1,128) GAP.
# --------------------------------------------------------------------------
def fcn_gap_kernel(xc_ref, w1_ref, b1_ref, w2_ref, b2_ref, w3_ref, b3_ref,
                   out_ref, act1_scr, act2_scr,
                   *, k2, k3, p2, p3, L1, L2, L3):
    C1 = w1_ref.shape[1]      # 128
    C2 = w2_ref.shape[1]      # 256

    # conv1: single (L1, k1) @ (k1, 128) matmul (im2col built in the wrapper).
    z1 = jnp.dot(xc_ref[0], w1_ref[...], preferred_element_type=jnp.float32)
    act1 = jnp.maximum(z1 + b1_ref[...], 0.0)                      # (L1, 128)

    # zero only the 2*p2 halo rows, then write the body.
    if p2 > 0:
        act1_scr[0:p2, :] = jnp.zeros((p2, C1), jnp.float32)
        act1_scr[p2 + L1:p2 + L1 + p2, :] = jnp.zeros((p2, C1), jnp.float32)
    act1_scr[p2:p2 + L1, :] = act1

    # conv2: k-tap accumulated matmuls (no im2col scratch).
    z2 = jnp.dot(act1_scr[0:L2, :], w2_ref[0:C1, :],
                 preferred_element_type=jnp.float32)
    for j in range(1, k2):
        z2 = z2 + jnp.dot(act1_scr[j:j + L2, :],
                          w2_ref[j * C1:(j + 1) * C1, :],
                          preferred_element_type=jnp.float32)
    act2 = jnp.maximum(z2 + b2_ref[...], 0.0)                      # (L2, 256)

    if p3 > 0:
        act2_scr[0:p3, :] = jnp.zeros((p3, C2), jnp.float32)
        act2_scr[p3 + L2:p3 + L2 + p3, :] = jnp.zeros((p3, C2), jnp.float32)
    act2_scr[p3:p3 + L2, :] = act2

    # conv3: k-tap accumulated matmuls.
    z3 = jnp.dot(act2_scr[0:L3, :], w3_ref[0:C2, :],
                 preferred_element_type=jnp.float32)
    for j in range(1, k3):
        z3 = z3 + jnp.dot(act2_scr[j:j + L3, :],
                          w3_ref[j * C2:(j + 1) * C2, :],
                          preferred_element_type=jnp.float32)
    act3 = jnp.maximum(z3 + b3_ref[...], 0.0)                      # (L3, 128)

    # GAP over time (sublane reduction) -> lane-dense (1, 128) output row.
    out_ref[0] = (jnp.sum(act3, axis=0, keepdims=True)
                  * (1.0 / L3)).astype(out_ref.dtype)


def fcn_gap(x, kp):
    B, T = x.shape
    k1, k2, k3 = kp["k1"], kp["k2"], kp["k3"]
    p1, p2, p3 = kp["pad1"], kp["pad2"], kp["pad3"]
    C1 = kp["w1"].shape[1]
    C2 = kp["w2"].shape[1]
    L1 = T + 2 * p1 - k1 + 1
    L2 = L1 + 2 * p2 - k2 + 1
    L3 = L2 + 2 * p3 - k3 + 1

    # conv1 im2col in the wrapper: x_col[b, l, j] = x_pad[b, l + j].
    x_pad = jnp.pad(x, ((0, 0), (p1, p1)))
    x_col = jnp.stack([x_pad[:, j:j + L1] for j in range(k1)], axis=-1)

    kern = functools.partial(fcn_gap_kernel, k2=k2, k3=k3, p2=p2, p3=p3,
                             L1=L1, L2=L2, L3=L3)

    def bcast(arr):
        # whole-array block, same block index every step -> stays resident.
        nd = arr.ndim
        return pl.BlockSpec(arr.shape, lambda b, _nd=nd: (0,) * _nd)

    out = pl.pallas_call(
        kern,
        out_shape=jax.ShapeDtypeStruct((B, 1, C1), jnp.float32),
        grid=(B,),
        in_specs=[
            pl.BlockSpec((1, L1, k1), lambda b: (b, 0, 0)),
            bcast(kp["w1"]), bcast(kp["b1"]),
            bcast(kp["w2"]), bcast(kp["b2"]),
            bcast(kp["w3"]), bcast(kp["b3"]),
        ],
        out_specs=pl.BlockSpec((1, 1, C1), lambda b: (b, 0, 0)),
        scratch_shapes=[
            pltpu.VMEM((L1 + 2 * p2, C1), jnp.float32),   # padded conv1 output
            pltpu.VMEM((L2 + 2 * p3, C2), jnp.float32),   # padded conv2 output
        ],
        compiler_params=pltpu.CompilerParams(
            dimension_semantics=("parallel",),
            # generous-but-safe scoped-VMEM ceiling so long series do not trip
            # the small default window (v5e: 16 MiB); <= 48 MiB keeps
            # double-buffer headroom inside v7x's 64 MiB physical VMEM.
            vmem_limit_bytes=48 * 1024 * 1024),
    )(x_col, kp["w1"], kp["b1"], kp["w2"], kp["b2"], kp["w3"], kp["b3"])
    return out[:, 0, :]


# --------------------------------------------------------------------------
# Kernel 3: FC head over the whole batch:  [h, gap] @ W^T + b.
# --------------------------------------------------------------------------
def fc_kernel(feat_ref, w_ref, b_ref, out_ref):
    out_ref[...] = (jnp.dot(feat_ref[...], w_ref[...],
                            preferred_element_type=jnp.float32)
                    + b_ref[...]).astype(out_ref.dtype)


def fc_head(h, gap, kp):
    B = h.shape[0]
    C = kp["fc_wt"].shape[1]
    feat = jnp.concatenate([h, gap], axis=1)                  # (B, H + 128)
    B_pad = -(-B // 8) * 8
    feat = jnp.pad(feat, ((0, B_pad - B), (0, 0)))
    vmem = pl.BlockSpec(memory_space=pltpu.MemorySpace.VMEM)
    out = pl.pallas_call(
        fc_kernel,
        out_shape=jax.ShapeDtypeStruct((B_pad, C), jnp.float32),
        in_specs=[vmem, vmem, vmem],
        out_specs=vmem,
    )(feat, kp["fc_wt"], kp["fc_b"])
    return out[:B]


# --------------------------------------------------------------------------
# Parameter construction (mirrors PyTorch __init__) + kernel packing.
# --------------------------------------------------------------------------
def init_params(key, lstm_units=128, num_classes=4):
    H = lstm_units
    ks = jax.random.split(key, 9)
    klstm = 1.0 / math.sqrt(H)
    params = {}
    # nn.LSTM(input_size=1, hidden_size=H): W_ih (4H,1), W_hh (4H,H), b_* (4H,)
    params["w_ih"] = jax.random.uniform(ks[0], (4 * H, 1), jnp.float32, -klstm, klstm)
    params["w_hh"] = jax.random.uniform(ks[1], (4 * H, H), jnp.float32, -klstm, klstm)
    params["b_ih"] = jax.random.uniform(ks[2], (4 * H,), jnp.float32, -klstm, klstm)
    params["b_hh"] = jax.random.uniform(ks[3], (4 * H,), jnp.float32, -klstm, klstm)

    # ConvBlocks: kaiming_normal (relu) conv weights, fresh BatchNorm (eval).
    eps = 1e-5
    conv_defs = [(1, 128, 8, 4, ks[4]), (128, 256, 5, 2, ks[5]), (256, 128, 3, 1, ks[6])]
    params["convs"] = []
    for c_in, c_out, k, p, wk in conv_defs:
        std = math.sqrt(2.0 / (c_in * k))
        w = jax.random.normal(wk, (c_out, c_in, k), jnp.float32) * std
        gamma = jnp.ones((c_out,), jnp.float32)
        beta = jnp.zeros((c_out,), jnp.float32)
        run_mean = jnp.zeros((c_out,), jnp.float32)
        run_var = jnp.ones((c_out,), jnp.float32)
        scale = gamma / jnp.sqrt(run_var + eps)
        bias = beta - run_mean * scale
        params["convs"].append(dict(w=w, scale=scale, bias=bias, k=k, pad=p))

    fin = H + 128
    kfc = 1.0 / math.sqrt(fin)
    params["fc_w"] = jax.random.uniform(ks[7], (num_classes, fin), jnp.float32, -kfc, kfc)
    params["fc_b"] = jax.random.uniform(ks[8], (num_classes,), jnp.float32, -kfc, kfc)
    return params


def pack_params(params):
    """Fold BN into conv weights and lay everything out for the kernels."""
    kp = {}
    kp["wih_t"] = params["w_ih"].T                        # (1, 4H)
    kp["whh_t"] = params["w_hh"].T                        # (H, 4H)
    kp["lstm_b"] = (params["b_ih"] + params["b_hh"])[None, :]

    c1, c2, c3 = params["convs"]
    # conv1: (C_out, 1, K) -> (K, C_out), BN scale folded in.
    kp["w1"] = (c1["w"][:, 0, :] * c1["scale"][:, None]).T
    kp["b1"] = c1["bias"][None, :]

    def flat_w(c):   # (C_out, C_in, K) -> (K*C_in, C_out), BN scale folded in
        w = c["w"] * c["scale"][:, None, None]
        c_out, c_in, k = w.shape
        return jnp.transpose(w, (2, 1, 0)).reshape(k * c_in, c_out)

    kp["w2"] = flat_w(c2)
    kp["b2"] = c2["bias"][None, :]
    kp["w3"] = flat_w(c3)
    kp["b3"] = c3["bias"][None, :]
    kp["k1"], kp["k2"], kp["k3"] = c1["k"], c2["k"], c3["k"]
    kp["pad1"], kp["pad2"], kp["pad3"] = c1["pad"], c2["pad"], c3["pad"]

    kp["fc_wt"] = params["fc_w"].T                        # (H+128, num_classes)
    kp["fc_b"] = params["fc_b"][None, :]
    return kp


# --------------------------------------------------------------------------
# Full forward (Pallas) and a pure-JAX reference for verification.
# --------------------------------------------------------------------------
def lstm_fcn_forward(x, kp):
    # x: (B, T) float32 univariate series (torch input before unsqueeze(-1)).
    h = lstm_last(x, kp)        # (B, H)    last LSTM hidden state
    gap = fcn_gap(x, kp)        # (B, 128)  FCN branch GAP features
    # dropout_fc is identity at inference
    return fc_head(h, gap, kp)  # (B, num_classes)


def reference_forward(x, params, lstm_units=128):
    B, T = x.shape
    H = lstm_units
    hp = jax.lax.Precision.HIGHEST
    b = params["b_ih"] + params["b_hh"]
    wih_t = params["w_ih"].T
    whh_t = params["w_hh"].T
    h = jnp.zeros((B, H), jnp.float32)
    c = jnp.zeros((B, H), jnp.float32)
    for t in range(T):
        z = x[:, t:t + 1] * wih_t + jnp.dot(h, whh_t, precision=hp) + b[None, :]
        i = jax.nn.sigmoid(z[:, :H])
        f = jax.nn.sigmoid(z[:, H:2 * H])
        g = jnp.tanh(z[:, 2 * H:3 * H])
        o = jax.nn.sigmoid(z[:, 3 * H:])
        c = f * c + i * g
        h = o * jnp.tanh(c)

    y = x[:, None, :]                          # (B, 1, T)  NCL
    for cp in params["convs"]:
        w, k, p = cp["w"], cp["k"], cp["pad"]
        yp = jnp.pad(y, ((0, 0), (0, 0), (p, p)))
        L_out = yp.shape[2] - k + 1
        acc = jnp.zeros((B, w.shape[0], L_out), jnp.float32)
        for j in range(k):
            acc = acc + jnp.einsum("oc,bcl->bol", w[:, :, j],
                                   yp[:, :, j:j + L_out], precision=hp)
        y = jnp.maximum(acc * cp["scale"][None, :, None]
                        + cp["bias"][None, :, None], 0.0)

    gap = jnp.mean(y, axis=2)
    feat = jnp.concatenate([h, gap], axis=1)
    return jnp.dot(feat, params["fc_w"].T, precision=hp) + params["fc_b"][None, :]


if __name__ == "__main__":
    B, T = 2, 16
    lstm_units, num_classes = 128, 4

    key = jax.random.PRNGKey(0)
    kx, kparams = jax.random.split(key)
    x = jax.random.normal(kx, (B, T), jnp.float32)
    params = init_params(kparams, lstm_units=lstm_units, num_classes=num_classes)
    kp = pack_params(params)

    out = lstm_fcn_forward(x, kp)
    out = jax.block_until_ready(out)

    ref = reference_forward(x, params, lstm_units=lstm_units)
    assert out.shape == (B, num_classes)
    # tolerance covers MXU pass-precision differences between the Pallas f32
    # matmuls and the HIGHEST-precision XLA reference.
    assert jnp.allclose(out, ref, rtol=2e-3, atol=2e-3), (out, ref)

    print("KERNEL_OK")
</pallas_src>

<mosaic_0001>
module attributes {stable_mosaic.version = 11 : i64} {
  func.func @lstm_kernel(%arg0: i32, %arg1: i32, %arg2: memref<1x16x8x1xf32, #tpu.memory_space<vmem>>, %arg3: memref<128x512xf32, #tpu.memory_space<vmem>>, %arg4: memref<1x512xf32, #tpu.memory_space<vmem>>, %arg5: memref<1x512xf32, #tpu.memory_space<vmem>>, %arg6: memref<8x128xf32, #tpu.memory_space<vmem>>, %arg7: memref<8x128xf32, #tpu.memory_space<vmem>>, %arg8: memref<8x128xf32, #tpu.memory_space<vmem>>) attributes {dimension_semantics = [#tpu.dimension_semantics<parallel>, #tpu.dimension_semantics<arbitrary>], iteration_bounds = array<i64: 1, 1>, scalar_prefetch = 0 : i64, scratch_operands = 2 : i64, tpu.core_type = #tpu.core_type<tc>, window_params = [{transform_indices = @transform_0, window_bounds = array<i64: 1, 16, 8, 1>}, {pipeline_mode = #tpu.pipeline_mode<synchronous>, transform_indices = @transform_1, window_bounds = array<i64: 128, 512>}, {pipeline_mode = #tpu.pipeline_mode<synchronous>, transform_indices = @transform_2, window_bounds = array<i64: 1, 512>}, {pipeline_mode = #tpu.pipeline_mode<synchronous>, transform_indices = @transform_3, window_bounds = array<i64: 1, 512>}, {transform_indices = @transform_4, window_bounds = array<i64: 8, 128>}]} {
    %c0_i32 = arith.constant 0 : i32
    %0 = arith.cmpi eq, %arg1, %c0_i32 : i32
    %1 = arith.extui %0 : i1 to i32
    %c0_i32_0 = arith.constant 0 : i32
    %2 = arith.cmpi ne, %1, %c0_i32_0 : i32
    scf.if %2 {
      %cst_158 = arith.constant 0.000000e+00 : f32
      %586 = vector.broadcast %cst_158 : f32 to vector<8x128xf32>
      %c0_159 = arith.constant 0 : index
      %c0_160 = arith.constant 0 : index
      %587 = vector.load %arg7[%c0_159, %c0_160] : memref<8x128xf32, #tpu.memory_space<vmem>>, vector<8x128xf32>
      tpu.vector_store %arg7[%c0_159, %c0_160], %586 {strides = array<i32>} : memref<8x128xf32, #tpu.memory_space<vmem>>, vector<8x128xf32>,
      %cst_161 = arith.constant 0.000000e+00 : f32
      %588 = vector.broadcast %cst_161 : f32 to vector<8x128xf32>
      %c0_162 = arith.constant 0 : index
      %c0_163 = arith.constant 0 : index
      %589 = vector.load %arg8[%c0_162, %c0_163] : memref<8x128xf32, #tpu.memory_space<vmem>>, vector<8x128xf32>
      tpu.vector_store %arg8[%c0_162, %c0_163], %588 {strides = array<i32>} : memref<8x128xf32, #tpu.memory_space<vmem>>, vector<8x128xf32>,
    } else {
    }
    %c0 = arith.constant 0 : index
    %c0_1 = arith.constant 0 : index
    %3 = vector.load %arg4[%c0, %c0_1] : memref<1x512xf32, #tpu.memory_space<vmem>>, vector<1x512xf32>
    %c0_2 = arith.constant 0 : index
    %c0_3 = arith.constant 0 : index
    %4 = vector.load %arg5[%c0_2, %c0_3] : memref<1x512xf32, #tpu.memory_space<vmem>>, vector<1x512xf32>
    %c0_4 = arith.constant 0 : index
    %c0_5 = arith.constant 0 : index
    %5 = vector.load %arg7[%c0_4, %c0_5] : memref<8x128xf32, #tpu.memory_space<vmem>>, vector<8x128xf32>
    %c0_6 = arith.constant 0 : index
    %c0_7 = arith.constant 0 : index
    %6 = vector.load %arg8[%c0_6, %c0_7] : memref<8x128xf32, #tpu.memory_space<vmem>>, vector<8x128xf32>
    %c0_i32_8 = arith.constant 0 : i32
    %c0_9 = arith.constant 0 : index
    %7 = arith.index_cast %c0_i32_8 : i32 to index
    %c0_10 = arith.constant 0 : index
    %c0_11 = arith.constant 0 : index
    %8 = vector.load %arg2[%c0_9, %7, %c0_10, %c0_11] : memref<1x16x8x1xf32, #tpu.memory_space<vmem>>, vector<1x1x8x1xf32>
    %9 = vector.shape_cast %8 : vector<1x1x8x1xf32> to vector<8x1xf32>
    %10 = vector.broadcast %9 : vector<8x1xf32> to vector<8x512xf32>
    %11 = vector.broadcast %3 : vector<1x512xf32> to vector<8x512xf32>
    %12 = arith.mulf %10, %11 : vector<8x512xf32>
    %13 = vector.broadcast %4 : vector<1x512xf32> to vector<8x512xf32>
    %14 = arith.addf %12, %13 : vector<8x512xf32>
    %c0_12 = arith.constant 0 : index
    %c0_13 = arith.constant 0 : index
    %15 = vector.load %arg3[%c0_12, %c0_13] : memref<128x512xf32, #tpu.memory_space<vmem>>, vector<128x512xf32>
    %cst = arith.constant dense<0.000000e+00> : vector<8x512xf32>
    %16 = tpu.matmul %5, %15, %cst {dimension_numbers = #tpu.dot_dimension_numbers<[1], [0], [0], [1], [0, 0, 1, 1], [], []>} : vector<8x128xf32>, vector<128x512xf32>, vector<8x512xf32> -> vector<8x512xf32>
    %17 = arith.addf %16, %14 : vector<8x512xf32>
    %18 = vector.extract_strided_slice %17 {offsets = [0, 0], sizes = [8, 128], strides = [1, 1]} : vector<8x512xf32> to vector<8x128xf32>
    %19 = arith.negf %18 : vector<8x128xf32>
    %20 = math.exp %19 : vector<8x128xf32>
    %cst_14 = arith.constant 1.000000e+00 : f32
    %21 = vector.broadcast %cst_14 : f32 to vector<8x128xf32>
    %22 = arith.addf %21, %20 : vector<8x128xf32>
    %23 = arith.divf %21, %22 : vector<8x128xf32>
    %24 = vector.extract_strided_slice %17 {offsets = [0, 128], sizes = [8, 128], strides = [1, 1]} : vector<8x512xf32> to vector<8x128xf32>
    %25 = arith.negf %24 : vector<8x128xf32>
    %26 = math.exp %25 : vector<8x128xf32>
    %cst_15 = arith.constant 1.000000e+00 : f32
    %27 = vector.broadcast %cst_15 : f32 to vector<8x128xf32>
    %28 = arith.addf %27, %26 : vector<8x128xf32>
    %29 = arith.divf %27, %28 : vector<8x128xf32>
    %30 = vector.extract_strided_slice %17 {offsets = [0, 256], sizes = [8, 128], strides = [1, 1]} : vector<8x512xf32> to vector<8x128xf32>
    %31 = math.tanh %30 : vector<8x128xf32>
    %32 = vector.extract_strided_slice %17 {offsets = [0, 384], sizes = [8, 128], strides = [1, 1]} : vector<8x512xf32> to vector<8x128xf32>
    %33 = arith.negf %32 : vector<8x128xf32>
    %34 = math.exp %33 : vector<8x128xf32>
    %cst_16 = arith.constant 1.000000e+00 : f32
    %35 = vector.broadcast %cst_16 : f32 to vector<8x128xf32>
    %36 = arith.addf %35, %34 : vector<8x128xf32>
    %37 = arith.divf %35, %36 : vector<8x128xf32>
    %38 = arith.mulf %29, %6 : vector<8x128xf32>
    %39 = arith.mulf %23, %31 : vector<8x128xf32>
    %40 = arith.addf %38, %39 : vector<8x128xf32>
    %41 = math.tanh %40 : vector<8x128xf32>
    %42 = arith.mulf %37, %41 : vector<8x128xf32>
    %c1_i32 = arith.constant 1 : i32
    %c0_17 = arith.constant 0 : index
    %43 = arith.index_cast %c1_i32 : i32 to index
    %c0_18 = arith.constant 0 : index
    %c0_19 = arith.constant 0 : index
    %44 = vector.load %arg2[%c0_17, %43, %c0_18, %c0_19] : memref<1x16x8x1xf32, #tpu.memory_space<vmem>>, vector<1x1x8x1xf32>
    %45 = vector.shape_cast %44 : vector<1x1x8x1xf32> to vector<8x1xf32>
    %46 = vector.broadcast %45 : vector<8x1xf32> to vector<8x512xf32>
    %47 = vector.broadcast %3 : vector<1x512xf32> to vector<8x512xf32>
    %48 = arith.mulf %46, %47 : vector<8x512xf32>
    %49 = vector.broadcast %4 : vector<1x512xf32> to vector<8x512xf32>
    %50 = arith.addf %48, %49 : vector<8x512xf32>
    %c0_20 = arith.constant 0 : index
    %c0_21 = arith.constant 0 : index
    %51 = vector.load %arg3[%c0_20, %c0_21] : memref<128x512xf32, #tpu.memory_space<vmem>>, vector<128x512xf32>
    %cst_22 = arith.constant dense<0.000000e+00> : vector<8x512xf32>
    %52 = tpu.matmul %42, %51, %cst_22 {dimension_numbers = #tpu.dot_dimension_numbers<[1], [0], [0], [1], [0, 0, 1, 1], [], []>} : vector<8x128xf32>, vector<128x512xf32>, vector<8x512xf32> -> vector<8x512xf32>
    %53 = arith.addf %52, %50 : vector<8x512xf32>
    %54 = vector.extract_strided_slice %53 {offsets = [0, 0], sizes = [8, 128], strides = [1, 1]} : vector<8x512xf32> to vector<8x128xf32>
    %55 = arith.negf %54 : vector<8x128xf32>
    %56 = math.exp %55 : vector<8x128xf32>
    %cst_23 = arith.constant 1.000000e+00 : f32
    %57 = vector.broadcast %cst_23 : f32 to vector<8x128xf32>
    %58 = arith.addf %57, %56 : vector<8x128xf32>
    %59 = arith.divf %57, %58 : vector<8x128xf32>
    %60 = vector.extract_strided_slice %53 {offsets = [0, 128], sizes = [8, 128], strides = [1, 1]} : vector<8x512xf32> to vector<8x128xf32>
    %61 = arith.negf %60 : vector<8x128xf32>
    %62 = math.exp %61 : vector<8x128xf32>
    %cst_24 = arith.constant 1.000000e+00 : f32
    %63 = vector.broadcast %cst_24 : f32 to vector<8x128xf32>
    %64 = arith.addf %63, %62 : vector<8x128xf32>
    %65 = arith.divf %63, %64 : vector<8x128xf32>
    %66 = vector.extract_strided_slice %53 {offsets = [0, 256], sizes = [8, 128], strides = [1, 1]} : vector<8x512xf32> to vector<8x128xf32>
    %67 = math.tanh %66 : vector<8x128xf32>
    %68 = vector.extract_strided_slice %53 {offsets = [0, 384], sizes = [8, 128], strides = [1, 1]} : vector<8x512xf32> to vector<8x128xf32>
    %69 = arith.negf %68 : vector<8x128xf32>
    %70 = math.exp %69 : vector<8x128xf32>
    %cst_25 = arith.constant 1.000000e+00 : f32
    %71 = vector.broadcast %cst_25 : f32 to vector<8x128xf32>
    %72 = arith.addf %71, %70 : vector<8x128xf32>
    %73 = arith.divf %71, %72 : vector<8x128xf32>
    %74 = arith.mulf %65, %40 : vector<8x128xf32>
    %75 = arith.mulf %59, %67 : vector<8x128xf32>
    %76 = arith.addf %74, %75 : vector<8x128xf32>
    %77 = math.tanh %76 : vector<8x128xf32>
    %78 = arith.mulf %73, %77 : vector<8x128xf32>
    %c2_i32 = arith.constant 2 : i32
    %c0_26 = arith.constant 0 : index
    %79 = arith.index_cast %c2_i32 : i32 to index
    %c0_27 = arith.constant 0 : index
    %c0_28 = arith.constant 0 : index
    %80 = vector.load %arg2[%c0_26, %79, %c0_27, %c0_28] : memref<1x16x8x1xf32, #tpu.memory_space<vmem>>, vector<1x1x8x1xf32>
    %81 = vector.shape_cast %80 : vector<1x1x8x1xf32> to vector<8x1xf32>
    %82 = vector.broadcast %81 : vector<8x1xf32> to vector<8x512xf32>
    %83 = vector.broadcast %3 : vector<1x512xf32> to vector<8x512xf32>
    %84 = arith.mulf %82, %83 : vector<8x512xf32>
    %85 = vector.broadcast %4 : vector<1x512xf32> to vector<8x512xf32>
    %86 = arith.addf %84, %85 : vector<8x512xf32>
    %c0_29 = arith.constant 0 : index
    %c0_30 = arith.constant 0 : index
    %87 = vector.load %arg3[%c0_29, %c0_30] : memref<128x512xf32, #tpu.memory_space<vmem>>, vector<128x512xf32>
    %cst_31 = arith.constant dense<0.000000e+00> : vector<8x512xf32>
    %88 = tpu.matmul %78, %87, %cst_31 {dimension_numbers = #tpu.dot_dimension_numbers<[1], [0], [0], [1], [0, 0, 1, 1], [], []>} : vector<8x128xf32>, vector<128x512xf32>, vector<8x512xf32> -> vector<8x512xf32>
    %89 = arith.addf %88, %86 : vector<8x512xf32>
    %90 = vector.extract_strided_slice %89 {offsets = [0, 0], sizes = [8, 128], strides = [1, 1]} : vector<8x512xf32> to vector<8x128xf32>
    %91 = arith.negf %90 : vector<8x128xf32>
    %92 = math.exp %91 : vector<8x128xf32>
    %cst_32 = arith.constant 1.000000e+00 : f32
    %93 = vector.broadcast %cst_32 : f32 to vector<8x128xf32>
    %94 = arith.addf %93, %92 : vector<8x128xf32>
    %95 = arith.divf %93, %94 : vector<8x128xf32>
    %96 = vector.extract_strided_slice %89 {offsets = [0, 128], sizes = [8, 128], strides = [1, 1]} : vector<8x512xf32> to vector<8x128xf32>
    %97 = arith.negf %96 : vector<8x128xf32>
    %98 = math.exp %97 : vector<8x128xf32>
    %cst_33 = arith.constant 1.000000e+00 : f32
    %99 = vector.broadcast %cst_33 : f32 to vector<8x128xf32>
    %100 = arith.addf %99, %98 : vector<8x128xf32>
    %101 = arith.divf %99, %100 : vector<8x128xf32>
    %102 = vector.extract_strided_slice %89 {offsets = [0, 256], sizes = [8, 128], strides = [1, 1]} : vector<8x512xf32> to vector<8x128xf32>
    %103 = math.tanh %102 : vector<8x128xf32>
    %104 = vector.extract_strided_slice %89 {offsets = [0, 384], sizes = [8, 128], strides = [1, 1]} : vector<8x512xf32> to vector<8x128xf32>
    %105 = arith.negf %104 : vector<8x128xf32>
    %106 = math.exp %105 : vector<8x128xf32>
    %cst_34 = arith.constant 1.000000e+00 : f32
    %107 = vector.broadcast %cst_34 : f32 to vector<8x128xf32>
    %108 = arith.addf %107, %106 : vector<8x128xf32>
    %109 = arith.divf %107, %108 : vector<8x128xf32>
    %110 = arith.mulf %101, %76 : vector<8x128xf32>
    %111 = arith.mulf %95, %103 : vector<8x128xf32>
    %112 = arith.addf %110, %111 : vector<8x128xf32>
    %113 = math.tanh %112 : vector<8x128xf32>
    %114 = arith.mulf %109, %113 : vector<8x128xf32>
    %c3_i32 = arith.constant 3 : i32
    %c0_35 = arith.constant 0 : index
    %115 = arith.index_cast %c3_i32 : i32 to index
    %c0_36 = arith.constant 0 : index
    %c0_37 = arith.constant 0 : index
    %116 = vector.load %arg2[%c0_35, %115, %c0_36, %c0_37] : memref<1x16x8x1xf32, #tpu.memory_space<vmem>>, vector<1x1x8x1xf32>
    %117 = vector.shape_cast %116 : vector<1x1x8x1xf32> to vector<8x1xf32>
    %118 = vector.broadcast %117 : vector<8x1xf32> to vector<8x512xf32>
    %119 = vector.broadcast %3 : vector<1x512xf32> to vector<8x512xf32>
    %120 = arith.mulf %118, %119 : vector<8x512xf32>
    %121 = vector.broadcast %4 : vector<1x512xf32> to vector<8x512xf32>
    %122 = arith.addf %120, %121 : vector<8x512xf32>
    %c0_38 = arith.constant 0 : index
    %c0_39 = arith.constant 0 : index
    %123 = vector.load %arg3[%c0_38, %c0_39] : memref<128x512xf32, #tpu.memory_space<vmem>>, vector<128x512xf32>
    %cst_40 = arith.constant dense<0.000000e+00> : vector<8x512xf32>
    %124 = tpu.matmul %114, %123, %cst_40 {dimension_numbers = #tpu.dot_dimension_numbers<[1], [0], [0], [1], [0, 0, 1, 1], [], []>} : vector<8x128xf32>, vector<128x512xf32>, vector<8x512xf32> -> vector<8x512xf32>
    %125 = arith.addf %124, %122 : vector<8x512xf32>
    %126 = vector.extract_strided_slice %125 {offsets = [0, 0], sizes = [8, 128], strides = [1, 1]} : vector<8x512xf32> to vector<8x128xf32>
    %127 = arith.negf %126 : vector<8x128xf32>
    %128 = math.exp %127 : vector<8x128xf32>
    %cst_41 = arith.constant 1.000000e+00 : f32
    %129 = vector.broadcast %cst_41 : f32 to vector<8x128xf32>
    %130 = arith.addf %129, %128 : vector<8x128xf32>
    %131 = arith.divf %129, %130 : vector<8x128xf32>
    %132 = vector.extract_strided_slice %125 {offsets = [0, 128], sizes = [8, 128], strides = [1, 1]} : vector<8x512xf32> to vector<8x128xf32>
    %133 = arith.negf %132 : vector<8x128xf32>
    %134 = math.exp %133 : vector<8x128xf32>
    %cst_42 = arith.constant 1.000000e+00 : f32
    %135 = vector.broadcast %cst_42 : f32 to vector<8x128xf32>
    %136 = arith.addf %135, %134 : vector<8x128xf32>
    %137 = arith.divf %135, %136 : vector<8x128xf32>
    %138 = vector.extract_strided_slice %125 {offsets = [0, 256], sizes = [8, 128], strides = [1, 1]} : vector<8x512xf32> to vector<8x128xf32>
    %139 = math.tanh %138 : vector<8x128xf32>
    %140 = vector.extract_strided_slice %125 {offsets = [0, 384], sizes = [8, 128], strides = [1, 1]} : vector<8x512xf32> to vector<8x128xf32>
    %141 = arith.negf %140 : vector<8x128xf32>
    %142 = math.exp %141 : vector<8x128xf32>
    %cst_43 = arith.constant 1.000000e+00 : f32
    %143 = vector.broadcast %cst_43 : f32 to vector<8x128xf32>
    %144 = arith.addf %143, %142 : vector<8x128xf32>
    %145 = arith.divf %143, %144 : vector<8x128xf32>
    %146 = arith.mulf %137, %112 : vector<8x128xf32>
    %147 = arith.mulf %131, %139 : vector<8x128xf32>
    %148 = arith.addf %146, %147 : vector<8x128xf32>
    %149 = math.tanh %148 : vector<8x128xf32>
    %150 = arith.mulf %145, %149 : vector<8x128xf32>
    %c4_i32 = arith.constant 4 : i32
    %c0_44 = arith.constant 0 : index
    %151 = arith.index_cast %c4_i32 : i32 to index
    %c0_45 = arith.constant 0 : index
    %c0_46 = arith.constant 0 : index
    %152 = vector.load %arg2[%c0_44, %151, %c0_45, %c0_46] : memref<1x16x8x1xf32, #tpu.memory_space<vmem>>, vector<1x1x8x1xf32>
    %153 = vector.shape_cast %152 : vector<1x1x8x1xf32> to vector<8x1xf32>
    %154 = vector.broadcast %153 : vector<8x1xf32> to vector<8x512xf32>
    %155 = vector.broadcast %3 : vector<1x512xf32> to vector<8x512xf32>
    %156 = arith.mulf %154, %155 : vector<8x512xf32>
    %157 = vector.broadcast %4 : vector<1x512xf32> to vector<8x512xf32>
    %158 = arith.addf %156, %157 : vector<8x512xf32>
    %c0_47 = arith.constant 0 : index
    %c0_48 = arith.constant 0 : index
    %159 = vector.load %arg3[%c0_47, %c0_48] : memref<128x512xf32, #tpu.memory_space<vmem>>, vector<128x512xf32>
    %cst_49 = arith.constant dense<0.000000e+00> : vector<8x512xf32>
    %160 = tpu.matmul %150, %159, %cst_49 {dimension_numbers = #tpu.dot_dimension_numbers<[1], [0], [0], [1], [0, 0, 1, 1], [], []>} : vector<8x128xf32>, vector<128x512xf32>, vector<8x512xf32> -> vector<8x512xf32>
    %161 = arith.addf %160, %158 : vector<8x512xf32>
    %162 = vector.extract_strided_slice %161 {offsets = [0, 0], sizes = [8, 128], strides = [1, 1]} : vector<8x512xf32> to vector<8x128xf32>
    %163 = arith.negf %162 : vector<8x128xf32>
    %164 = math.exp %163 : vector<8x128xf32>
    %cst_50 = arith.constant 1.000000e+00 : f32
    %165 = vector.broadcast %cst_50 : f32 to vector<8x128xf32>
    %166 = arith.addf %165, %164 : vector<8x128xf32>
    %167 = arith.divf %165, %166 : vector<8x128xf32>
    %168 = vector.extract_strided_slice %161 {offsets = [0, 128], sizes = [8, 128], strides = [1, 1]} : vector<8x512xf32> to vector<8x128xf32>
    %169 = arith.negf %168 : vector<8x128xf32>
    %170 = math.exp %169 : vector<8x128xf32>
    %cst_51 = arith.constant 1.000000e+00 : f32
    %171 = vector.broadcast %cst_51 : f32 to vector<8x128xf32>
    %172 = arith.addf %171, %170 : vector<8x128xf32>
    %173 = arith.divf %171, %172 : vector<8x128xf32>
    %174 = vector.extract_strided_slice %161 {offsets = [0, 256], sizes = [8, 128], strides = [1, 1]} : vector<8x512xf32> to vector<8x128xf32>
    %175 = math.tanh %174 : vector<8x128xf32>
    %176 = vector.extract_strided_slice %161 {offsets = [0, 384], sizes = [8, 128], strides = [1, 1]} : vector<8x512xf32> to vector<8x128xf32>
    %177 = arith.negf %176 : vector<8x128xf32>
    %178 = math.exp %177 : vector<8x128xf32>
    %cst_52 = arith.constant 1.000000e+00 : f32
    %179 = vector.broadcast %cst_52 : f32 to vector<8x128xf32>
    %180 = arith.addf %179, %178 : vector<8x128xf32>
    %181 = arith.divf %179, %180 : vector<8x128xf32>
    %182 = arith.mulf %173, %148 : vector<8x128xf32>
    %183 = arith.mulf %167, %175 : vector<8x128xf32>
    %184 = arith.addf %182, %183 : vector<8x128xf32>
    %185 = math.tanh %184 : vector<8x128xf32>
    %186 = arith.mulf %181, %185 : vector<8x128xf32>
    %c5_i32 = arith.constant 5 : i32
    %c0_53 = arith.constant 0 : index
    %187 = arith.index_cast %c5_i32 : i32 to index
    %c0_54 = arith.constant 0 : index
    %c0_55 = arith.constant 0 : index
    %188 = vector.load %arg2[%c0_53, %187, %c0_54, %c0_55] : memref<1x16x8x1xf32, #tpu.memory_space<vmem>>, vector<1x1x8x1xf32>
    %189 = vector.shape_cast %188 : vector<1x1x8x1xf32> to vector<8x1xf32>
    %190 = vector.broadcast %189 : vector<8x1xf32> to vector<8x512xf32>
    %191 = vector.broadcast %3 : vector<1x512xf32> to vector<8x512xf32>
    %192 = arith.mulf %190, %191 : vector<8x512xf32>
    %193 = vector.broadcast %4 : vector<1x512xf32> to vector<8x512xf32>
    %194 = arith.addf %192, %193 : vector<8x512xf32>
    %c0_56 = arith.constant 0 : index
    %c0_57 = arith.constant 0 : index
    %195 = vector.load %arg3[%c0_56, %c0_57] : memref<128x512xf32, #tpu.memory_space<vmem>>, vector<128x512xf32>
    %cst_58 = arith.constant dense<0.000000e+00> : vector<8x512xf32>
    %196 = tpu.matmul %186, %195, %cst_58 {dimension_numbers = #tpu.dot_dimension_numbers<[1], [0], [0], [1], [0, 0, 1, 1], [], []>} : vector<8x128xf32>, vector<128x512xf32>, vector<8x512xf32> -> vector<8x512xf32>
    %197 = arith.addf %196, %194 : vector<8x512xf32>
    %198 = vector.extract_strided_slice %197 {offsets = [0, 0], sizes = [8, 128], strides = [1, 1]} : vector<8x512xf32> to vector<8x128xf32>
    %199 = arith.negf %198 : vector<8x128xf32>
    %200 = math.exp %199 : vector<8x128xf32>
    %cst_59 = arith.constant 1.000000e+00 : f32
    %201 = vector.broadcast %cst_59 : f32 to vector<8x128xf32>
    %202 = arith.addf %201, %200 : vector<8x128xf32>
    %203 = arith.divf %201, %202 : vector<8x128xf32>
    %204 = vector.extract_strided_slice %197 {offsets = [0, 128], sizes = [8, 128], strides = [1, 1]} : vector<8x512xf32> to vector<8x128xf32>
    %205 = arith.negf %204 : vector<8x128xf32>
    %206 = math.exp %205 : vector<8x128xf32>
    %cst_60 = arith.constant 1.000000e+00 : f32
    %207 = vector.broadcast %cst_60 : f32 to vector<8x128xf32>
    %208 = arith.addf %207, %206 : vector<8x128xf32>
    %209 = arith.divf %207, %208 : vector<8x128xf32>
    %210 = vector.extract_strided_slice %197 {offsets = [0, 256], sizes = [8, 128], strides = [1, 1]} : vector<8x512xf32> to vector<8x128xf32>
    %211 = math.tanh %210 : vector<8x128xf32>
    %212 = vector.extract_strided_slice %197 {offsets = [0, 384], sizes = [8, 128], strides = [1, 1]} : vector<8x512xf32> to vector<8x128xf32>
    %213 = arith.negf %212 : vector<8x128xf32>
    %214 = math.exp %213 : vector<8x128xf32>
    %cst_61 = arith.constant 1.000000e+00 : f32
    %215 = vector.broadcast %cst_61 : f32 to vector<8x128xf32>
    %216 = arith.addf %215, %214 : vector<8x128xf32>
    %217 = arith.divf %215, %216 : vector<8x128xf32>
    %218 = arith.mulf %209, %184 : vector<8x128xf32>
    %219 = arith.mulf %203, %211 : vector<8x128xf32>
    %220 = arith.addf %218, %219 : vector<8x128xf32>
    %221 = math.tanh %220 : vector<8x128xf32>
    %222 = arith.mulf %217, %221 : vector<8x128xf32>
    %c6_i32 = arith.constant 6 : i32
    %c0_62 = arith.constant 0 : index
    %223 = arith.index_cast %c6_i32 : i32 to index
    %c0_63 = arith.constant 0 : index
    %c0_64 = arith.constant 0 : index
    %224 = vector.load %arg2[%c0_62, %223, %c0_63, %c0_64] : memref<1x16x8x1xf32, #tpu.memory_space<vmem>>, vector<1x1x8x1xf32>
    %225 = vector.shape_cast %224 : vector<1x1x8x1xf32> to vector<8x1xf32>
    %226 = vector.broadcast %225 : vector<8x1xf32> to vector<8x512xf32>
    %227 = vector.broadcast %3 : vector<1x512xf32> to vector<8x512xf32>
    %228 = arith.mulf %226, %227 : vector<8x512xf32>
    %229 = vector.broadcast %4 : vector<1x512xf32> to vector<8x512xf32>
    %230 = arith.addf %228, %229 : vector<8x512xf32>
    %c0_65 = arith.constant 0 : index
    %c0_66 = arith.constant 0 : index
    %231 = vector.load %arg3[%c0_65, %c0_66] : memref<128x512xf32, #tpu.memory_space<vmem>>, vector<128x512xf32>
    %cst_67 = arith.constant dense<0.000000e+00> : vector<8x512xf32>
    %232 = tpu.matmul %222, %231, %cst_67 {dimension_numbers = #tpu.dot_dimension_numbers<[1], [0], [0], [1], [0, 0, 1, 1], [], []>} : vector<8x128xf32>, vector<128x512xf32>, vector<8x512xf32> -> vector<8x512xf32>
    %233 = arith.addf %232, %230 : vector<8x512xf32>
    %234 = vector.extract_strided_slice %233 {offsets = [0, 0], sizes = [8, 128], strides = [1, 1]} : vector<8x512xf32> to vector<8x128xf32>
    %235 = arith.negf %234 : vector<8x128xf32>
    %236 = math.exp %235 : vector<8x128xf32>
    %cst_68 = arith.constant 1.000000e+00 : f32
    %237 = vector.broadcast %cst_68 : f32 to vector<8x128xf32>
    %238 = arith.addf %237, %236 : vector<8x128xf32>
    %239 = arith.divf %237, %238 : vector<8x128xf32>
    %240 = vector.extract_strided_slice %233 {offsets = [0, 128], sizes = [8, 128], strides = [1, 1]} : vector<8x512xf32> to vector<8x128xf32>
    %241 = arith.negf %240 : vector<8x128xf32>
    %242 = math.exp %241 : vector<8x128xf32>
    %cst_69 = arith.constant 1.000000e+00 : f32
    %243 = vector.broadcast %cst_69 : f32 to vector<8x128xf32>
    %244 = arith.addf %243, %242 : vector<8x128xf32>
    %245 = arith.divf %243, %244 : vector<8x128xf32>
    %246 = vector.extract_strided_slice %233 {offsets = [0, 256], sizes = [8, 128], strides = [1, 1]} : vector<8x512xf32> to vector<8x128xf32>
    %247 = math.tanh %246 : vector<8x128xf32>
    %248 = vector.extract_strided_slice %233 {offsets = [0, 384], sizes = [8, 128], strides = [1, 1]} : vector<8x512xf32> to vector<8x128xf32>
    %249 = arith.negf %248 : vector<8x128xf32>
    %250 = math.exp %249 : vector<8x128xf32>
    %cst_70 = arith.constant 1.000000e+00 : f32
    %251 = vector.broadcast %cst_70 : f32 to vector<8x128xf32>
    %252 = arith.addf %251, %250 : vector<8x128xf32>
    %253 = arith.divf %251, %252 : vector<8x128xf32>
    %254 = arith.mulf %245, %220 : vector<8x128xf32>
    %255 = arith.mulf %239, %247 : vector<8x128xf32>
    %256 = arith.addf %254, %255 : vector<8x128xf32>
    %257 = math.tanh %256 : vector<8x128xf32>
    %258 = arith.mulf %253, %257 : vector<8x128xf32>
    %c7_i32 = arith.constant 7 : i32
    %c0_71 = arith.constant 0 : index
    %259 = arith.index_cast %c7_i32 : i32 to index
    %c0_72 = arith.constant 0 : index
    %c0_73 = arith.constant 0 : index
    %260 = vector.load %arg2[%c0_71, %259, %c0_72, %c0_73] : memref<1x16x8x1xf32, #tpu.memory_space<vmem>>, vector<1x1x8x1xf32>
    %261 = vector.shape_cast %260 : vector<1x1x8x1xf32> to vector<8x1xf32>
    %262 = vector.broadcast %261 : vector<8x1xf32> to vector<8x512xf32>
    %263 = vector.broadcast %3 : vector<1x512xf32> to vector<8x512xf32>
    %264 = arith.mulf %262, %263 : vector<8x512xf32>
    %265 = vector.broadcast %4 : vector<1x512xf32> to vector<8x512xf32>
    %266 = arith.addf %264, %265 : vector<8x512xf32>
    %c0_74 = arith.constant 0 : index
    %c0_75 = arith.constant 0 : index
    %267 = vector.load %arg3[%c0_74, %c0_75] : memref<128x512xf32, #tpu.memory_space<vmem>>, vector<128x512xf32>
    %cst_76 = arith.constant dense<0.000000e+00> : vector<8x512xf32>
    %268 = tpu.matmul %258, %267, %cst_76 {dimension_numbers = #tpu.dot_dimension_numbers<[1], [0], [0], [1], [0, 0, 1, 1], [], []>} : vector<8x128xf32>, vector<128x512xf32>, vector<8x512xf32> -> vector<8x512xf32>
    %269 = arith.addf %268, %266 : vector<8x512xf32>
    %270 = vector.extract_strided_slice %269 {offsets = [0, 0], sizes = [8, 128], strides = [1, 1]} : vector<8x512xf32> to vector<8x128xf32>
    %271 = arith.negf %270 : vector<8x128xf32>
    %272 = math.exp %271 : vector<8x128xf32>
    %cst_77 = arith.constant 1.000000e+00 : f32
    %273 = vector.broadcast %cst_77 : f32 to vector<8x128xf32>
    %274 = arith.addf %273, %272 : vector<8x128xf32>
    %275 = arith.divf %273, %274 : vector<8x128xf32>
    %276 = vector.extract_strided_slice %269 {offsets = [0, 128], sizes = [8, 128], strides = [1, 1]} : vector<8x512xf32> to vector<8x128xf32>
    %277 = arith.negf %276 : vector<8x128xf32>
    %278 = math.exp %277 : vector<8x128xf32>
    %cst_78 = arith.constant 1.000000e+00 : f32
    %279 = vector.broadcast %cst_78 : f32 to vector<8x128xf32>
    %280 = arith.addf %279, %278 : vector<8x128xf32>
    %281 = arith.divf %279, %280 : vector<8x128xf32>
    %282 = vector.extract_strided_slice %269 {offsets = [0, 256], sizes = [8, 128], strides = [1, 1]} : vector<8x512xf32> to vector<8x128xf32>
    %283 = math.tanh %282 : vector<8x128xf32>
    %284 = vector.extract_strided_slice %269 {offsets = [0, 384], sizes = [8, 128], strides = [1, 1]} : vector<8x512xf32> to vector<8x128xf32>
    %285 = arith.negf %284 : vector<8x128xf32>
    %286 = math.exp %285 : vector<8x128xf32>
    %cst_79 = arith.constant 1.000000e+00 : f32
    %287 = vector.broadcast %cst_79 : f32 to vector<8x128xf32>
    %288 = arith.addf %287, %286 : vector<8x128xf32>
    %289 = arith.divf %287, %288 : vector<8x128xf32>
    %290 = arith.mulf %281, %256 : vector<8x128xf32>
    %291 = arith.mulf %275, %283 : vector<8x128xf32>
    %292 = arith.addf %290, %291 : vector<8x128xf32>
    %293 = math.tanh %292 : vector<8x128xf32>
    %294 = arith.mulf %289, %293 : vector<8x128xf32>
    %c8_i32 = arith.constant 8 : i32
    %c0_80 = arith.constant 0 : index
    %295 = arith.index_cast %c8_i32 : i32 to index
    %c0_81 = arith.constant 0 : index
    %c0_82 = arith.constant 0 : index
    %296 = vector.load %arg2[%c0_80, %295, %c0_81, %c0_82] : memref<1x16x8x1xf32, #tpu.memory_space<vmem>>, vector<1x1x8x1xf32>
    %297 = vector.shape_cast %296 : vector<1x1x8x1xf32> to vector<8x1xf32>
    %298 = vector.broadcast %297 : vector<8x1xf32> to vector<8x512xf32>
    %299 = vector.broadcast %3 : vector<1x512xf32> to vector<8x512xf32>
    %300 = arith.mulf %298, %299 : vector<8x512xf32>
    %301 = vector.broadcast %4 : vector<1x512xf32> to vector<8x512xf32>
    %302 = arith.addf %300, %301 : vector<8x512xf32>
    %c0_83 = arith.constant 0 : index
    %c0_84 = arith.constant 0 : index
    %303 = vector.load %arg3[%c0_83, %c0_84] : memref<128x512xf32, #tpu.memory_space<vmem>>, vector<128x512xf32>
    %cst_85 = arith.constant dense<0.000000e+00> : vector<8x512xf32>
    %304 = tpu.matmul %294, %303, %cst_85 {dimension_numbers = #tpu.dot_dimension_numbers<[1], [0], [0], [1], [0, 0, 1, 1], [], []>} : vector<8x128xf32>, vector<128x512xf32>, vector<8x512xf32> -> vector<8x512xf32>
    %305 = arith.addf %304, %302 : vector<8x512xf32>
    %306 = vector.extract_strided_slice %305 {offsets = [0, 0], sizes = [8, 128], strides = [1, 1]} : vector<8x512xf32> to vector<8x128xf32>
    %307 = arith.negf %306 : vector<8x128xf32>
    %308 = math.exp %307 : vector<8x128xf32>
    %cst_86 = arith.constant 1.000000e+00 : f32
    %309 = vector.broadcast %cst_86 : f32 to vector<8x128xf32>
    %310 = arith.addf %309, %308 : vector<8x128xf32>
    %311 = arith.divf %309, %310 : vector<8x128xf32>
    %312 = vector.extract_strided_slice %305 {offsets = [0, 128], sizes = [8, 128], strides = [1, 1]} : vector<8x512xf32> to vector<8x128xf32>
    %313 = arith.negf %312 : vector<8x128xf32>
    %314 = math.exp %313 : vector<8x128xf32>
    %cst_87 = arith.constant 1.000000e+00 : f32
    %315 = vector.broadcast %cst_87 : f32 to vector<8x128xf32>
    %316 = arith.addf %315, %314 : vector<8x128xf32>
    %317 = arith.divf %315, %316 : vector<8x128xf32>
    %318 = vector.extract_strided_slice %305 {offsets = [0, 256], sizes = [8, 128], strides = [1, 1]} : vector<8x512xf32> to vector<8x128xf32>
    %319 = math.tanh %318 : vector<8x128xf32>
    %320 = vector.extract_strided_slice %305 {offsets = [0, 384], sizes = [8, 128], strides = [1, 1]} : vector<8x512xf32> to vector<8x128xf32>
    %321 = arith.negf %320 : vector<8x128xf32>
    %322 = math.exp %321 : vector<8x128xf32>
    %cst_88 = arith.constant 1.000000e+00 : f32
    %323 = vector.broadcast %cst_88 : f32 to vector<8x128xf32>
    %324 = arith.addf %323, %322 : vector<8x128xf32>
    %325 = arith.divf %323, %324 : vector<8x128xf32>
    %326 = arith.mulf %317, %292 : vector<8x128xf32>
    %327 = arith.mulf %311, %319 : vector<8x128xf32>
    %328 = arith.addf %326, %327 : vector<8x128xf32>
    %329 = math.tanh %328 : vector<8x128xf32>
    %330 = arith.mulf %325, %329 : vector<8x128xf32>
    %c9_i32 = arith.constant 9 : i32
    %c0_89 = arith.constant 0 : index
    %331 = arith.index_cast %c9_i32 : i32 to index
    %c0_90 = arith.constant 0 : index
    %c0_91 = arith.constant 0 : index
    %332 = vector.load %arg2[%c0_89, %331, %c0_90, %c0_91] : memref<1x16x8x1xf32, #tpu.memory_space<vmem>>, vector<1x1x8x1xf32>
    %333 = vector.shape_cast %332 : vector<1x1x8x1xf32> to vector<8x1xf32>
    %334 = vector.broadcast %333 : vector<8x1xf32> to vector<8x512xf32>
    %335 = vector.broadcast %3 : vector<1x512xf32> to vector<8x512xf32>
    %336 = arith.mulf %334, %335 : vector<8x512xf32>
    %337 = vector.broadcast %4 : vector<1x512xf32> to vector<8x512xf32>
    %338 = arith.addf %336, %337 : vector<8x512xf32>
    %c0_92 = arith.constant 0 : index
    %c0_93 = arith.constant 0 : index
    %339 = vector.load %arg3[%c0_92, %c0_93] : memref<128x512xf32, #tpu.memory_space<vmem>>, vector<128x512xf32>
    %cst_94 = arith.constant dense<0.000000e+00> : vector<8x512xf32>
    %340 = tpu.matmul %330, %339, %cst_94 {dimension_numbers = #tpu.dot_dimension_numbers<[1], [0], [0], [1], [0, 0, 1, 1], [], []>} : vector<8x128xf32>, vector<128x512xf32>, vector<8x512xf32> -> vector<8x512xf32>
    %341 = arith.addf %340, %338 : vector<8x512xf32>
    %342 = vector.extract_strided_slice %341 {offsets = [0, 0], sizes = [8, 128], strides = [1, 1]} : vector<8x512xf32> to vector<8x128xf32>
    %343 = arith.negf %342 : vector<8x128xf32>
    %344 = math.exp %343 : vector<8x128xf32>
    %cst_95 = arith.constant 1.000000e+00 : f32
    %345 = vector.broadcast %cst_95 : f32 to vector<8x128xf32>
    %346 = arith.addf %345, %344 : vector<8x128xf32>
    %347 = arith.divf %345, %346 : vector<8x128xf32>
    %348 = vector.extract_strided_slice %341 {offsets = [0, 128], sizes = [8, 128], strides = [1, 1]} : vector<8x512xf32> to vector<8x128xf32>
    %349 = arith.negf %348 : vector<8x128xf32>
    %350 = math.exp %349 : vector<8x128xf32>
    %cst_96 = arith.constant 1.000000e+00 : f32
    %351 = vector.broadcast %cst_96 : f32 to vector<8x128xf32>
    %352 = arith.addf %351, %350 : vector<8x128xf32>
    %353 = arith.divf %351, %352 : vector<8x128xf32>
    %354 = vector.extract_strided_slice %341 {offsets = [0, 256], sizes = [8, 128], strides = [1, 1]} : vector<8x512xf32> to vector<8x128xf32>
    %355 = math.tanh %354 : vector<8x128xf32>
    %356 = vector.extract_strided_slice %341 {offsets = [0, 384], sizes = [8, 128], strides = [1, 1]} : vector<8x512xf32> to vector<8x128xf32>
    %357 = arith.negf %356 : vector<8x128xf32>
    %358 = math.exp %357 : vector<8x128xf32>
    %cst_97 = arith.constant 1.000000e+00 : f32
    %359 = vector.broadcast %cst_97 : f32 to vector<8x128xf32>
    %360 = arith.addf %359, %358 : vector<8x128xf32>
    %361 = arith.divf %359, %360 : vector<8x128xf32>
    %362 = arith.mulf %353, %328 : vector<8x128xf32>
    %363 = arith.mulf %347, %355 : vector<8x128xf32>
    %364 = arith.addf %362, %363 : vector<8x128xf32>
    %365 = math.tanh %364 : vector<8x128xf32>
    %366 = arith.mulf %361, %365 : vector<8x128xf32>
    %c10_i32 = arith.constant 10 : i32
    %c0_98 = arith.constant 0 : index
    %367 = arith.index_cast %c10_i32 : i32 to index
    %c0_99 = arith.constant 0 : index
    %c0_100 = arith.constant 0 : index
    %368 = vector.load %arg2[%c0_98, %367, %c0_99, %c0_100] : memref<1x16x8x1xf32, #tpu.memory_space<vmem>>, vector<1x1x8x1xf32>
    %369 = vector.shape_cast %368 : vector<1x1x8x1xf32> to vector<8x1xf32>
    %370 = vector.broadcast %369 : vector<8x1xf32> to vector<8x512xf32>
    %371 = vector.broadcast %3 : vector<1x512xf32> to vector<8x512xf32>
    %372 = arith.mulf %370, %371 : vector<8x512xf32>
    %373 = vector.broadcast %4 : vector<1x512xf32> to vector<8x512xf32>
    %374 = arith.addf %372, %373 : vector<8x512xf32>
    %c0_101 = arith.constant 0 : index
    %c0_102 = arith.constant 0 : index
    %375 = vector.load %arg3[%c0_101, %c0_102] : memref<128x512xf32, #tpu.memory_space<vmem>>, vector<128x512xf32>
    %cst_103 = arith.constant dense<0.000000e+00> : vector<8x512xf32>
    %376 = tpu.matmul %366, %375, %cst_103 {dimension_numbers = #tpu.dot_dimension_numbers<[1], [0], [0], [1], [0, 0, 1, 1], [], []>} : vector<8x128xf32>, vector<128x512xf32>, vector<8x512xf32> -> vector<8x512xf32>
    %377 = arith.addf %376, %374 : vector<8x512xf32>
    %378 = vector.extract_strided_slice %377 {offsets = [0, 0], sizes = [8, 128], strides = [1, 1]} : vector<8x512xf32> to vector<8x128xf32>
    %379 = arith.negf %378 : vector<8x128xf32>
    %380 = math.exp %379 : vector<8x128xf32>
    %cst_104 = arith.constant 1.000000e+00 : f32
    %381 = vector.broadcast %cst_104 : f32 to vector<8x128xf32>
    %382 = arith.addf %381, %380 : vector<8x128xf32>
    %383 = arith.divf %381, %382 : vector<8x128xf32>
    %384 = vector.extract_strided_slice %377 {offsets = [0, 128], sizes = [8, 128], strides = [1, 1]} : vector<8x512xf32> to vector<8x128xf32>
    %385 = arith.negf %384 : vector<8x128xf32>
    %386 = math.exp %385 : vector<8x128xf32>
    %cst_105 = arith.constant 1.000000e+00 : f32
    %387 = vector.broadcast %cst_105 : f32 to vector<8x128xf32>
    %388 = arith.addf %387, %386 : vector<8x128xf32>
    %389 = arith.divf %387, %388 : vector<8x128xf32>
    %390 = vector.extract_strided_slice %377 {offsets = [0, 256], sizes = [8, 128], strides = [1, 1]} : vector<8x512xf32> to vector<8x128xf32>
    %391 = math.tanh %390 : vector<8x128xf32>
    %392 = vector.extract_strided_slice %377 {offsets = [0, 384], sizes = [8, 128], strides = [1, 1]} : vector<8x512xf32> to vector<8x128xf32>
    %393 = arith.negf %392 : vector<8x128xf32>
    %394 = math.exp %393 : vector<8x128xf32>
    %cst_106 = arith.constant 1.000000e+00 : f32
    %395 = vector.broadcast %cst_106 : f32 to vector<8x128xf32>
    %396 = arith.addf %395, %394 : vector<8x128xf32>
    %397 = arith.divf %395, %396 : vector<8x128xf32>
    %398 = arith.mulf %389, %364 : vector<8x128xf32>
    %399 = arith.mulf %383, %391 : vector<8x128xf32>
    %400 = arith.addf %398, %399 : vector<8x128xf32>
    %401 = math.tanh %400 : vector<8x128xf32>
    %402 = arith.mulf %397, %401 : vector<8x128xf32>
    %c11_i32 = arith.constant 11 : i32
    %c0_107 = arith.constant 0 : index
    %403 = arith.index_cast %c11_i32 : i32 to index
    %c0_108 = arith.constant 0 : index
    %c0_109 = arith.constant 0 : index
    %404 = vector.load %arg2[%c0_107, %403, %c0_108, %c0_109] : memref<1x16x8x1xf32, #tpu.memory_space<vmem>>, vector<1x1x8x1xf32>
    %405 = vector.shape_cast %404 : vector<1x1x8x1xf32> to vector<8x1xf32>
    %406 = vector.broadcast %405 : vector<8x1xf32> to vector<8x512xf32>
    %407 = vector.broadcast %3 : vector<1x512xf32> to vector<8x512xf32>
    %408 = arith.mulf %406, %407 : vector<8x512xf32>
    %409 = vector.broadcast %4 : vector<1x512xf32> to vector<8x512xf32>
    %410 = arith.addf %408, %409 : vector<8x512xf32>
    %c0_110 = arith.constant 0 : index
    %c0_111 = arith.constant 0 : index
    %411 = vector.load %arg3[%c0_110, %c0_111] : memref<128x512xf32, #tpu.memory_space<vmem>>, vector<128x512xf32>
    %cst_112 = arith.constant dense<0.000000e+00> : vector<8x512xf32>
    %412 = tpu.matmul %402, %411, %cst_112 {dimension_numbers = #tpu.dot_dimension_numbers<[1], [0], [0], [1], [0, 0, 1, 1], [], []>} : vector<8x128xf32>, vector<128x512xf32>, vector<8x512xf32> -> vector<8x512xf32>
    %413 = arith.addf %412, %410 : vector<8x512xf32>
    %414 = vector.extract_strided_slice %413 {offsets = [0, 0], sizes = [8, 128], strides = [1, 1]} : vector<8x512xf32> to vector<8x128xf32>
    %415 = arith.negf %414 : vector<8x128xf32>
    %416 = math.exp %415 : vector<8x128xf32>
    %cst_113 = arith.constant 1.000000e+00 : f32
    %417 = vector.broadcast %cst_113 : f32 to vector<8x128xf32>
    %418 = arith.addf %417, %416 : vector<8x128xf32>
    %419 = arith.divf %417, %418 : vector<8x128xf32>
    %420 = vector.extract_strided_slice %413 {offsets = [0, 128], sizes = [8, 128], strides = [1, 1]} : vector<8x512xf32> to vector<8x128xf32>
    %421 = arith.negf %420 : vector<8x128xf32>
    %422 = math.exp %421 : vector<8x128xf32>
    %cst_114 = arith.constant 1.000000e+00 : f32
    %423 = vector.broadcast %cst_114 : f32 to vector<8x128xf32>
    %424 = arith.addf %423, %422 : vector<8x128xf32>
    %425 = arith.divf %423, %424 : vector<8x128xf32>
    %426 = vector.extract_strided_slice %413 {offsets = [0, 256], sizes = [8, 128], strides = [1, 1]} : vector<8x512xf32> to vector<8x128xf32>
    %427 = math.tanh %426 : vector<8x128xf32>
    %428 = vector.extract_strided_slice %413 {offsets = [0, 384], sizes = [8, 128], strides = [1, 1]} : vector<8x512xf32> to vector<8x128xf32>
    %429 = arith.negf %428 : vector<8x128xf32>
    %430 = math.exp %429 : vector<8x128xf32>
    %cst_115 = arith.constant 1.000000e+00 : f32
    %431 = vector.broadcast %cst_115 : f32 to vector<8x128xf32>
    %432 = arith.addf %431, %430 : vector<8x128xf32>
    %433 = arith.divf %431, %432 : vector<8x128xf32>
    %434 = arith.mulf %425, %400 : vector<8x128xf32>
    %435 = arith.mulf %419, %427 : vector<8x128xf32>
    %436 = arith.addf %434, %435 : vector<8x128xf32>
    %437 = math.tanh %436 : vector<8x128xf32>
    %438 = arith.mulf %433, %437 : vector<8x128xf32>
    %c12_i32 = arith.constant 12 : i32
    %c0_116 = arith.constant 0 : index
    %439 = arith.index_cast %c12_i32 : i32 to index
    %c0_117 = arith.constant 0 : index
    %c0_118 = arith.constant 0 : index
    %440 = vector.load %arg2[%c0_116, %439, %c0_117, %c0_118] : memref<1x16x8x1xf32, #tpu.memory_space<vmem>>, vector<1x1x8x1xf32>
    %441 = vector.shape_cast %440 : vector<1x1x8x1xf32> to vector<8x1xf32>
    %442 = vector.broadcast %441 : vector<8x1xf32> to vector<8x512xf32>
    %443 = vector.broadcast %3 : vector<1x512xf32> to vector<8x512xf32>
    %444 = arith.mulf %442, %443 : vector<8x512xf32>
    %445 = vector.broadcast %4 : vector<1x512xf32> to vector<8x512xf32>
    %446 = arith.addf %444, %445 : vector<8x512xf32>
    %c0_119 = arith.constant 0 : index
    %c0_120 = arith.constant 0 : index
    %447 = vector.load %arg3[%c0_119, %c0_120] : memref<128x512xf32, #tpu.memory_space<vmem>>, vector<128x512xf32>
    %cst_121 = arith.constant dense<0.000000e+00> : vector<8x512xf32>
    %448 = tpu.matmul %438, %447, %cst_121 {dimension_numbers = #tpu.dot_dimension_numbers<[1], [0], [0], [1], [0, 0, 1, 1], [], []>} : vector<8x128xf32>, vector<128x512xf32>, vector<8x512xf32> -> vector<8x512xf32>
    %449 = arith.addf %448, %446 : vector<8x512xf32>
    %450 = vector.extract_strided_slice %449 {offsets = [0, 0], sizes = [8, 128], strides = [1, 1]} : vector<8x512xf32> to vector<8x128xf32>
    %451 = arith.negf %450 : vector<8x128xf32>
    %452 = math.exp %451 : vector<8x128xf32>
    %cst_122 = arith.constant 1.000000e+00 : f32
    %453 = vector.broadcast %cst_122 : f32 to vector<8x128xf32>
    %454 = arith.addf %453, %452 : vector<8x128xf32>
    %455 = arith.divf %453, %454 : vector<8x128xf32>
    %456 = vector.extract_strided_slice %449 {offsets = [0, 128], sizes = [8, 128], strides = [1, 1]} : vector<8x512xf32> to vector<8x128xf32>
    %457 = arith.negf %456 : vector<8x128xf32>
    %458 = math.exp %457 : vector<8x128xf32>
    %cst_123 = arith.constant 1.000000e+00 : f32
    %459 = vector.broadcast %cst_123 : f32 to vector<8x128xf32>
    %460 = arith.addf %459, %458 : vector<8x128xf32>
    %461 = arith.divf %459, %460 : vector<8x128xf32>
    %462 = vector.extract_strided_slice %449 {offsets = [0, 256], sizes = [8, 128], strides = [1, 1]} : vector<8x512xf32> to vector<8x128xf32>
    %463 = math.tanh %462 : vector<8x128xf32>
    %464 = vector.extract_strided_slice %449 {offsets = [0, 384], sizes = [8, 128], strides = [1, 1]} : vector<8x512xf32> to vector<8x128xf32>
    %465 = arith.negf %464 : vector<8x128xf32>
    %466 = math.exp %465 : vector<8x128xf32>
    %cst_124 = arith.constant 1.000000e+00 : f32
    %467 = vector.broadcast %cst_124 : f32 to vector<8x128xf32>
    %468 = arith.addf %467, %466 : vector<8x128xf32>
    %469 = arith.divf %467, %468 : vector<8x128xf32>
    %470 = arith.mulf %461, %436 : vector<8x128xf32>
    %471 = arith.mulf %455, %463 : vector<8x128xf32>
    %472 = arith.addf %470, %471 : vector<8x128xf32>
    %473 = math.tanh %472 : vector<8x128xf32>
    %474 = arith.mulf %469, %473 : vector<8x128xf32>
    %c13_i32 = arith.constant 13 : i32
    %c0_125 = arith.constant 0 : index
    %475 = arith.index_cast %c13_i32 : i32 to index
    %c0_126 = arith.constant 0 : index
    %c0_127 = arith.constant 0 : index
    %476 = vector.load %arg2[%c0_125, %475, %c0_126, %c0_127] : memref<1x16x8x1xf32, #tpu.memory_space<vmem>>, vector<1x1x8x1xf32>
    %477 = vector.shape_cast %476 : vector<1x1x8x1xf32> to vector<8x1xf32>
    %478 = vector.broadcast %477 : vector<8x1xf32> to vector<8x512xf32>
    %479 = vector.broadcast %3 : vector<1x512xf32> to vector<8x512xf32>
    %480 = arith.mulf %478, %479 : vector<8x512xf32>
    %481 = vector.broadcast %4 : vector<1x512xf32> to vector<8x512xf32>
    %482 = arith.addf %480, %481 : vector<8x512xf32>
    %c0_128 = arith.constant 0 : index
    %c0_129 = arith.constant 0 : index
    %483 = vector.load %arg3[%c0_128, %c0_129] : memref<128x512xf32, #tpu.memory_space<vmem>>, vector<128x512xf32>
    %cst_130 = arith.constant dense<0.000000e+00> : vector<8x512xf32>
    %484 = tpu.matmul %474, %483, %cst_130 {dimension_numbers = #tpu.dot_dimension_numbers<[1], [0], [0], [1], [0, 0, 1, 1], [], []>} : vector<8x128xf32>, vector<128x512xf32>, vector<8x512xf32> -> vector<8x512xf32>
    %485 = arith.addf %484, %482 : vector<8x512xf32>
    %486 = vector.extract_strided_slice %485 {offsets = [0, 0], sizes = [8, 128], strides = [1, 1]} : vector<8x512xf32> to vector<8x128xf32>
    %487 = arith.negf %486 : vector<8x128xf32>
    %488 = math.exp %487 : vector<8x128xf32>
    %cst_131 = arith.constant 1.000000e+00 : f32
    %489 = vector.broadcast %cst_131 : f32 to vector<8x128xf32>
    %490 = arith.addf %489, %488 : vector<8x128xf32>
    %491 = arith.divf %489, %490 : vector<8x128xf32>
    %492 = vector.extract_strided_slice %485 {offsets = [0, 128], sizes = [8, 128], strides = [1, 1]} : vector<8x512xf32> to vector<8x128xf32>
    %493 = arith.negf %492 : vector<8x128xf32>
    %494 = math.exp %493 : vector<8x128xf32>
    %cst_132 = arith.constant 1.000000e+00 : f32
    %495 = vector.broadcast %cst_132 : f32 to vector<8x128xf32>
    %496 = arith.addf %495, %494 : vector<8x128xf32>
    %497 = arith.divf %495, %496 : vector<8x128xf32>
    %498 = vector.extract_strided_slice %485 {offsets = [0, 256], sizes = [8, 128], strides = [1, 1]} : vector<8x512xf32> to vector<8x128xf32>
    %499 = math.tanh %498 : vector<8x128xf32>
    %500 = vector.extract_strided_slice %485 {offsets = [0, 384], sizes = [8, 128], strides = [1, 1]} : vector<8x512xf32> to vector<8x128xf32>
    %501 = arith.negf %500 : vector<8x128xf32>
    %502 = math.exp %501 : vector<8x128xf32>
    %cst_133 = arith.constant 1.000000e+00 : f32
    %503 = vector.broadcast %cst_133 : f32 to vector<8x128xf32>
    %504 = arith.addf %503, %502 : vector<8x128xf32>
    %505 = arith.divf %503, %504 : vector<8x128xf32>
    %506 = arith.mulf %497, %472 : vector<8x128xf32>
    %507 = arith.mulf %491, %499 : vector<8x128xf32>
    %508 = arith.addf %506, %507 : vector<8x128xf32>
    %509 = math.tanh %508 : vector<8x128xf32>
    %510 = arith.mulf %505, %509 : vector<8x128xf32>
    %c14_i32 = arith.constant 14 : i32
    %c0_134 = arith.constant 0 : index
    %511 = arith.index_cast %c14_i32 : i32 to index
    %c0_135 = arith.constant 0 : index
    %c0_136 = arith.constant 0 : index
    %512 = vector.load %arg2[%c0_134, %511, %c0_135, %c0_136] : memref<1x16x8x1xf32, #tpu.memory_space<vmem>>, vector<1x1x8x1xf32>
    %513 = vector.shape_cast %512 : vector<1x1x8x1xf32> to vector<8x1xf32>
    %514 = vector.broadcast %513 : vector<8x1xf32> to vector<8x512xf32>
    %515 = vector.broadcast %3 : vector<1x512xf32> to vector<8x512xf32>
    %516 = arith.mulf %514, %515 : vector<8x512xf32>
    %517 = vector.broadcast %4 : vector<1x512xf32> to vector<8x512xf32>
    %518 = arith.addf %516, %517 : vector<8x512xf32>
    %c0_137 = arith.constant 0 : index
    %c0_138 = arith.constant 0 : index
    %519 = vector.load %arg3[%c0_137, %c0_138] : memref<128x512xf32, #tpu.memory_space<vmem>>, vector<128x512xf32>
    %cst_139 = arith.constant dense<0.000000e+00> : vector<8x512xf32>
    %520 = tpu.matmul %510, %519, %cst_139 {dimension_numbers = #tpu.dot_dimension_numbers<[1], [0], [0], [1], [0, 0, 1, 1], [], []>} : vector<8x128xf32>, vector<128x512xf32>, vector<8x512xf32> -> vector<8x512xf32>
    %521 = arith.addf %520, %518 : vector<8x512xf32>
    %522 = vector.extract_strided_slice %521 {offsets = [0, 0], sizes = [8, 128], strides = [1, 1]} : vector<8x512xf32> to vector<8x128xf32>
    %523 = arith.negf %522 : vector<8x128xf32>
    %524 = math.exp %523 : vector<8x128xf32>
    %cst_140 = arith.constant 1.000000e+00 : f32
    %525 = vector.broadcast %cst_140 : f32 to vector<8x128xf32>
    %526 = arith.addf %525, %524 : vector<8x128xf32>
    %527 = arith.divf %525, %526 : vector<8x128xf32>
    %528 = vector.extract_strided_slice %521 {offsets = [0, 128], sizes = [8, 128], strides = [1, 1]} : vector<8x512xf32> to vector<8x128xf32>
    %529 = arith.negf %528 : vector<8x128xf32>
    %530 = math.exp %529 : vector<8x128xf32>
    %cst_141 = arith.constant 1.000000e+00 : f32
    %531 = vector.broadcast %cst_141 : f32 to vector<8x128xf32>
    %532 = arith.addf %531, %530 : vector<8x128xf32>
    %533 = arith.divf %531, %532 : vector<8x128xf32>
    %534 = vector.extract_strided_slice %521 {offsets = [0, 256], sizes = [8, 128], strides = [1, 1]} : vector<8x512xf32> to vector<8x128xf32>
    %535 = math.tanh %534 : vector<8x128xf32>
    %536 = vector.extract_strided_slice %521 {offsets = [0, 384], sizes = [8, 128], strides = [1, 1]} : vector<8x512xf32> to vector<8x128xf32>
    %537 = arith.negf %536 : vector<8x128xf32>
    %538 = math.exp %537 : vector<8x128xf32>
    %cst_142 = arith.constant 1.000000e+00 : f32
    %539 = vector.broadcast %cst_142 : f32 to vector<8x128xf32>
    %540 = arith.addf %539, %538 : vector<8x128xf32>
    %541 = arith.divf %539, %540 : vector<8x128xf32>
    %542 = arith.mulf %533, %508 : vector<8x128xf32>
    %543 = arith.mulf %527, %535 : vector<8x128xf32>
    %544 = arith.addf %542, %543 : vector<8x128xf32>
    %545 = math.tanh %544 : vector<8x128xf32>
    %546 = arith.mulf %541, %545 : vector<8x128xf32>
    %c15_i32 = arith.constant 15 : i32
    %c0_143 = arith.constant 0 : index
    %547 = arith.index_cast %c15_i32 : i32 to index
    %c0_144 = arith.constant 0 : index
    %c0_145 = arith.constant 0 : index
    %548 = vector.load %arg2[%c0_143, %547, %c0_144, %c0_145] : memref<1x16x8x1xf32, #tpu.memory_space<vmem>>, vector<1x1x8x1xf32>
    %549 = vector.shape_cast %548 : vector<1x1x8x1xf32> to vector<8x1xf32>
    %550 = vector.broadcast %549 : vector<8x1xf32> to vector<8x512xf32>
    %551 = vector.broadcast %3 : vector<1x512xf32> to vector<8x512xf32>
    %552 = arith.mulf %550, %551 : vector<8x512xf32>
    %553 = vector.broadcast %4 : vector<1x512xf32> to vector<8x512xf32>
    %554 = arith.addf %552, %553 : vector<8x512xf32>
    %c0_146 = arith.constant 0 : index
    %c0_147 = arith.constant 0 : index
    %555 = vector.load %arg3[%c0_146, %c0_147] : memref<128x512xf32, #tpu.memory_space<vmem>>, vector<128x512xf32>
    %cst_148 = arith.constant dense<0.000000e+00> : vector<8x512xf32>
    %556 = tpu.matmul %546, %555, %cst_148 {dimension_numbers = #tpu.dot_dimension_numbers<[1], [0], [0], [1], [0, 0, 1, 1], [], []>} : vector<8x128xf32>, vector<128x512xf32>, vector<8x512xf32> -> vector<8x512xf32>
    %557 = arith.addf %556, %554 : vector<8x512xf32>
    %558 = vector.extract_strided_slice %557 {offsets = [0, 0], sizes = [8, 128], strides = [1, 1]} : vector<8x512xf32> to vector<8x128xf32>
    %559 = arith.negf %558 : vector<8x128xf32>
    %560 = math.exp %559 : vector<8x128xf32>
    %cst_149 = arith.constant 1.000000e+00 : f32
    %561 = vector.broadcast %cst_149 : f32 to vector<8x128xf32>
    %562 = arith.addf %561, %560 : vector<8x128xf32>
    %563 = arith.divf %561, %562 : vector<8x128xf32>
    %564 = vector.extract_strided_slice %557 {offsets = [0, 128], sizes = [8, 128], strides = [1, 1]} : vector<8x512xf32> to vector<8x128xf32>
    %565 = arith.negf %564 : vector<8x128xf32>
    %566 = math.exp %565 : vector<8x128xf32>
    %cst_150 = arith.constant 1.000000e+00 : f32
    %567 = vector.broadcast %cst_150 : f32 to vector<8x128xf32>
    %568 = arith.addf %567, %566 : vector<8x128xf32>
    %569 = arith.divf %567, %568 : vector<8x128xf32>
    %570 = vector.extract_strided_slice %557 {offsets = [0, 256], sizes = [8, 128], strides = [1, 1]} : vector<8x512xf32> to vector<8x128xf32>
    %571 = math.tanh %570 : vector<8x128xf32>
    %572 = vector.extract_strided_slice %557 {offsets = [0, 384], sizes = [8, 128], strides = [1, 1]} : vector<8x512xf32> to vector<8x128xf32>
    %573 = arith.negf %572 : vector<8x128xf32>
    %574 = math.exp %573 : vector<8x128xf32>
    %cst_151 = arith.constant 1.000000e+00 : f32
    %575 = vector.broadcast %cst_151 : f32 to vector<8x128xf32>
    %576 = arith.addf %575, %574 : vector<8x128xf32>
    %577 = arith.divf %575, %576 : vector<8x128xf32>
    %578 = arith.mulf %569, %544 : vector<8x128xf32>
    %579 = arith.mulf %563, %571 : vector<8x128xf32>
    %580 = arith.addf %578, %579 : vector<8x128xf32>
    %581 = math.tanh %580 : vector<8x128xf32>
    %582 = arith.mulf %577, %581 : vector<8x128xf32>
    %c16_i32 = arith.constant 16 : i32
    %c0_152 = arith.constant 0 : index
    %c0_153 = arith.constant 0 : index
    %583 = vector.load %arg7[%c0_152, %c0_153] : memref<8x128xf32, #tpu.memory_space<vmem>>, vector<8x128xf32>
    tpu.vector_store %arg7[%c0_152, %c0_153], %582 {strides = array<i32>} : memref<8x128xf32, #tpu.memory_space<vmem>>, vector<8x128xf32>,
    %c0_154 = arith.constant 0 : index
    %c0_155 = arith.constant 0 : index
    %584 = vector.load %arg8[%c0_154, %c0_155] : memref<8x128xf32, #tpu.memory_space<vmem>>, vector<8x128xf32>
    tpu.vector_store %arg8[%c0_154, %c0_155], %580 {strides = array<i32>} : memref<8x128xf32, #tpu.memory_space<vmem>>, vector<8x128xf32>,
    %c0_156 = arith.constant 0 : index
    %c0_157 = arith.constant 0 : index
    %585 = vector.load %arg6[%c0_156, %c0_157] : memref<8x128xf32, #tpu.memory_space<vmem>>, vector<8x128xf32>
    tpu.vector_store %arg6[%c0_156, %c0_157], %582 {strides = array<i32>} : memref<8x128xf32, #tpu.memory_space<vmem>>, vector<8x128xf32>,
    return
  }
  func.func @transform_0(%arg0: i32, %arg1: i32) -> (i32, i32, i32, i32) {
    %c0_i32 = arith.constant 0 : i32
    %c0_i32_0 = arith.constant 0 : i32
    %c0_i32_1 = arith.constant 0 : i32
    return %arg0, %arg1, %c0_i32, %c0_i32_0 : i32, i32, i32, i32
  }
  func.func @transform_1(%arg0: i32, %arg1: i32) -> (i32, i32) {
    %c0_i32 = arith.constant 0 : i32
    %c0_i32_0 = arith.constant 0 : i32
    %c0_i32_1 = arith.constant 0 : i32
    return %c0_i32, %c0_i32_0 : i32, i32
  }
  func.func @transform_2(%arg0: i32, %arg1: i32) -> (i32, i32) {
    %c0_i32 = arith.constant 0 : i32
    %c0_i32_0 = arith.constant 0 : i32
    %c0_i32_1 = arith.constant 0 : i32
    return %c0_i32, %c0_i32_0 : i32, i32
  }
  func.func @transform_3(%arg0: i32, %arg1: i32) -> (i32, i32) {
    %c0_i32 = arith.constant 0 : i32
    %c0_i32_0 = arith.constant 0 : i32
    %c0_i32_1 = arith.constant 0 : i32
    return %c0_i32, %c0_i32_0 : i32, i32
  }
  func.func @transform_4(%arg0: i32, %arg1: i32) -> (i32, i32) {
    %c0_i32 = arith.constant 0 : i32
    %c0_i32_0 = arith.constant 0 : i32
    return %arg0, %c0_i32 : i32, i32
  }
}

</mosaic_0001>

<llo_original>
// kernel: tpu_custom_call.1
$region0: #{tpu_custom_call.1}
  #allocation0 [shape = 'u32[]', space=smem, size = 0x4, offset = 0x4, fixed_abs, tag = 'smem constant byte address 0x4 - core index']
  #allocation1 [shape = 'u32[144,128]{1,0:T(1,128)}', space=vmem, size = 0x12000, scoped, tag = 'internal scratch']
  #allocation2 [shape = 'f32[8,128]{1,0:T(8,128)}', space=vmem, size = 0x1000, scoped, tag = 'scratch operand']
  #allocation3 [shape = 'f32[8,128]{1,0:T(8,128)}', space=vmem, size = 0x1000, scoped, tag = 'scratch operand']
  %s0 = inlined_call_operand.vmem [shape: f32[1,16,8,1], index: 0, kind: input, shape index: {}]
  %s1 = inlined_call_operand.hbm [shape: f32[128,512], index: 1, kind: input, shape index: {}]
  %s2 = inlined_call_operand.vmem [shape: f32[1,512], index: 2, kind: input, shape index: {}]
  %s3 = inlined_call_operand.vmem [shape: f32[1,512], index: 3, kind: input, shape index: {}]
  %s4 = inlined_call_operand.hbm [shape: f32[8,128], index: 4, kind: output, shape index: {}]
  %s5 = sld [smem:[#allocation0]]
  $region34: #{tpu_custom_call.1} parent=0
    _
  %s7 = ssub.s32 1, %s5
  %s8 = scalar_select 0, %s7, %s5
  $region1: #{tpu_custom_call.1} parent=0
    #allocation4 [shape = 'u8[262144]{0}', space=vmem, size = 0x40000, scoped, tag = 'input window, operand 1, single buffered']
    #allocation5 [shape = 's32[1]{0}', space=sflag, size = 0x4, scoped, tag = 'scoped memory for tpu_custom_call.1']
    #allocation6 [shape = 's32[1]{0}', space=sflag, size = 0x4, scoped, tag = 'scoped memory for tpu_custom_call.1']
    #allocation7 [shape = 'u8[4096]{0}', space=vmem, size = 0x1000, scoped, tag = 'output window, operand 0, single buffered']
    %9 = vsyncpa [#allocation5], 0
    %10 = vsyncpa [#allocation6], 0
    // Predicated region
    $region2: #{tpu_custom_call.1} parent=1 // pred_check
      _
    $region3: #{tpu_custom_call.1} parent=1 // pred_check_branch
      %12 = sbr.rel (0) target = $region5
    $region4: #{tpu_custom_call.1} parent=1 // pred_region
      _
    $region5: #{tpu_custom_call.1} parent=1 // pred_fallthru
      _
    // Predicated region
    $region6: #{tpu_custom_call.1} parent=1 // pred_check
      _
    $region7: #{tpu_custom_call.1} parent=1 // pred_check_branch
      %14 = sbr.rel (0) target = $region9
    $region8: #{tpu_custom_call.1} parent=1 // pred_region
      %s16 = ssub.s32 8192, 8192
      %17 = vsyncadd [#allocation5], %s16
      %s18 = sshll.u32 [#allocation4], 4
      %s19 = int_to_ptr.vmem [resolvable:$true] %s18
      %24 = dma.hbm_to_vmem [thread:$0]  %s1, 8192, %s19, [#allocation5], 512, 512, 32
    $region9: #{tpu_custom_call.1} parent=1 // pred_fallthru
      _
    // Predicated region
    $region10: #{tpu_custom_call.1} parent=1 // pred_check
      _
    $region11: #{tpu_custom_call.1} parent=1 // pred_check_branch
      %26 = sbr.rel (0) target = $region13
    $region12: #{tpu_custom_call.1} parent=1 // pred_region
      _
    $region13: #{tpu_custom_call.1} parent=1 // pred_fallthru
      _
    // Predicated region
    $region14: #{tpu_custom_call.1} parent=1 // pred_check
      _
    $region15: #{tpu_custom_call.1} parent=1 // pred_check_branch
      %28 = sbr.rel (0) target = $region17
    $region16: #{tpu_custom_call.1} parent=1 // pred_region
      _
    $region17: #{tpu_custom_call.1} parent=1 // pred_fallthru
      _
    // Predicated region
    $region18: #{tpu_custom_call.1} parent=1 // pred_check
      _
    $region19: #{tpu_custom_call.1} parent=1 // pred_check_branch
      %30 = sbr.rel (0) target = $region21
    $region20: #{tpu_custom_call.1} parent=1 // pred_region
      %31 = dma.done [#allocation5], 8192
    $region21: #{tpu_custom_call.1} parent=1 // pred_fallthru
      _
    %p32 = scmp.eq.s32.totalorder 0, 0
    // Predicated region
    $region22: #{tpu_custom_call.1} parent=1 // pred_check
      %p33 = pneg %p32
    $region23: #{tpu_custom_call.1} parent=1 // pred_check_branch
      %35 = sbr.rel (%p33) target = $region25
    $region24: #{tpu_custom_call.1} parent=1 // pred_region
      %36 = vst [vmem:[#allocation2] sm:$0xff] 0.0
      %37 = vst [vmem:[#allocation3] sm:$0xff] 0.0
    $region25: #{tpu_custom_call.1} parent=1 // pred_fallthru
      _
    %v38 = vld [vmem:[%s2] sm:$0xf]
    %v39 = vld [vmem:[%s3] sm:$0xf]
    %v40 = vld [vmem:[#allocation2] sm:$0xff]
    %v41 = vld [vmem:[#allocation3] sm:$0xff]
    %v42 = vld [vmem:[%s0] sm:$0xff]
    %44 = vset.pattern.permute.xlu0 0
    %45 = vperm.xlu0 %44, %v42
    %v46 = vpop.permute.xlu0 %45
    %v49 = vlaneseq
    %v50 = vshrl.u32 %v49, 7
    %v51 = vsub.s32 0, %v50
    %v52 = vrot.slane %v38, %v51
    %v53 = vlaneseq
    %v54 = vshrl.u32 %v53, 7
    %v55 = vsub.s32 1, %v54
    %v56 = vrot.slane %v38, %v55
    %v57 = vlaneseq
    %v58 = vshrl.u32 %v57, 7
    %v59 = vsub.s32 2, %v58
    %v60 = vrot.slane %v38, %v59
    %v61 = vlaneseq
    %v62 = vshrl.u32 %v61, 7
    %v63 = vsub.s32 3, %v62
    %v64 = vrot.slane %v38, %v63
    %v69 = vmul.f32 %v46, %v52
    %v70 = vmul.f32 %v46, %v56
    %v71 = vmul.f32 %v46, %v60
    %v72 = vmul.f32 %v46, %v64
    %v74 = vlaneseq
    %v75 = vshrl.u32 %v74, 7
    %v76 = vsub.s32 0, %v75
    %v77 = vrot.slane %v39, %v76
    %v78 = vlaneseq
    %v79 = vshrl.u32 %v78, 7
    %v80 = vsub.s32 1, %v79
    %v81 = vrot.slane %v39, %v80
    %v82 = vlaneseq
    %v83 = vshrl.u32 %v82, 7
    %v84 = vsub.s32 2, %v83
    %v85 = vrot.slane %v39, %v84
    %v86 = vlaneseq
    %v87 = vshrl.u32 %v86, 7
    %v88 = vsub.s32 3, %v87
    %v89 = vrot.slane %v39, %v88
    %v94 = vadd.f32 %v69, %v77
    %v95 = vadd.f32 %v70, %v81
    %v96 = vadd.f32 %v71, %v85
    %v97 = vadd.f32 %v72, %v89
    %v98 = vld [vmem:[#allocation4] sm:$0xff]
    %v99 = vld [vmem:[#allocation4 + $0x8] sm:$0xff]
    %v100 = vld [vmem:[#allocation4 + $0x10] sm:$0xff]
    %v101 = vld [vmem:[#allocation4 + $0x18] sm:$0xff]
    %v102 = vld [vmem:[#allocation4 + $0x20] sm:$0xff]
    %v103 = vld [vmem:[#allocation4 + $0x28] sm:$0xff]
    %v104 = vld [vmem:[#allocation4 + $0x30] sm:$0xff]
    %v105 = vld [vmem:[#allocation4 + $0x38] sm:$0xff]
    %v106 = vld [vmem:[#allocation4 + $0x40] sm:$0xff]
    %v107 = vld [vmem:[#allocation4 + $0x48] sm:$0xff]
    %v108 = vld [vmem:[#allocation4 + $0x50] sm:$0xff]
    %v109 = vld [vmem:[#allocation4 + $0x58] sm:$0xff]
    %v110 = vld [vmem:[#allocation4 + $0x60] sm:$0xff]
    %v111 = vld [vmem:[#allocation4 + $0x68] sm:$0xff]
    %v112 = vld [vmem:[#allocation4 + $0x70] sm:$0xff]
    %v113 = vld [vmem:[#allocation4 + $0x78] sm:$0xff]
    %v114 = vld [vmem:[#allocation4 + $0x80] sm:$0xff]
    %v115 = vld [vmem:[#allocation4 + $0x88] sm:$0xff]
    %v116 = vld [vmem:[#allocation4 + $0x90] sm:$0xff]
    %v117 = vld [vmem:[#allocation4 + $0x98] sm:$0xff]
    %v118 = vld [vmem:[#allocation4 + $0xa0] sm:$0xff]
    %v119 = vld [vmem:[#allocation4 + $0xa8] sm:$0xff]
    %v120 = vld [vmem:[#allocation4 + $0xb0] sm:$0xff]
    %v121 = vld [vmem:[#allocation4 + $0xb8] sm:$0xff]
    %v122 = vld [vmem:[#allocation4 + $0xc0] sm:$0xff]
    %v123 = vld [vmem:[#allocation4 + $0xc8] sm:$0xff]
    %v124 = vld [vmem:[#allocation4 + $0xd0] sm:$0xff]
    %v125 = vld [vmem:[#allocation4 + $0xd8] sm:$0xff]
    %v126 = vld [vmem:[#allocation4 + $0xe0] sm:$0xff]
    %v127 = vld [vmem:[#allocation4 + $0xe8] sm:$0xff]
    %v128 = vld [vmem:[#allocation4 + $0xf0] sm:$0xff]
    %v129 = vld [vmem:[#allocation4 + $0xf8] sm:$0xff]
    %v130 = vld [vmem:[#allocation4 + $0x100] sm:$0xff]
    %v131 = vld [vmem:[#allocation4 + $0x108] sm:$0xff]
    %v132 = vld [vmem:[#allocation4 + $0x110] sm:$0xff]
    %v133 = vld [vmem:[#allocation4 + $0x118] sm:$0xff]
    %v134 = vld [vmem:[#allocation4 + $0x120] sm:$0xff]
    %v135 = vld [vmem:[#allocation4 + $0x128] sm:$0xff]
    %v136 = vld [vmem:[#allocation4 + $0x130] sm:$0xff]
    %v137 = vld [vmem:[#allocation4 + $0x138] sm:$0xff]
    %v138 = vld [vmem:[#allocation4 + $0x140] sm:$0xff]
    %v139 = vld [vmem:[#allocation4 + $0x148] sm:$0xff]
    %v140 = vld [vmem:[#allocation4 + $0x150] sm:$0xff]
    %v141 = vld [vmem:[#allocation4 + $0x158] sm:$0xff]
    %v142 = vld [vmem:[#allocation4 + $0x160] sm:$0xff]
    %v143 = vld [vmem:[#allocation4 + $0x168] sm:$0xff]
    %v144 = vld [vmem:[#allocation4 + $0x170] sm:$0xff]
    %v145 = vld [vmem:[#allocation4 + $0x178] sm:$0xff]
    %v146 = vld [vmem:[#allocation4 + $0x180] sm:$0xff]
    %v147 = vld [vmem:[#allocation4 + $0x188] sm:$0xff]
    %v148 = vld [vmem:[#allocation4 + $0x190] sm:$0xff]
    %v149 = vld [vmem:[#allocation4 + $0x198] sm:$0xff]
    %v150 = vld [vmem:[#allocation4 + $0x1a0] sm:$0xff]
    %v151 = vld [vmem:[#allocation4 + $0x1a8] sm:$0xff]
    %v152 = vld [vmem:[#allocation4 + $0x1b0] sm:$0xff]
    %v153 = vld [vmem:[#allocation4 + $0x1b8] sm:$0xff]
    %v154 = vld [vmem:[#allocation4 + $0x1c0] sm:$0xff]
    %v155 = vld [vmem:[#allocation4 + $0x1c8] sm:$0xff]
    %v156 = vld [vmem:[#allocation4 + $0x1d0] sm:$0xff]
    %v157 = vld [vmem:[#allocation4 + $0x1d8] sm:$0xff]
    %v158 = vld [vmem:[#allocation4 + $0x1e0] sm:$0xff]
    %v159 = vld [vmem:[#allocation4 + $0x1e8] sm:$0xff]
    %v160 = vld [vmem:[#allocation4 + $0x1f0] sm:$0xff]
    %v161 = vld [vmem:[#allocation4 + $0x1f8] sm:$0xff]
    %162 = vmatprep.subr.mxu0 %v99
    %163 = vmatpush1.msra.mxu0 %v98
    %164 = vmatprep.subr.mxu0 %v103
    %165 = vmatpush1.msra.mxu0 %v102
    %166 = vmatprep.subr.mxu0 %v107
    %167 = vmatpush1.msra.mxu0 %v106
    %168 = vmatprep.subr.mxu0 %v111
    %169 = vmatpush1.msra.mxu0 %v110
    %170 = vmatprep.subr.mxu0 %v115
    %171 = vmatpush1.msra.mxu0 %v114
    %172 = vmatprep.subr.mxu0 %v119
    %173 = vmatpush1.msra.mxu0 %v118
    %174 = vmatprep.subr.mxu0 %v123
    %175 = vmatpush1.msra.mxu0 %v122
    %176 = vmatprep.subr.mxu0 %v127
    %177 = vmatpush1.msra.mxu0 %v126
    %178 = vmatprep.subr.mxu0 %v131
    %179 = vmatpush1.msra.mxu0 %v130
    %180 = vmatprep.subr.mxu0 %v135
    %181 = vmatpush1.msra.mxu0 %v134
    %182 = vmatprep.subr.mxu0 %v139
    %183 = vmatpush1.msra.mxu0 %v138
    %184 = vmatprep.subr.mxu0 %v143
    %185 = vmatpush1.msra.mxu0 %v142
    %186 = vmatprep.subr.mxu0 %v147
    %187 = vmatpush1.msra.mxu0 %v146
    %188 = vmatprep.subr.mxu0 %v151
    %189 = vmatpush1.msra.mxu0 %v150
    %190 = vmatprep.subr.mxu0 %v155
    %191 = vmatpush1.msra.mxu0 %v154
    %192 = vmatprep.subr.mxu0 %v159
    %193 = vmatpush1.msra.mxu0 %v158
    %194 = vmatprep.subr.mxu0 0.0
    %195 = vmatpush1.msra.mxu0 0.0
    %196 = vmatprep.subr.mxu0 0.0
    %197 = vmatpush1.msra.mxu0 0.0
    %198 = vmatprep.subr.mxu0 0.0
    %199 = vmatpush1.msra.mxu0 0.0
    %200 = vmatprep.subr.mxu0 0.0
    %201 = vmatpush1.msra.mxu0 0.0
    %202 = vmatprep.subr.mxu0 0.0
    %203 = vmatpush1.msra.mxu0 0.0
    %204 = vmatprep.subr.mxu0 0.0
    %205 = vmatpush1.msra.mxu0 0.0
    %206 = vmatprep.subr.mxu0 0.0
    %207 = vmatpush1.msra.mxu0 0.0
    %208 = vmatprep.subr.mxu0 0.0
    %209 = vmatpush1.msra.mxu0 0.0
    %210 = vmatprep.subr.mxu0 0.0
    %211 = vmatpush1.msra.mxu0 0.0
    %212 = vmatprep.subr.mxu0 0.0
    %213 = vmatpush1.msra.mxu0 0.0
    %214 = vmatprep.subr.mxu0 0.0
    %215 = vmatpush1.msra.mxu0 0.0
    %216 = vmatprep.subr.mxu0 0.0
    %217 = vmatpush1.msra.mxu0 0.0
    %218 = vmatprep.subr.mxu0 0.0
    %219 = vmatpush1.msra.mxu0 0.0
    %220 = vmatprep.subr.mxu0 0.0
    %221 = vmatpush1.msra.mxu0 0.0
    %222 = vmatprep.subr.mxu0 0.0
    %223 = vmatpush1.msra.mxu0 0.0
    %224 = vmatprep.subr.mxu0 0.0
    %225 = vmatpush1.msra.mxu0 0.0
    %226 = vmatprep.mubr.f32.mxu0 0.0
    %227 = vmatmul.mubr.f32.gmra.mrb[0].mxu0 %v40
    %v228 = vpop.f32.mrb[0].mxu0
    %v229 = vadd.f32 %v94, %v228
    %v230 = vpop.f32.mrb[0].mxu0
    %v231 = vadd.f32 %v95, %v230
    %232 = vdwg.mxu0
    %233 = vmatprep.subr.mxu0 %v101
    %234 = vmatpush1.msra.mxu0 %v100
    %235 = vmatprep.subr.mxu0 %v105
    %236 = vmatpush1.msra.mxu0 %v104
    %237 = vmatprep.subr.mxu0 %v109
    %238 = vmatpush1.msra.mxu0 %v108
    %239 = vmatprep.subr.mxu0 %v113
    %240 = vmatpush1.msra.mxu0 %v112
    %241 = vmatprep.subr.mxu0 %v117
    %242 = vmatpush1.msra.mxu0 %v116
    %243 = vmatprep.subr.mxu0 %v121
    %244 = vmatpush1.msra.mxu0 %v120
    %245 = vmatprep.subr.mxu0 %v125
    %246 = vmatpush1.msra.mxu0 %v124
    %247 = vmatprep.subr.mxu0 %v129
    %248 = vmatpush1.msra.mxu0 %v128
    %249 = vmatprep.subr.mxu0 %v133
    %250 = vmatpush1.msra.mxu0 %v132
    %251 = vmatprep.subr.mxu0 %v137
    %252 = vmatpush1.msra.mxu0 %v136
    %253 = vmatprep.subr.mxu0 %v141
    %254 = vmatpush1.msra.mxu0 %v140
    %255 = vmatprep.subr.mxu0 %v145
    %256 = vmatpush1.msra.mxu0 %v144
    %257 = vmatprep.subr.mxu0 %v149
    %258 = vmatpush1.msra.mxu0 %v148
    %259 = vmatprep.subr.mxu0 %v153
    %260 = vmatpush1.msra.mxu0 %v152
    %261 = vmatprep.subr.mxu0 %v157
    %262 = vmatpush1.msra.mxu0 %v156
    %263 = vmatprep.subr.mxu0 %v161
    %264 = vmatpush1.msra.mxu0 %v160
    %265 = vmatprep.subr.mxu0 0.0
    %266 = vmatpush1.msra.mxu0 0.0
    %267 = vmatprep.subr.mxu0 0.0
    %268 = vmatpush1.msra.mxu0 0.0
    %269 = vmatprep.subr.mxu0 0.0
    %270 = vmatpush1.msra.mxu0 0.0
    %271 = vmatprep.subr.mxu0 0.0
    %272 = vmatpush1.msra.mxu0 0.0
    %273 = vmatprep.subr.mxu0 0.0
    %274 = vmatpush1.msra.mxu0 0.0
    %275 = vmatprep.subr.mxu0 0.0
    %276 = vmatpush1.msra.mxu0 0.0
    %277 = vmatprep.subr.mxu0 0.0
    %278 = vmatpush1.msra.mxu0 0.0
    %279 = vmatprep.subr.mxu0 0.0
    %280 = vmatpush1.msra.mxu0 0.0
    %281 = vmatprep.subr.mxu0 0.0
    %282 = vmatpush1.msra.mxu0 0.0
    %283 = vmatprep.subr.mxu0 0.0
    %284 = vmatpush1.msra.mxu0 0.0
    %285 = vmatprep.subr.mxu0 0.0
    %286 = vmatpush1.msra.mxu0 0.0
    %287 = vmatprep.subr.mxu0 0.0
    %288 = vmatpush1.msra.mxu0 0.0
    %289 = vmatprep.subr.mxu0 0.0
    %290 = vmatpush1.msra.mxu0 0.0
    %291 = vmatprep.subr.mxu0 0.0
    %292 = vmatpush1.msra.mxu0 0.0
    %293 = vmatprep.subr.mxu0 0.0
    %294 = vmatpush1.msra.mxu0 0.0
    %295 = vmatprep.subr.mxu0 0.0
    %296 = vmatpush1.msra.mxu0 0.0
    %297 = vmatprep.mubr.f32.mxu0 0.0
    %298 = vmatmul.mubr.f32.gmra.mrb[0].mxu0 %v40
    %v299 = vpop.f32.mrb[0].mxu0
    %v300 = vadd.f32 %v96, %v299
    %v301 = vpop.f32.mrb[0].mxu0
    %v302 = vadd.f32 %v97, %v301
    %303 = vdwg.mxu0
    %v304 = vxor.u32 %v229, 2147483648
    %v305 = vmul.f32 %v304, 1.442695
    %v306 = vpow.pop %v305
    %v307 = vadd.f32 %v306, 1.0
    %v308 = vrcp.pop %v307
    %v309 = vmul.f32 1.0, %v308
    %v310 = vxor.u32 %v231, 2147483648
    %v311 = vmul.f32 %v310, 1.442695
    %v312 = vpow.pop %v311
    %v313 = vadd.f32 %v312, 1.0
    %v314 = vrcp.pop %v313
    %v315 = vmul.f32 1.0, %v314
    %v316 = vtanh.pop %v300
    %v317 = vxor.u32 %v302, 2147483648
    %v318 = vmul.f32 %v317, 1.442695
    %v319 = vpow.pop %v318
    %v320 = vadd.f32 %v319, 1.0
    %v321 = vrcp.pop %v320
    %v322 = vmul.f32 1.0, %v321
    %v323 = vmul.f32 %v315, %v41
    %v324 = vmul.f32 %v309, %v316
    %v325 = vadd.f32 %v323, %v324
    %v326 = vtanh.pop %v325
    %v327 = vmul.f32 %v322, %v326
    %s328 = scalar_lea.vmem %s0, 8
    %v329 = vld [vmem:[%s328] sm:$0xff]
    %331 = vset.pattern.permute.xlu0 0
    %332 = vperm.xlu0 %331, %v329
    %v333 = vpop.permute.xlu0 %332
    %v335 = vmul.f32 %v333, %v52
    %v336 = vmul.f32 %v333, %v56
    %v337 = vmul.f32 %v333, %v60
    %v338 = vmul.f32 %v333, %v64
    %v339 = vadd.f32 %v335, %v77
    %v340 = vadd.f32 %v336, %v81
    %v341 = vadd.f32 %v337, %v85
    %v342 = vadd.f32 %v338, %v89
    %343 = vmatprep.subr.mxu0 %v99
    %344 = vmatpush1.msra.mxu0 %v98
    %345 = vmatprep.subr.mxu0 %v103
    %346 = vmatpush1.msra.mxu0 %v102
    %347 = vmatprep.subr.mxu0 %v107
    %348 = vmatpush1.msra.mxu0 %v106
    %349 = vmatprep.subr.mxu0 %v111
    %350 = vmatpush1.msra.mxu0 %v110
    %351 = vmatprep.subr.mxu0 %v115
    %352 = vmatpush1.msra.mxu0 %v114
    %353 = vmatprep.subr.mxu0 %v119
    %354 = vmatpush1.msra.mxu0 %v118
    %355 = vmatprep.subr.mxu0 %v123
    %356 = vmatpush1.msra.mxu0 %v122
    %357 = vmatprep.subr.mxu0 %v127
    %358 = vmatpush1.msra.mxu0 %v126
    %359 = vmatprep.subr.mxu0 %v131
    %360 = vmatpush1.msra.mxu0 %v130
    %361 = vmatprep.subr.mxu0 %v135
    %362 = vmatpush1.msra.mxu0 %v134
    %363 = vmatprep.subr.mxu0 %v139
    %364 = vmatpush1.msra.mxu0 %v138
    %365 = vmatprep.subr.mxu0 %v143
    %366 = vmatpush1.msra.mxu0 %v142
    %367 = vmatprep.subr.mxu0 %v147
    %368 = vmatpush1.msra.mxu0 %v146
    %369 = vmatprep.subr.mxu0 %v151
    %370 = vmatpush1.msra.mxu0 %v150
    %371 = vmatprep.subr.mxu0 %v155
    %372 = vmatpush1.msra.mxu0 %v154
    %373 = vmatprep.subr.mxu0 %v159
    %374 = vmatpush1.msra.mxu0 %v158
    %375 = vmatprep.subr.mxu0 0.0
    %376 = vmatpush1.msra.mxu0 0.0
    %377 = vmatprep.subr.mxu0 0.0
    %378 = vmatpush1.msra.mxu0 0.0
    %379 = vmatprep.subr.mxu0 0.0
    %380 = vmatpush1.msra.mxu0 0.0
    %381 = vmatprep.subr.mxu0 0.0
    %382 = vmatpush1.msra.mxu0 0.0
    %383 = vmatprep.subr.mxu0 0.0
    %384 = vmatpush1.msra.mxu0 0.0
    %385 = vmatprep.subr.mxu0 0.0
    %386 = vmatpush1.msra.mxu0 0.0
    %387 = vmatprep.subr.mxu0 0.0
    %388 = vmatpush1.msra.mxu0 0.0
    %389 = vmatprep.subr.mxu0 0.0
    %390 = vmatpush1.msra.mxu0 0.0
    %391 = vmatprep.subr.mxu0 0.0
    %392 = vmatpush1.msra.mxu0 0.0
    %393 = vmatprep.subr.mxu0 0.0
    %394 = vmatpush1.msra.mxu0 0.0
    %395 = vmatprep.subr.mxu0 0.0
    %396 = vmatpush1.msra.mxu0 0.0
    %397 = vmatprep.subr.mxu0 0.0
    %398 = vmatpush1.msra.mxu0 0.0
    %399 = vmatprep.subr.mxu0 0.0
    %400 = vmatpush1.msra.mxu0 0.0
    %401 = vmatprep.subr.mxu0 0.0
    %402 = vmatpush1.msra.mxu0 0.0
    %403 = vmatprep.subr.mxu0 0.0
    %404 = vmatpush1.msra.mxu0 0.0
    %405 = vmatprep.subr.mxu0 0.0
    %406 = vmatpush1.msra.mxu0 0.0
    %407 = vmatprep.mubr.f32.mxu0 0.0
    %408 = vmatmul.mubr.f32.gmra.mrb[0].mxu0 %v327
    %v409 = vpop.f32.mrb[0].mxu0
    %v410 = vadd.f32 %v339, %v409
    %v411 = vpop.f32.mrb[0].mxu0
    %v412 = vadd.f32 %v340, %v411
    %413 = vdwg.mxu0
    %414 = vmatprep.subr.mxu0 %v101
    %415 = vmatpush1.msra.mxu0 %v100
    %416 = vmatprep.subr.mxu0 %v105
    %417 = vmatpush1.msra.mxu0 %v104
    %418 = vmatprep.subr.mxu0 %v109
    %419 = vmatpush1.msra.mxu0 %v108
    %420 = vmatprep.subr.mxu0 %v113
    %421 = vmatpush1.msra.mxu0 %v112
    %422 = vmatprep.subr.mxu0 %v117
    %423 = vmatpush1.msra.mxu0 %v116
    %424 = vmatprep.subr.mxu0 %v121
    %425 = vmatpush1.msra.mxu0 %v120
    %426 = vmatprep.subr.mxu0 %v125
    %427 = vmatpush1.msra.mxu0 %v124
    %428 = vmatprep.subr.mxu0 %v129
    %429 = vmatpush1.msra.mxu0 %v128
    %430 = vmatprep.subr.mxu0 %v133
    %431 = vmatpush1.msra.mxu0 %v132
    %432 = vmatprep.subr.mxu0 %v137
    %433 = vmatpush1.msra.mxu0 %v136
    %434 = vmatprep.subr.mxu0 %v141
    %435 = vmatpush1.msra.mxu0 %v140
    %436 = vmatprep.subr.mxu0 %v145
    %437 = vmatpush1.msra.mxu0 %v144
    %438 = vmatprep.subr.mxu0 %v149
    %439 = vmatpush1.msra.mxu0 %v148
    %440 = vmatprep.subr.mxu0 %v153
    %441 = vmatpush1.msra.mxu0 %v152
    %442 = vmatprep.subr.mxu0 %v157
    %443 = vmatpush1.msra.mxu0 %v156
    %444 = vmatprep.subr.mxu0 %v161
    %445 = vmatpush1.msra.mxu0 %v160
    %446 = vmatprep.subr.mxu0 0.0
    %447 = vmatpush1.msra.mxu0 0.0
    %448 = vmatprep.subr.mxu0 0.0
    %449 = vmatpush1.msra.mxu0 0.0
    %450 = vmatprep.subr.mxu0 0.0
    %451 = vmatpush1.msra.mxu0 0.0
    %452 = vmatprep.subr.mxu0 0.0
    %453 = vmatpush1.msra.mxu0 0.0
    %454 = vmatprep.subr.mxu0 0.0
    %455 = vmatpush1.msra.mxu0 0.0
    %456 = vmatprep.subr.mxu0 0.0
    %457 = vmatpush1.msra.mxu0 0.0
    %458 = vmatprep.subr.mxu0 0.0
    %459 = vmatpush1.msra.mxu0 0.0
    %460 = vmatprep.subr.mxu0 0.0
    %461 = vmatpush1.msra.mxu0 0.0
    %462 = vmatprep.subr.mxu0 0.0
    %463 = vmatpush1.msra.mxu0 0.0
    %464 = vmatprep.subr.mxu0 0.0
    %465 = vmatpush1.msra.mxu0 0.0
    %466 = vmatprep.subr.mxu0 0.0
    %467 = vmatpush1.msra.mxu0 0.0
    %468 = vmatprep.subr.mxu0 0.0
    %469 = vmatpush1.msra.mxu0 0.0
    %470 = vmatprep.subr.mxu0 0.0
    %471 = vmatpush1.msra.mxu0 0.0
    %472 = vmatprep.subr.mxu0 0.0
    %473 = vmatpush1.msra.mxu0 0.0
    %474 = vmatprep.subr.mxu0 0.0
    %475 = vmatpush1.msra.mxu0 0.0
    %476 = vmatprep.subr.mxu0 0.0
    %477 = vmatpush1.msra.mxu0 0.0
    %478 = vmatprep.mubr.f32.mxu0 0.0
    %479 = vmatmul.mubr.f32.gmra.mrb[0].mxu0 %v327
    %v480 = vpop.f32.mrb[0].mxu0
    %v481 = vadd.f32 %v341, %v480
    %v482 = vpop.f32.mrb[0].mxu0
    %v483 = vadd.f32 %v342, %v482
    %484 = vdwg.mxu0
    %v485 = vxor.u32 %v410, 2147483648
    %v486 = vmul.f32 %v485, 1.442695
    %v487 = vpow.pop %v486
    %v488 = vadd.f32 %v487, 1.0
    %v489 = vrcp.pop %v488
    %v490 = vmul.f32 1.0, %v489
    %v491 = vxor.u32 %v412, 2147483648
    %v492 = vmul.f32 %v491, 1.442695
    %v493 = vpow.pop %v492
    %v494 = vadd.f32 %v493, 1.0
    %v495 = vrcp.pop %v494
    %v496 = vmul.f32 1.0, %v495
    %v497 = vtanh.pop %v481
    %v498 = vxor.u32 %v483, 2147483648
    %v499 = vmul.f32 %v498, 1.442695
    %v500 = vpow.pop %v499
    %v501 = vadd.f32 %v500, 1.0
    %v502 = vrcp.pop %v501
    %v503 = vmul.f32 1.0, %v502
    %v504 = vmul.f32 %v496, %v325
    %v505 = vmul.f32 %v490, %v497
    %v506 = vadd.f32 %v504, %v505
    %v507 = vtanh.pop %v506
    %v508 = vmul.f32 %v503, %v507
    %s509 = scalar_lea.vmem %s0, 16
    %v510 = vld [vmem:[%s509] sm:$0xff]
    %512 = vset.pattern.permute.xlu0 0
    %513 = vperm.xlu0 %512, %v510
    %v514 = vpop.permute.xlu0 %513
    %v516 = vmul.f32 %v514, %v52
    %v517 = vmul.f32 %v514, %v56
    %v518 = vmul.f32 %v514, %v60
    %v519 = vmul.f32 %v514, %v64
    %v520 = vadd.f32 %v516, %v77
    %v521 = vadd.f32 %v517, %v81
    %v522 = vadd.f32 %v518, %v85
    %v523 = vadd.f32 %v519, %v89
    %524 = vmatprep.subr.mxu0 %v99
    %525 = vmatpush1.msra.mxu0 %v98
    %526 = vmatprep.subr.mxu0 %v103
    %527 = vmatpush1.msra.mxu0 %v102
    %528 = vmatprep.subr.mxu0 %v107
    %529 = vmatpush1.msra.mxu0 %v106
    %530 = vmatprep.subr.mxu0 %v111
    %531 = vmatpush1.msra.mxu0 %v110
    %532 = vmatprep.subr.mxu0 %v115
    %533 = vmatpush1.msra.mxu0 %v114
    %534 = vmatprep.subr.mxu0 %v119
    %535 = vmatpush1.msra.mxu0 %v118
    %536 = vmatprep.subr.mxu0 %v123
    %537 = vmatpush1.msra.mxu0 %v122
    %538 = vmatprep.subr.mxu0 %v127
    %539 = vmatpush1.msra.mxu0 %v126
    %540 = vmatprep.subr.mxu0 %v131
    %541 = vmatpush1.msra.mxu0 %v130
    %542 = vmatprep.subr.mxu0 %v135
    %543 = vmatpush1.msra.mxu0 %v134
    %544 = vmatprep.subr.mxu0 %v139
    %545 = vmatpush1.msra.mxu0 %v138
    %546 = vmatprep.subr.mxu0 %v143
    %547 = vmatpush1.msra.mxu0 %v142
    %548 = vmatprep.subr.mxu0 %v147
    %549 = vmatpush1.msra.mxu0 %v146
    %550 = vmatprep.subr.mxu0 %v151
    %551 = vmatpush1.msra.mxu0 %v150
    %552 = vmatprep.subr.mxu0 %v155
    %553 = vmatpush1.msra.mxu0 %v154
    %554 = vmatprep.subr.mxu0 %v159
    %555 = vmatpush1.msra.mxu0 %v158
    %556 = vmatprep.subr.mxu0 0.0
    %557 = vmatpush1.msra.mxu0 0.0
    %558 = vmatprep.subr.mxu0 0.0
    %559 = vmatpush1.msra.mxu0 0.0
    %560 = vmatprep.subr.mxu0 0.0
    %561 = vmatpush1.msra.mxu0 0.0
    %562 = vmatprep.subr.mxu0 0.0
    %563 = vmatpush1.msra.mxu0 0.0
    %564 = vmatprep.subr.mxu0 0.0
    %565 = vmatpush1.msra.mxu0 0.0
    %566 = vmatprep.subr.mxu0 0.0
    %567 = vmatpush1.msra.mxu0 0.0
    %568 = vmatprep.subr.mxu0 0.0
    %569 = vmatpush1.msra.mxu0 0.0
    %570 = vmatprep.subr.mxu0 0.0
    %571 = vmatpush1.msra.mxu0 0.0
    %572 = vmatprep.subr.mxu0 0.0
    %573 = vmatpush1.msra.mxu0 0.0
    %574 = vmatprep.subr.mxu0 0.0
    %575 = vmatpush1.msra.mxu0 0.0
    %576 = vmatprep.subr.mxu0 0.0
    %577 = vmatpush1.msra.mxu0 0.0
    %578 = vmatprep.subr.mxu0 0.0
    %579 = vmatpush1.msra.mxu0 0.0
    %580 = vmatprep.subr.mxu0 0.0
    %581 = vmatpush1.msra.mxu0 0.0
    %582 = vmatprep.subr.mxu0 0.0
    %583 = vmatpush1.msra.mxu0 0.0
    %584 = vmatprep.subr.mxu0 0.0
    %585 = vmatpush1.msra.mxu0 0.0
    %586 = vmatprep.subr.mxu0 0.0
    %587 = vmatpush1.msra.mxu0 0.0
    %588 = vmatprep.mubr.f32.mxu0 0.0
    %589 = vmatmul.mubr.f32.gmra.mrb[0].mxu0 %v508
    %v590 = vpop.f32.mrb[0].mxu0
    %v591 = vadd.f32 %v520, %v590
    %v592 = vpop.f32.mrb[0].mxu0
    %v593 = vadd.f32 %v521, %v592
    %594 = vdwg.mxu0
    %595 = vmatprep.subr.mxu0 %v101
    %596 = vmatpush1.msra.mxu0 %v100
    %597 = vmatprep.subr.mxu0 %v105
    %598 = vmatpush1.msra.mxu0 %v104
    %599 = vmatprep.subr.mxu0 %v109
    %600 = vmatpush1.msra.mxu0 %v108
    %601 = vmatprep.subr.mxu0 %v113
    %602 = vmatpush1.msra.mxu0 %v112
    %603 = vmatprep.subr.mxu0 %v117
    %604 = vmatpush1.msra.mxu0 %v116
    %605 = vmatprep.subr.mxu0 %v121
    %606 = vmatpush1.msra.mxu0 %v120
    %607 = vmatprep.subr.mxu0 %v125
    %608 = vmatpush1.msra.mxu0 %v124
    %609 = vmatprep.subr.mxu0 %v129
    %610 = vmatpush1.msra.mxu0 %v128
    %611 = vmatprep.subr.mxu0 %v133
    %612 = vmatpush1.msra.mxu0 %v132
    %613 = vmatprep.subr.mxu0 %v137
    %614 = vmatpush1.msra.mxu0 %v136
    %615 = vmatprep.subr.mxu0 %v141
    %616 = vmatpush1.msra.mxu0 %v140
    %617 = vmatprep.subr.mxu0 %v145
    %618 = vmatpush1.msra.mxu0 %v144
    %619 = vmatprep.subr.mxu0 %v149
    %620 = vmatpush1.msra.mxu0 %v148
    %621 = vmatprep.subr.mxu0 %v153
    %622 = vmatpush1.msra.mxu0 %v152
    %623 = vmatprep.subr.mxu0 %v157
    %624 = vmatpush1.msra.mxu0 %v156
    %625 = vmatprep.subr.mxu0 %v161
    %626 = vmatpush1.msra.mxu0 %v160
    %627 = vmatprep.subr.mxu0 0.0
    %628 = vmatpush1.msra.mxu0 0.0
    %629 = vmatprep.subr.mxu0 0.0
    %630 = vmatpush1.msra.mxu0 0.0
    %631 = vmatprep.subr.mxu0 0.0
    %632 = vmatpush1.msra.mxu0 0.0
    %633 = vmatprep.subr.mxu0 0.0
    %634 = vmatpush1.msra.mxu0 0.0
    %635 = vmatprep.subr.mxu0 0.0
    %636 = vmatpush1.msra.mxu0 0.0
    %637 = vmatprep.subr.mxu0 0.0
    %638 = vmatpush1.msra.mxu0 0.0
    %639 = vmatprep.subr.mxu0 0.0
    %640 = vmatpush1.msra.mxu0 0.0
    %641 = vmatprep.subr.mxu0 0.0
    %642 = vmatpush1.msra.mxu0 0.0
    %643 = vmatprep.subr.mxu0 0.0
    %644 = vmatpush1.msra.mxu0 0.0
    %645 = vmatprep.subr.mxu0 0.0
    %646 = vmatpush1.msra.mxu0 0.0
    %647 = vmatprep.subr.mxu0 0.0
    %648 = vmatpush1.msra.mxu0 0.0
    %649 = vmatprep.subr.mxu0 0.0
    %650 = vmatpush1.msra.mxu0 0.0
    %651 = vmatprep.subr.mxu0 0.0
    %652 = vmatpush1.msra.mxu0 0.0
    %653 = vmatprep.subr.mxu0 0.0
    %654 = vmatpush1.msra.mxu0 0.0
    %655 = vmatprep.subr.mxu0 0.0
    %656 = vmatpush1.msra.mxu0 0.0
    %657 = vmatprep.subr.mxu0 0.0
    %658 = vmatpush1.msra.mxu0 0.0
    %659 = vmatprep.mubr.f32.mxu0 0.0
    %660 = vmatmul.mubr.f32.gmra.mrb[0].mxu0 %v508
    %v661 = vpop.f32.mrb[0].mxu0
    %v662 = vadd.f32 %v522, %v661
    %v663 = vpop.f32.mrb[0].mxu0
    %v664 = vadd.f32 %v523, %v663
    %665 = vdwg.mxu0
    %v666 = vxor.u32 %v591, 2147483648
    %v667 = vmul.f32 %v666, 1.442695
    %v668 = vpow.pop %v667
    %v669 = vadd.f32 %v668, 1.0
    %v670 = vrcp.pop %v669
    %v671 = vmul.f32 1.0, %v670
    %v672 = vxor.u32 %v593, 2147483648
    %v673 = vmul.f32 %v672, 1.442695
    %v674 = vpow.pop %v673
    %v675 = vadd.f32 %v674, 1.0
    %v676 = vrcp.pop %v675
    %v677 = vmul.f32 1.0, %v676
    %v678 = vtanh.pop %v662
    %v679 = vxor.u32 %v664, 2147483648
    %v680 = vmul.f32 %v679, 1.442695
    %v681 = vpow.pop %v680
    %v682 = vadd.f32 %v681, 1.0
    %v683 = vrcp.pop %v682
    %v684 = vmul.f32 1.0, %v683
    %v685 = vmul.f32 %v677, %v506
    %v686 = vmul.f32 %v671, %v678
    %v687 = vadd.f32 %v685, %v686
    %v688 = vtanh.pop %v687
    %v689 = vmul.f32 %v684, %v688
    %s690 = scalar_lea.vmem %s0, 24
    %v691 = vld [vmem:[%s690] sm:$0xff]
    %693 = vset.pattern.permute.xlu0 0
    %694 = vperm.xlu0 %693, %v691
    %v695 = vpop.permute.xlu0 %694
    %v697 = vmul.f32 %v695, %v52
    %v698 = vmul.f32 %v695, %v56
    %v699 = vmul.f32 %v695, %v60
    %v700 = vmul.f32 %v695, %v64
    %v701 = vadd.f32 %v697, %v77
    %v702 = vadd.f32 %v698, %v81
    %v703 = vadd.f32 %v699, %v85
    %v704 = vadd.f32 %v700, %v89
    %705 = vmatprep.subr.mxu0 %v99
    %706 = vmatpush1.msra.mxu0 %v98
    %707 = vmatprep.subr.mxu0 %v103
    %708 = vmatpush1.msra.mxu0 %v102
    %709 = vmatprep.subr.mxu0 %v107
    %710 = vmatpush1.msra.mxu0 %v106
    %711 = vmatprep.subr.mxu0 %v111
    %712 = vmatpush1.msra.mxu0 %v110
    %713 = vmatprep.subr.mxu0 %v115
    %714 = vmatpush1.msra.mxu0 %v114
    %715 = vmatprep.subr.mxu0 %v119
    %716 = vmatpush1.msra.mxu0 %v118
    %717 = vmatprep.subr.mxu0 %v123
    %718 = vmatpush1.msra.mxu0 %v122
    %719 = vmatprep.subr.mxu0 %v127
    %720 = vmatpush1.msra.mxu0 %v126
    %721 = vmatprep.subr.mxu0 %v131
    %722 = vmatpush1.msra.mxu0 %v130
    %723 = vmatprep.subr.mxu0 %v135
    %724 = vmatpush1.msra.mxu0 %v134
    %725 = vmatprep.subr.mxu0 %v139
    %726 = vmatpush1.msra.mxu0 %v138
    %727 = vmatprep.subr.mxu0 %v143
    %728 = vmatpush1.msra.mxu0 %v142
    %729 = vmatprep.subr.mxu0 %v147
    %730 = vmatpush1.msra.mxu0 %v146
    %731 = vmatprep.subr.mxu0 %v151
    %732 = vmatpush1.msra.mxu0 %v150
    %733 = vmatprep.subr.mxu0 %v155
    %734 = vmatpush1.msra.mxu0 %v154
    %735 = vmatprep.subr.mxu0 %v159
    %736 = vmatpush1.msra.mxu0 %v158
    %737 = vmatprep.subr.mxu0 0.0
    %738 = vmatpush1.msra.mxu0 0.0
    %739 = vmatprep.subr.mxu0 0.0
    %740 = vmatpush1.msra.mxu0 0.0
    %741 = vmatprep.subr.mxu0 0.0
    %742 = vmatpush1.msra.mxu0 0.0
    %743 = vmatprep.subr.mxu0 0.0
    %744 = vmatpush1.msra.mxu0 0.0
    %745 = vmatprep.subr.mxu0 0.0
    %746 = vmatpush1.msra.mxu0 0.0
    %747 = vmatprep.subr.mxu0 0.0
    %748 = vmatpush1.msra.mxu0 0.0
    %749 = vmatprep.subr.mxu0 0.0
    %750 = vmatpush1.msra.mxu0 0.0
    %751 = vmatprep.subr.mxu0 0.0
    %752 = vmatpush1.msra.mxu0 0.0
    %753 = vmatprep.subr.mxu0 0.0
    %754 = vmatpush1.msra.mxu0 0.0
    %755 = vmatprep.subr.mxu0 0.0
    %756 = vmatpush1.msra.mxu0 0.0
    %757 = vmatprep.subr.mxu0 0.0
    %758 = vmatpush1.msra.mxu0 0.0
    %759 = vmatprep.subr.mxu0 0.0
    %760 = vmatpush1.msra.mxu0 0.0
    %761 = vmatprep.subr.mxu0 0.0
    %762 = vmatpush1.msra.mxu0 0.0
    %763 = vmatprep.subr.mxu0 0.0
    %764 = vmatpush1.msra.mxu0 0.0
    %765 = vmatprep.subr.mxu0 0.0
    %766 = vmatpush1.msra.mxu0 0.0
    %767 = vmatprep.subr.mxu0 0.0
    %768 = vmatpush1.msra.mxu0 0.0
    %769 = vmatprep.mubr.f32.mxu0 0.0
    %770 = vmatmul.mubr.f32.gmra.mrb[0].mxu0 %v689
    %v771 = vpop.f32.mrb[0].mxu0
    %v772 = vadd.f32 %v701, %v771
    %v773 = vpop.f32.mrb[0].mxu0
    %v774 = vadd.f32 %v702, %v773
    %775 = vdwg.mxu0
    %776 = vmatprep.subr.mxu0 %v101
    %777 = vmatpush1.msra.mxu0 %v100
    %778 = vmatprep.subr.mxu0 %v105
    %779 = vmatpush1.msra.mxu0 %v104
    %780 = vmatprep.subr.mxu0 %v109
    %781 = vmatpush1.msra.mxu0 %v108
    %782 = vmatprep.subr.mxu0 %v113
    %783 = vmatpush1.msra.mxu0 %v112
    %784 = vmatprep.subr.mxu0 %v117
    %785 = vmatpush1.msra.mxu0 %v116
    %786 = vmatprep.subr.mxu0 %v121
    %787 = vmatpush1.msra.mxu0 %v120
    %788 = vmatprep.subr.mxu0 %v125
    %789 = vmatpush1.msra.mxu0 %v124
    %790 = vmatprep.subr.mxu0 %v129
    %791 = vmatpush1.msra.mxu0 %v128
    %792 = vmatprep.subr.mxu0 %v133
    %793 = vmatpush1.msra.mxu0 %v132
    %794 = vmatprep.subr.mxu0 %v137
    %795 = vmatpush1.msra.mxu0 %v136
    %796 = vmatprep.subr.mxu0 %v141
    %797 = vmatpush1.msra.mxu0 %v140
    %798 = vmatprep.subr.mxu0 %v145
    %799 = vmatpush1.msra.mxu0 %v144
    %800 = vmatprep.subr.mxu0 %v149
    %801 = vmatpush1.msra.mxu0 %v148
    %802 = vmatprep.subr.mxu0 %v153
    %803 = vmatpush1.msra.mxu0 %v152
    %804 = vmatprep.subr.mxu0 %v157
    %805 = vmatpush1.msra.mxu0 %v156
    %806 = vmatprep.subr.mxu0 %v161
    %807 = vmatpush1.msra.mxu0 %v160
    %808 = vmatprep.subr.mxu0 0.0
    %809 = vmatpush1.msra.mxu0 0.0
    %810 = vmatprep.subr.mxu0 0.0
    %811 = vmatpush1.msra.mxu0 0.0
    %812 = vmatprep.subr.mxu0 0.0
    %813 = vmatpush1.msra.mxu0 0.0
    %814 = vmatprep.subr.mxu0 0.0
    %815 = vmatpush1.msra.mxu0 0.0
    %816 = vmatprep.subr.mxu0 0.0
    %817 = vmatpush1.msra.mxu0 0.0
    %818 = vmatprep.subr.mxu0 0.0
    %819 = vmatpush1.msra.mxu0 0.0
    %820 = vmatprep.subr.mxu0 0.0
    %821 = vmatpush1.msra.mxu0 0.0
    %822 = vmatprep.subr.mxu0 0.0
    %823 = vmatpush1.msra.mxu0 0.0
    %824 = vmatprep.subr.mxu0 0.0
    %825 = vmatpush1.msra.mxu0 0.0
    %826 = vmatprep.subr.mxu0 0.0
    %827 = vmatpush1.msra.mxu0 0.0
    %828 = vmatprep.subr.mxu0 0.0
    %829 = vmatpush1.msra.mxu0 0.0
    %830 = vmatprep.subr.mxu0 0.0
    %831 = vmatpush1.msra.mxu0 0.0
    %832 = vmatprep.subr.mxu0 0.0
    %833 = vmatpush1.msra.mxu0 0.0
    %834 = vmatprep.subr.mxu0 0.0
    %835 = vmatpush1.msra.mxu0 0.0
    %836 = vmatprep.subr.mxu0 0.0
    %837 = vmatpush1.msra.mxu0 0.0
    %838 = vmatprep.subr.mxu0 0.0
    %839 = vmatpush1.msra.mxu0 0.0
    %840 = vmatprep.mubr.f32.mxu0 0.0
    %841 = vmatmul.mubr.f32.gmra.mrb[0].mxu0 %v689
    %v842 = vpop.f32.mrb[0].mxu0
    %v843 = vadd.f32 %v703, %v842
    %v844 = vpop.f32.mrb[0].mxu0
    %v845 = vadd.f32 %v704, %v844
    %846 = vdwg.mxu0
    %v847 = vxor.u32 %v772, 2147483648
    %v848 = vmul.f32 %v847, 1.442695
    %v849 = vpow.pop %v848
    %v850 = vadd.f32 %v849, 1.0
    %v851 = vrcp.pop %v850
    %v852 = vmul.f32 1.0, %v851
    %v853 = vxor.u32 %v774, 2147483648
    %v854 = vmul.f32 %v853, 1.442695
    %v855 = vpow.pop %v854
    %v856 = vadd.f32 %v855, 1.0
    %v857 = vrcp.pop %v856
    %v858 = vmul.f32 1.0, %v857
    %v859 = vtanh.pop %v843
    %v860 = vxor.u32 %v845, 2147483648
    %v861 = vmul.f32 %v860, 1.442695
    %v862 = vpow.pop %v861
    %v863 = vadd.f32 %v862, 1.0
    %v864 = vrcp.pop %v863
    %v865 = vmul.f32 1.0, %v864
    %v866 = vmul.f32 %v858, %v687
    %v867 = vmul.f32 %v852, %v859
    %v868 = vadd.f32 %v866, %v867
    %v869 = vtanh.pop %v868
    %v870 = vmul.f32 %v865, %v869
    %s871 = scalar_lea.vmem %s0, 32
    %v872 = vld [vmem:[%s871] sm:$0xff]
    %874 = vset.pattern.permute.xlu0 0
    %875 = vperm.xlu0 %874, %v872
    %v876 = vpop.permute.xlu0 %875
    %v878 = vmul.f32 %v876, %v52
    %v879 = vmul.f32 %v876, %v56
    %v880 = vmul.f32 %v876, %v60
    %v881 = vmul.f32 %v876, %v64
    %v882 = vadd.f32 %v878, %v77
    %v883 = vadd.f32 %v879, %v81
    %v884 = vadd.f32 %v880, %v85
    %v885 = vadd.f32 %v881, %v89
    %886 = vmatprep.subr.mxu0 %v99
    %887 = vmatpush1.msra.mxu0 %v98
    %888 = vmatprep.subr.mxu0 %v103
    %889 = vmatpush1.msra.mxu0 %v102
    %890 = vmatprep.subr.mxu0 %v107
    %891 = vmatpush1.msra.mxu0 %v106
    %892 = vmatprep.subr.mxu0 %v111
    %893 = vmatpush1.msra.mxu0 %v110
    %894 = vmatprep.subr.mxu0 %v115
    %895 = vmatpush1.msra.mxu0 %v114
    %896 = vmatprep.subr.mxu0 %v119
    %897 = vmatpush1.msra.mxu0 %v118
    %898 = vmatprep.subr.mxu0 %v123
    %899 = vmatpush1.msra.mxu0 %v122
    %900 = vmatprep.subr.mxu0 %v127
    %901 = vmatpush1.msra.mxu0 %v126
    %902 = vmatprep.subr.mxu0 %v131
    %903 = vmatpush1.msra.mxu0 %v130
    %904 = vmatprep.subr.mxu0 %v135
    %905 = vmatpush1.msra.mxu0 %v134
    %906 = vmatprep.subr.mxu0 %v139
    %907 = vmatpush1.msra.mxu0 %v138
    %908 = vmatprep.subr.mxu0 %v143
    %909 = vmatpush1.msra.mxu0 %v142
    %910 = vmatprep.subr.mxu0 %v147
    %911 = vmatpush1.msra.mxu0 %v146
    %912 = vmatprep.subr.mxu0 %v151
    %913 = vmatpush1.msra.mxu0 %v150
    %914 = vmatprep.subr.mxu0 %v155
    %915 = vmatpush1.msra.mxu0 %v154
    %916 = vmatprep.subr.mxu0 %v159
    %917 = vmatpush1.msra.mxu0 %v158
    %918 = vmatprep.subr.mxu0 0.0
    %919 = vmatpush1.msra.mxu0 0.0
    %920 = vmatprep.subr.mxu0 0.0
    %921 = vmatpush1.msra.mxu0 0.0
    %922 = vmatprep.subr.mxu0 0.0
    %923 = vmatpush1.msra.mxu0 0.0
    %924 = vmatprep.subr.mxu0 0.0
    %925 = vmatpush1.msra.mxu0 0.0
    %926 = vmatprep.subr.mxu0 0.0
    %927 = vmatpush1.msra.mxu0 0.0
    %928 = vmatprep.subr.mxu0 0.0
    %929 = vmatpush1.msra.mxu0 0.0
    %930 = vmatprep.subr.mxu0 0.0
    %931 = vmatpush1.msra.mxu0 0.0
    %932 = vmatprep.subr.mxu0 0.0
    %933 = vmatpush1.msra.mxu0 0.0
    %934 = vmatprep.subr.mxu0 0.0
    %935 = vmatpush1.msra.mxu0 0.0
    %936 = vmatprep.subr.mxu0 0.0
    %937 = vmatpush1.msra.mxu0 0.0
    %938 = vmatprep.subr.mxu0 0.0
    %939 = vmatpush1.msra.mxu0 0.0
    %940 = vmatprep.subr.mxu0 0.0
    %941 = vmatpush1.msra.mxu0 0.0
    %942 = vmatprep.subr.mxu0 0.0
    %943 = vmatpush1.msra.mxu0 0.0
    %944 = vmatprep.subr.mxu0 0.0
    %945 = vmatpush1.msra.mxu0 0.0
    %946 = vmatprep.subr.mxu0 0.0
    %947 = vmatpush1.msra.mxu0 0.0
    %948 = vmatprep.subr.mxu0 0.0
    %949 = vmatpush1.msra.mxu0 0.0
    %950 = vmatprep.mubr.f32.mxu0 0.0
    %951 = vmatmul.mubr.f32.gmra.mrb[0].mxu0 %v870
    %v952 = vpop.f32.mrb[0].mxu0
    %v953 = vadd.f32 %v882, %v952
    %v954 = vpop.f32.mrb[0].mxu0
    %v955 = vadd.f32 %v883, %v954
    %956 = vdwg.mxu0
    %957 = vmatprep.subr.mxu0 %v101
    %958 = vmatpush1.msra.mxu0 %v100
    %959 = vmatprep.subr.mxu0 %v105
    %960 = vmatpush1.msra.mxu0 %v104
    %961 = vmatprep.subr.mxu0 %v109
    %962 = vmatpush1.msra.mxu0 %v108
    %963 = vmatprep.subr.mxu0 %v113
    %964 = vmatpush1.msra.mxu0 %v112
    %965 = vmatprep.subr.mxu0 %v117
    %966 = vmatpush1.msra.mxu0 %v116
    %967 = vmatprep.subr.mxu0 %v121
    %968 = vmatpush1.msra.mxu0 %v120
    %969 = vmatprep.subr.mxu0 %v125
    %970 = vmatpush1.msra.mxu0 %v124
    %971 = vmatprep.subr.mxu0 %v129
    %972 = vmatpush1.msra.mxu0 %v128
    %973 = vmatprep.subr.mxu0 %v133
    %974 = vmatpush1.msra.mxu0 %v132
    %975 = vmatprep.subr.mxu0 %v137
    %976 = vmatpush1.msra.mxu0 %v136
    %977 = vmatprep.subr.mxu0 %v141
    %978 = vmatpush1.msra.mxu0 %v140
    %979 = vmatprep.subr.mxu0 %v145
    %980 = vmatpush1.msra.mxu0 %v144
    %981 = vmatprep.subr.mxu0 %v149
    %982 = vmatpush1.msra.mxu0 %v148
    %983 = vmatprep.subr.mxu0 %v153
    %984 = vmatpush1.msra.mxu0 %v152
    %985 = vmatprep.subr.mxu0 %v157
    %986 = vmatpush1.msra.mxu0 %v156
    %987 = vmatprep.subr.mxu0 %v161
    %988 = vmatpush1.msra.mxu0 %v160
    %989 = vmatprep.subr.mxu0 0.0
    %990 = vmatpush1.msra.mxu0 0.0
    %991 = vmatprep.subr.mxu0 0.0
    %992 = vmatpush1.msra.mxu0 0.0
    %993 = vmatprep.subr.mxu0 0.0
    %994 = vmatpush1.msra.mxu0 0.0
    %995 = vmatprep.subr.mxu0 0.0
    %996 = vmatpush1.msra.mxu0 0.0
    %997 = vmatprep.subr.mxu0 0.0
    %998 = vmatpush1.msra.mxu0 0.0
    %999 = vmatprep.subr.mxu0 0.0
    %1000 = vmatpush1.msra.mxu0 0.0
    %1001 = vmatprep.subr.mxu0 0.0
    %1002 = vmatpush1.msra.mxu0 0.0
    %1003 = vmatprep.subr.mxu0 0.0
    %1004 = vmatpush1.msra.mxu0 0.0
    %1005 = vmatprep.subr.mxu0 0.0
    %1006 = vmatpush1.msra.mxu0 0.0
    %1007 = vmatprep.subr.mxu0 0.0
    %1008 = vmatpush1.msra.mxu0 0.0
    %1009 = vmatprep.subr.mxu0 0.0
    %1010 = vmatpush1.msra.mxu0 0.0
    %1011 = vmatprep.subr.mxu0 0.0
    %1012 = vmatpush1.msra.mxu0 0.0
    %1013 = vmatprep.subr.mxu0 0.0
    %1014 = vmatpush1.msra.mxu0 0.0
    %1015 = vmatprep.subr.mxu0 0.0
    %1016 = vmatpush1.msra.mxu0 0.0
    %1017 = vmatprep.subr.mxu0 0.0
    %1018 = vmatpush1.msra.mxu0 0.0
    %1019 = vmatprep.subr.mxu0 0.0
    %1020 = vmatpush1.msra.mxu0 0.0
    %1021 = vmatprep.mubr.f32.mxu0 0.0
    %1022 = vmatmul.mubr.f32.gmra.mrb[0].mxu0 %v870
    %v1023 = vpop.f32.mrb[0].mxu0
    %v1024 = vadd.f32 %v884, %v1023
    %v1025 = vpop.f32.mrb[0].mxu0
    %v1026 = vadd.f32 %v885, %v1025
    %1027 = vdwg.mxu0
    %v1028 = vxor.u32 %v953, 2147483648
    %v1029 = vmul.f32 %v1028, 1.442695
    %v1030 = vpow.pop %v1029
    %v1031 = vadd.f32 %v1030, 1.0
    %v1032 = vrcp.pop %v1031
    %v1033 = vmul.f32 1.0, %v1032
    %v1034 = vxor.u32 %v955, 2147483648
    %v1035 = vmul.f32 %v1034, 1.442695
    %v1036 = vpow.pop %v1035
    %v1037 = vadd.f32 %v1036, 1.0
    %v1038 = vrcp.pop %v1037
    %v1039 = vmul.f32 1.0, %v1038
    %v1040 = vtanh.pop %v1024
    %v1041 = vxor.u32 %v1026, 2147483648
    %v1042 = vmul.f32 %v1041, 1.442695
    %v1043 = vpow.pop %v1042
    %v1044 = vadd.f32 %v1043, 1.0
    %v1045 = vrcp.pop %v1044
    %v1046 = vmul.f32 1.0, %v1045
    %v1047 = vmul.f32 %v1039, %v868
    %v1048 = vmul.f32 %v1033, %v1040
    %v1049 = vadd.f32 %v1047, %v1048
    %v1050 = vtanh.pop %v1049
    %v1051 = vmul.f32 %v1046, %v1050
    %s1052 = scalar_lea.vmem %s0, 40
    %v1053 = vld [vmem:[%s1052] sm:$0xff]
    %1055 = vset.pattern.permute.xlu0 0
    %1056 = vperm.xlu0 %1055, %v1053
    %v1057 = vpop.permute.xlu0 %1056
    %v1059 = vmul.f32 %v1057, %v52
    %v1060 = vmul.f32 %v1057, %v56
    %v1061 = vmul.f32 %v1057, %v60
    %v1062 = vmul.f32 %v1057, %v64
    %v1063 = vadd.f32 %v1059, %v77
    %v1064 = vadd.f32 %v1060, %v81
    %v1065 = vadd.f32 %v1061, %v85
    %v1066 = vadd.f32 %v1062, %v89
    %1067 = vmatprep.subr.mxu0 %v99
    %1068 = vmatpush1.msra.mxu0 %v98
    %1069 = vmatprep.subr.mxu0 %v103
    %1070 = vmatpush1.msra.mxu0 %v102
    %1071 = vmatprep.subr.mxu0 %v107
    %1072 = vmatpush1.msra.mxu0 %v106
    %1073 = vmatprep.subr.mxu0 %v111
    %1074 = vmatpush1.msra.mxu0 %v110
    %1075 = vmatprep.subr.mxu0 %v115
    %1076 = vmatpush1.msra.mxu0 %v114
    %1077 = vmatprep.subr.mxu0 %v119
    %1078 = vmatpush1.msra.mxu0 %v118
    %1079 = vmatprep.subr.mxu0 %v123
    %1080 = vmatpush1.msra.mxu0 %v122
    %1081 = vmatprep.subr.mxu0 %v127
    %1082 = vmatpush1.msra.mxu0 %v126
    %1083 = vmatprep.subr.mxu0 %v131
    %1084 = vmatpush1.msra.mxu0 %v130
    %1085 = vmatprep.subr.mxu0 %v135
    %1086 = vmatpush1.msra.mxu0 %v134
    %1087 = vmatprep.subr.mxu0 %v139
    %1088 = vmatpush1.msra.mxu0 %v138
    %1089 = vmatprep.subr.mxu0 %v143
    %1090 = vmatpush1.msra.mxu0 %v142
    %1091 = vmatprep.subr.mxu0 %v147
    %1092 = vmatpush1.msra.mxu0 %v146
    %1093 = vmatprep.subr.mxu0 %v151
    %1094 = vmatpush1.msra.mxu0 %v150
    %1095 = vmatprep.subr.mxu0 %v155
    %1096 = vmatpush1.msra.mxu0 %v154
    %1097 = vmatprep.subr.mxu0 %v159
    %1098 = vmatpush1.msra.mxu0 %v158
    %1099 = vmatprep.subr.mxu0 0.0
    %1100 = vmatpush1.msra.mxu0 0.0
    %1101 = vmatprep.subr.mxu0 0.0
    %1102 = vmatpush1.msra.mxu0 0.0
    %1103 = vmatprep.subr.mxu0 0.0
    %1104 = vmatpush1.msra.mxu0 0.0
    %1105 = vmatprep.subr.mxu0 0.0
    %1106 = vmatpush1.msra.mxu0 0.0
    %1107 = vmatprep.subr.mxu0 0.0
    %1108 = vmatpush1.msra.mxu0 0.0
    %1109 = vmatprep.subr.mxu0 0.0
    %1110 = vmatpush1.msra.mxu0 0.0
    %1111 = vmatprep.subr.mxu0 0.0
    %1112 = vmatpush1.msra.mxu0 0.0
    %1113 = vmatprep.subr.mxu0 0.0
    %1114 = vmatpush1.msra.mxu0 0.0
    %1115 = vmatprep.subr.mxu0 0.0
    %1116 = vmatpush1.msra.mxu0 0.0
    %1117 = vmatprep.subr.mxu0 0.0
    %1118 = vmatpush1.msra.mxu0 0.0
    %1119 = vmatprep.subr.mxu0 0.0
    %1120 = vmatpush1.msra.mxu0 0.0
    %1121 = vmatprep.subr.mxu0 0.0
    %1122 = vmatpush1.msra.mxu0 0.0
    %1123 = vmatprep.subr.mxu0 0.0
    %1124 = vmatpush1.msra.mxu0 0.0
    %1125 = vmatprep.subr.mxu0 0.0
    %1126 = vmatpush1.msra.mxu0 0.0
    %1127 = vmatprep.subr.mxu0 0.0
    %1128 = vmatpush1.msra.mxu0 0.0
    %1129 = vmatprep.subr.mxu0 0.0
    %1130 = vmatpush1.msra.mxu0 0.0
    %1131 = vmatprep.mubr.f32.mxu0 0.0
    %1132 = vmatmul.mubr.f32.gmra.mrb[0].mxu0 %v1051
    %v1133 = vpop.f32.mrb[0].mxu0
    %v1134 = vadd.f32 %v1063, %v1133
    %v1135 = vpop.f32.mrb[0].mxu0
    %v1136 = vadd.f32 %v1064, %v1135
    %1137 = vdwg.mxu0
    %1138 = vmatprep.subr.mxu0 %v101
    %1139 = vmatpush1.msra.mxu0 %v100
    %1140 = vmatprep.subr.mxu0 %v105
    %1141 = vmatpush1.msra.mxu0 %v104
    %1142 = vmatprep.subr.mxu0 %v109
    %1143 = vmatpush1.msra.mxu0 %v108
    %1144 = vmatprep.subr.mxu0 %v113
    %1145 = vmatpush1.msra.mxu0 %v112
    %1146 = vmatprep.subr.mxu0 %v117
    %1147 = vmatpush1.msra.mxu0 %v116
    %1148 = vmatprep.subr.mxu0 %v121
    %1149 = vmatpush1.msra.mxu0 %v120
    %1150 = vmatprep.subr.mxu0 %v125
    %1151 = vmatpush1.msra.mxu0 %v124
    %1152 = vmatprep.subr.mxu0 %v129
    %1153 = vmatpush1.msra.mxu0 %v128
    %1154 = vmatprep.subr.mxu0 %v133
    %1155 = vmatpush1.msra.mxu0 %v132
    %1156 = vmatprep.subr.mxu0 %v137
    %1157 = vmatpush1.msra.mxu0 %v136
    %1158 = vmatprep.subr.mxu0 %v141
    %1159 = vmatpush1.msra.mxu0 %v140
    %1160 = vmatprep.subr.mxu0 %v145
    %1161 = vmatpush1.msra.mxu0 %v144
    %1162 = vmatprep.subr.mxu0 %v149
    %1163 = vmatpush1.msra.mxu0 %v148
    %1164 = vmatprep.subr.mxu0 %v153
    %1165 = vmatpush1.msra.mxu0 %v152
    %1166 = vmatprep.subr.mxu0 %v157
    %1167 = vmatpush1.msra.mxu0 %v156
    %1168 = vmatprep.subr.mxu0 %v161
    %1169 = vmatpush1.msra.mxu0 %v160
    %1170 = vmatprep.subr.mxu0 0.0
    %1171 = vmatpush1.msra.mxu0 0.0
    %1172 = vmatprep.subr.mxu0 0.0
    %1173 = vmatpush1.msra.mxu0 0.0
    %1174 = vmatprep.subr.mxu0 0.0
    %1175 = vmatpush1.msra.mxu0 0.0
    %1176 = vmatprep.subr.mxu0 0.0
    %1177 = vmatpush1.msra.mxu0 0.0
    %1178 = vmatprep.subr.mxu0 0.0
    %1179 = vmatpush1.msra.mxu0 0.0
    %1180 = vmatprep.subr.mxu0 0.0
    %1181 = vmatpush1.msra.mxu0 0.0
    %1182 = vmatprep.subr.mxu0 0.0
    %1183 = vmatpush1.msra.mxu0 0.0
    %1184 = vmatprep.subr.mxu0 0.0
    %1185 = vmatpush1.msra.mxu0 0.0
    %1186 = vmatprep.subr.mxu0 0.0
    %1187 = vmatpush1.msra.mxu0 0.0
    %1188 = vmatprep.subr.mxu0 0.0
    %1189 = vmatpush1.msra.mxu0 0.0
    %1190 = vmatprep.subr.mxu0 0.0
    %1191 = vmatpush1.msra.mxu0 0.0
    %1192 = vmatprep.subr.mxu0 0.0
    %1193 = vmatpush1.msra.mxu0 0.0
    %1194 = vmatprep.subr.mxu0 0.0
    %1195 = vmatpush1.msra.mxu0 0.0
    %1196 = vmatprep.subr.mxu0 0.0
    %1197 = vmatpush1.msra.mxu0 0.0
    %1198 = vmatprep.subr.mxu0 0.0
    %1199 = vmatpush1.msra.mxu0 0.0
    %1200 = vmatprep.subr.mxu0 0.0
    %1201 = vmatpush1.msra.mxu0 0.0
    %1202 = vmatprep.mubr.f32.mxu0 0.0
    %1203 = vmatmul.mubr.f32.gmra.mrb[0].mxu0 %v1051
    %v1204 = vpop.f32.mrb[0].mxu0
    %v1205 = vadd.f32 %v1065, %v1204
    %v1206 = vpop.f32.mrb[0].mxu0
    %v1207 = vadd.f32 %v1066, %v1206
    %1208 = vdwg.mxu0
    %v1209 = vxor.u32 %v1134, 2147483648
    %v1210 = vmul.f32 %v1209, 1.442695
    %v1211 = vpow.pop %v1210
    %v1212 = vadd.f32 %v1211, 1.0
    %v1213 = vrcp.pop %v1212
    %v1214 = vmul.f32 1.0, %v1213
    %v1215 = vxor.u32 %v1136, 2147483648
    %v1216 = vmul.f32 %v1215, 1.442695
    %v1217 = vpow.pop %v1216
    %v1218 = vadd.f32 %v1217, 1.0
    %v1219 = vrcp.pop %v1218
    %v1220 = vmul.f32 1.0, %v1219
    %v1221 = vtanh.pop %v1205
    %v1222 = vxor.u32 %v1207, 2147483648
    %v1223 = vmul.f32 %v1222, 1.442695
    %v1224 = vpow.pop %v1223
    %v1225 = vadd.f32 %v1224, 1.0
    %v1226 = vrcp.pop %v1225
    %v1227 = vmul.f32 1.0, %v1226
    %v1228 = vmul.f32 %v1220, %v1049
    %v1229 = vmul.f32 %v1214, %v1221
    %v1230 = vadd.f32 %v1228, %v1229
    %v1231 = vtanh.pop %v1230
    %v1232 = vmul.f32 %v1227, %v1231
    %s1233 = scalar_lea.vmem %s0, 48
    %v1234 = vld [vmem:[%s1233] sm:$0xff]
    %1236 = vset.pattern.permute.xlu0 0
    %1237 = vperm.xlu0 %1236, %v1234
    %v1238 = vpop.permute.xlu0 %1237
    %v1240 = vmul.f32 %v1238, %v52
    %v1241 = vmul.f32 %v1238, %v56
    %v1242 = vmul.f32 %v1238, %v60
    %v1243 = vmul.f32 %v1238, %v64
    %v1244 = vadd.f32 %v1240, %v77
    %v1245 = vadd.f32 %v1241, %v81
    %v1246 = vadd.f32 %v1242, %v85
    %v1247 = vadd.f32 %v1243, %v89
    %1248 = vmatprep.subr.mxu0 %v99
    %1249 = vmatpush1.msra.mxu0 %v98
    %1250 = vmatprep.subr.mxu0 %v103
    %1251 = vmatpush1.msra.mxu0 %v102
    %1252 = vmatprep.subr.mxu0 %v107
    %1253 = vmatpush1.msra.mxu0 %v106
    %1254 = vmatprep.subr.mxu0 %v111
    %1255 = vmatpush1.msra.mxu0 %v110
    %1256 = vmatprep.subr.mxu0 %v115
    %1257 = vmatpush1.msra.mxu0 %v114
    %1258 = vmatprep.subr.mxu0 %v119
    %1259 = vmatpush1.msra.mxu0 %v118
    %1260 = vmatprep.subr.mxu0 %v123
    %1261 = vmatpush1.msra.mxu0 %v122
    %1262 = vmatprep.subr.mxu0 %v127
    %1263 = vmatpush1.msra.mxu0 %v126
    %1264 = vmatprep.subr.mxu0 %v131
    %1265 = vmatpush1.msra.mxu0 %v130
    %1266 = vmatprep.subr.mxu0 %v135
    %1267 = vmatpush1.msra.mxu0 %v134
    %1268 = vmatprep.subr.mxu0 %v139
    %1269 = vmatpush1.msra.mxu0 %v138
    %1270 = vmatprep.subr.mxu0 %v143
    %1271 = vmatpush1.msra.mxu0 %v142
    %1272 = vmatprep.subr.mxu0 %v147
    %1273 = vmatpush1.msra.mxu0 %v146
    %1274 = vmatprep.subr.mxu0 %v151
    %1275 = vmatpush1.msra.mxu0 %v150
    %1276 = vmatprep.subr.mxu0 %v155
    %1277 = vmatpush1.msra.mxu0 %v154
    %1278 = vmatprep.subr.mxu0 %v159
    %1279 = vmatpush1.msra.mxu0 %v158
    %1280 = vmatprep.subr.mxu0 0.0
    %1281 = vmatpush1.msra.mxu0 0.0
    %1282 = vmatprep.subr.mxu0 0.0
    %1283 = vmatpush1.msra.mxu0 0.0
    %1284 = vmatprep.subr.mxu0 0.0
    %1285 = vmatpush1.msra.mxu0 0.0
    %1286 = vmatprep.subr.mxu0 0.0
    %1287 = vmatpush1.msra.mxu0 0.0
    %1288 = vmatprep.subr.mxu0 0.0
    %1289 = vmatpush1.msra.mxu0 0.0
    %1290 = vmatprep.subr.mxu0 0.0
    %1291 = vmatpush1.msra.mxu0 0.0
    %1292 = vmatprep.subr.mxu0 0.0
    %1293 = vmatpush1.msra.mxu0 0.0
    %1294 = vmatprep.subr.mxu0 0.0
    %1295 = vmatpush1.msra.mxu0 0.0
    %1296 = vmatprep.subr.mxu0 0.0
    %1297 = vmatpush1.msra.mxu0 0.0
    %1298 = vmatprep.subr.mxu0 0.0
    %1299 = vmatpush1.msra.mxu0 0.0
    %1300 = vmatprep.subr.mxu0 0.0
    %1301 = vmatpush1.msra.mxu0 0.0
    %1302 = vmatprep.subr.mxu0 0.0
    %1303 = vmatpush1.msra.mxu0 0.0
    %1304 = vmatprep.subr.mxu0 0.0
    %1305 = vmatpush1.msra.mxu0 0.0
    %1306 = vmatprep.subr.mxu0 0.0
    %1307 = vmatpush1.msra.mxu0 0.0
    %1308 = vmatprep.subr.mxu0 0.0
    %1309 = vmatpush1.msra.mxu0 0.0
    %1310 = vmatprep.subr.mxu0 0.0
    %1311 = vmatpush1.msra.mxu0 0.0
    %1312 = vmatprep.mubr.f32.mxu0 0.0
    %1313 = vmatmul.mubr.f32.gmra.mrb[0].mxu0 %v1232
    %v1314 = vpop.f32.mrb[0].mxu0
    %v1315 = vadd.f32 %v1244, %v1314
    %v1316 = vpop.f32.mrb[0].mxu0
    %v1317 = vadd.f32 %v1245, %v1316
    %1318 = vdwg.mxu0
    %1319 = vmatprep.subr.mxu0 %v101
    %1320 = vmatpush1.msra.mxu0 %v100
    %1321 = vmatprep.subr.mxu0 %v105
    %1322 = vmatpush1.msra.mxu0 %v104
    %1323 = vmatprep.subr.mxu0 %v109
    %1324 = vmatpush1.msra.mxu0 %v108
    %1325 = vmatprep.subr.mxu0 %v113
    %1326 = vmatpush1.msra.mxu0 %v112
    %1327 = vmatprep.subr.mxu0 %v117
    %1328 = vmatpush1.msra.mxu0 %v116
    %1329 = vmatprep.subr.mxu0 %v121
    %1330 = vmatpush1.msra.mxu0 %v120
    %1331 = vmatprep.subr.mxu0 %v125
    %1332 = vmatpush1.msra.mxu0 %v124
    %1333 = vmatprep.subr.mxu0 %v129
    %1334 = vmatpush1.msra.mxu0 %v128
    %1335 = vmatprep.subr.mxu0 %v133
    %1336 = vmatpush1.msra.mxu0 %v132
    %1337 = vmatprep.subr.mxu0 %v137
    %1338 = vmatpush1.msra.mxu0 %v136
    %1339 = vmatprep.subr.mxu0 %v141
    %1340 = vmatpush1.msra.mxu0 %v140
    %1341 = vmatprep.subr.mxu0 %v145
    %1342 = vmatpush1.msra.mxu0 %v144
    %1343 = vmatprep.subr.mxu0 %v149
    %1344 = vmatpush1.msra.mxu0 %v148
    %1345 = vmatprep.subr.mxu0 %v153
    %1346 = vmatpush1.msra.mxu0 %v152
    %1347 = vmatprep.subr.mxu0 %v157
    %1348 = vmatpush1.msra.mxu0 %v156
    %1349 = vmatprep.subr.mxu0 %v161
    %1350 = vmatpush1.msra.mxu0 %v160
    %1351 = vmatprep.subr.mxu0 0.0
    %1352 = vmatpush1.msra.mxu0 0.0
    %1353 = vmatprep.subr.mxu0 0.0
    %1354 = vmatpush1.msra.mxu0 0.0
    %1355 = vmatprep.subr.mxu0 0.0
    %1356 = vmatpush1.msra.mxu0 0.0
    %1357 = vmatprep.subr.mxu0 0.0
    %1358 = vmatpush1.msra.mxu0 0.0
    %1359 = vmatprep.subr.mxu0 0.0
    %1360 = vmatpush1.msra.mxu0 0.0
    %1361 = vmatprep.subr.mxu0 0.0
    %1362 = vmatpush1.msra.mxu0 0.0
    %1363 = vmatprep.subr.mxu0 0.0
    %1364 = vmatpush1.msra.mxu0 0.0
    %1365 = vmatprep.subr.mxu0 0.0
    %1366 = vmatpush1.msra.mxu0 0.0
    %1367 = vmatprep.subr.mxu0 0.0
    %1368 = vmatpush1.msra.mxu0 0.0
    %1369 = vmatprep.subr.mxu0 0.0
    %1370 = vmatpush1.msra.mxu0 0.0
    %1371 = vmatprep.subr.mxu0 0.0
    %1372 = vmatpush1.msra.mxu0 0.0
    %1373 = vmatprep.subr.mxu0 0.0
    %1374 = vmatpush1.msra.mxu0 0.0
    %1375 = vmatprep.subr.mxu0 0.0
    %1376 = vmatpush1.msra.mxu0 0.0
    %1377 = vmatprep.subr.mxu0 0.0
    %1378 = vmatpush1.msra.mxu0 0.0
    %1379 = vmatprep.subr.mxu0 0.0
    %1380 = vmatpush1.msra.mxu0 0.0
    %1381 = vmatprep.subr.mxu0 0.0
    %1382 = vmatpush1.msra.mxu0 0.0
    %1383 = vmatprep.mubr.f32.mxu0 0.0
    %1384 = vmatmul.mubr.f32.gmra.mrb[0].mxu0 %v1232
    %v1385 = vpop.f32.mrb[0].mxu0
    %v1386 = vadd.f32 %v1246, %v1385
    %v1387 = vpop.f32.mrb[0].mxu0
    %v1388 = vadd.f32 %v1247, %v1387
    %1389 = vdwg.mxu0
    %v1390 = vxor.u32 %v1315, 2147483648
    %v1391 = vmul.f32 %v1390, 1.442695
    %v1392 = vpow.pop %v1391
    %v1393 = vadd.f32 %v1392, 1.0
    %v1394 = vrcp.pop %v1393
    %v1395 = vmul.f32 1.0, %v1394
    %v1396 = vxor.u32 %v1317, 2147483648
    %v1397 = vmul.f32 %v1396, 1.442695
    %v1398 = vpow.pop %v1397
    %v1399 = vadd.f32 %v1398, 1.0
    %v1400 = vrcp.pop %v1399
    %v1401 = vmul.f32 1.0, %v1400
    %v1402 = vtanh.pop %v1386
    %v1403 = vxor.u32 %v1388, 2147483648
    %v1404 = vmul.f32 %v1403, 1.442695
    %v1405 = vpow.pop %v1404
    %v1406 = vadd.f32 %v1405, 1.0
    %v1407 = vrcp.pop %v1406
    %v1408 = vmul.f32 1.0, %v1407
    %v1409 = vmul.f32 %v1401, %v1230
    %v1410 = vmul.f32 %v1395, %v1402
    %v1411 = vadd.f32 %v1409, %v1410
    %v1412 = vtanh.pop %v1411
    %v1413 = vmul.f32 %v1408, %v1412
    %s1414 = scalar_lea.vmem %s0, 56
    %v1415 = vld [vmem:[%s1414] sm:$0xff]
    %1417 = vset.pattern.permute.xlu0 0
    %1418 = vperm.xlu0 %1417, %v1415
    %v1419 = vpop.permute.xlu0 %1418
    %v1421 = vmul.f32 %v1419, %v52
    %v1422 = vmul.f32 %v1419, %v56
    %v1423 = vmul.f32 %v1419, %v60
    %v1424 = vmul.f32 %v1419, %v64
    %v1425 = vadd.f32 %v1421, %v77
    %v1426 = vadd.f32 %v1422, %v81
    %v1427 = vadd.f32 %v1423, %v85
    %v1428 = vadd.f32 %v1424, %v89
    %1429 = vmatprep.subr.mxu0 %v99
    %1430 = vmatpush1.msra.mxu0 %v98
    %1431 = vmatprep.subr.mxu0 %v103
    %1432 = vmatpush1.msra.mxu0 %v102
    %1433 = vmatprep.subr.mxu0 %v107
    %1434 = vmatpush1.msra.mxu0 %v106
    %1435 = vmatprep.subr.mxu0 %v111
    %1436 = vmatpush1.msra.mxu0 %v110
    %1437 = vmatprep.subr.mxu0 %v115
    %1438 = vmatpush1.msra.mxu0 %v114
    %1439 = vmatprep.subr.mxu0 %v119
    %1440 = vmatpush1.msra.mxu0 %v118
    %1441 = vmatprep.subr.mxu0 %v123
    %1442 = vmatpush1.msra.mxu0 %v122
    %1443 = vmatprep.subr.mxu0 %v127
    %1444 = vmatpush1.msra.mxu0 %v126
    %1445 = vmatprep.subr.mxu0 %v131
    %1446 = vmatpush1.msra.mxu0 %v130
    %1447 = vmatprep.subr.mxu0 %v135
    %1448 = vmatpush1.msra.mxu0 %v134
    %1449 = vmatprep.subr.mxu0 %v139
    %1450 = vmatpush1.msra.mxu0 %v138
    %1451 = vmatprep.subr.mxu0 %v143
    %1452 = vmatpush1.msra.mxu0 %v142
    %1453 = vmatprep.subr.mxu0 %v147
    %1454 = vmatpush1.msra.mxu0 %v146
    %1455 = vmatprep.subr.mxu0 %v151
    %1456 = vmatpush1.msra.mxu0 %v150
    %1457 = vmatprep.subr.mxu0 %v155
    %1458 = vmatpush1.msra.mxu0 %v154
    %1459 = vmatprep.subr.mxu0 %v159
    %1460 = vmatpush1.msra.mxu0 %v158
    %1461 = vmatprep.subr.mxu0 0.0
    %1462 = vmatpush1.msra.mxu0 0.0
    %1463 = vmatprep.subr.mxu0 0.0
    %1464 = vmatpush1.msra.mxu0 0.0
    %1465 = vmatprep.subr.mxu0 0.0
    %1466 = vmatpush1.msra.mxu0 0.0
    %1467 = vmatprep.subr.mxu0 0.0
    %1468 = vmatpush1.msra.mxu0 0.0
    %1469 = vmatprep.subr.mxu0 0.0
    %1470 = vmatpush1.msra.mxu0 0.0
    %1471 = vmatprep.subr.mxu0 0.0
    %1472 = vmatpush1.msra.mxu0 0.0
    %1473 = vmatprep.subr.mxu0 0.0
    %1474 = vmatpush1.msra.mxu0 0.0
    %1475 = vmatprep.subr.mxu0 0.0
    %1476 = vmatpush1.msra.mxu0 0.0
    %1477 = vmatprep.subr.mxu0 0.0
    %1478 = vmatpush1.msra.mxu0 0.0
    %1479 = vmatprep.subr.mxu0 0.0
    %1480 = vmatpush1.msra.mxu0 0.0
    %1481 = vmatprep.subr.mxu0 0.0
    %1482 = vmatpush1.msra.mxu0 0.0
    %1483 = vmatprep.subr.mxu0 0.0
    %1484 = vmatpush1.msra.mxu0 0.0
    %1485 = vmatprep.subr.mxu0 0.0
    %1486 = vmatpush1.msra.mxu0 0.0
    %1487 = vmatprep.subr.mxu0 0.0
    %1488 = vmatpush1.msra.mxu0 0.0
    %1489 = vmatprep.subr.mxu0 0.0
    %1490 = vmatpush1.msra.mxu0 0.0
    %1491 = vmatprep.subr.mxu0 0.0
    %1492 = vmatpush1.msra.mxu0 0.0
    %1493 = vmatprep.mubr.f32.mxu0 0.0
    %1494 = vmatmul.mubr.f32.gmra.mrb[0].mxu0 %v1413
    %v1495 = vpop.f32.mrb[0].mxu0
    %v1496 = vadd.f32 %v1425, %v1495
    %v1497 = vpop.f32.mrb[0].mxu0
    %v1498 = vadd.f32 %v1426, %v1497
    %1499 = vdwg.mxu0
    %1500 = vmatprep.subr.mxu0 %v101
    %1501 = vmatpush1.msra.mxu0 %v100
    %1502 = vmatprep.subr.mxu0 %v105
    %1503 = vmatpush1.msra.mxu0 %v104
    %1504 = vmatprep.subr.mxu0 %v109
    %1505 = vmatpush1.msra.mxu0 %v108
    %1506 = vmatprep.subr.mxu0 %v113
    %1507 = vmatpush1.msra.mxu0 %v112
    %1508 = vmatprep.subr.mxu0 %v117
    %1509 = vmatpush1.msra.mxu0 %v116
    %1510 = vmatprep.subr.mxu0 %v121
    %1511 = vmatpush1.msra.mxu0 %v120
    %1512 = vmatprep.subr.mxu0 %v125
    %1513 = vmatpush1.msra.mxu0 %v124
    %1514 = vmatprep.subr.mxu0 %v129
    %1515 = vmatpush1.msra.mxu0 %v128
    %1516 = vmatprep.subr.mxu0 %v133
    %1517 = vmatpush1.msra.mxu0 %v132
    %1518 = vmatprep.subr.mxu0 %v137
    %1519 = vmatpush1.msra.mxu0 %v136
    %1520 = vmatprep.subr.mxu0 %v141
    %1521 = vmatpush1.msra.mxu0 %v140
    %1522 = vmatprep.subr.mxu0 %v145
    %1523 = vmatpush1.msra.mxu0 %v144
    %1524 = vmatprep.subr.mxu0 %v149
    %1525 = vmatpush1.msra.mxu0 %v148
    %1526 = vmatprep.subr.mxu0 %v153
    %1527 = vmatpush1.msra.mxu0 %v152
    %1528 = vmatprep.subr.mxu0 %v157
    %1529 = vmatpush1.msra.mxu0 %v156
    %1530 = vmatprep.subr.mxu0 %v161
    %1531 = vmatpush1.msra.mxu0 %v160
    %1532 = vmatprep.subr.mxu0 0.0
    %1533 = vmatpush1.msra.mxu0 0.0
    %1534 = vmatprep.subr.mxu0 0.0
    %1535 = vmatpush1.msra.mxu0 0.0
    %1536 = vmatprep.subr.mxu0 0.0
    %1537 = vmatpush1.msra.mxu0 0.0
    %1538 = vmatprep.subr.mxu0 0.0
    %1539 = vmatpush1.msra.mxu0 0.0
    %1540 = vmatprep.subr.mxu0 0.0
    %1541 = vmatpush1.msra.mxu0 0.0
    %1542 = vmatprep.subr.mxu0 0.0
    %1543 = vmatpush1.msra.mxu0 0.0
    %1544 = vmatprep.subr.mxu0 0.0
    %1545 = vmatpush1.msra.mxu0 0.0
    %1546 = vmatprep.subr.mxu0 0.0
    %1547 = vmatpush1.msra.mxu0 0.0
    %1548 = vmatprep.subr.mxu0 0.0
    %1549 = vmatpush1.msra.mxu0 0.0
    %1550 = vmatprep.subr.mxu0 0.0
    %1551 = vmatpush1.msra.mxu0 0.0
    %1552 = vmatprep.subr.mxu0 0.0
    %1553 = vmatpush1.msra.mxu0 0.0
    %1554 = vmatprep.subr.mxu0 0.0
    %1555 = vmatpush1.msra.mxu0 0.0
    %1556 = vmatprep.subr.mxu0 0.0
    %1557 = vmatpush1.msra.mxu0 0.0
    %1558 = vmatprep.subr.mxu0 0.0
    %1559 = vmatpush1.msra.mxu0 0.0
    %1560 = vmatprep.subr.mxu0 0.0
    %1561 = vmatpush1.msra.mxu0 0.0
    %1562 = vmatprep.subr.mxu0 0.0
    %1563 = vmatpush1.msra.mxu0 0.0
    %1564 = vmatprep.mubr.f32.mxu0 0.0
    %1565 = vmatmul.mubr.f32.gmra.mrb[0].mxu0 %v1413
    %v1566 = vpop.f32.mrb[0].mxu0
    %v1567 = vadd.f32 %v1427, %v1566
    %v1568 = vpop.f32.mrb[0].mxu0
    %v1569 = vadd.f32 %v1428, %v1568
    %1570 = vdwg.mxu0
    %v1571 = vxor.u32 %v1496, 2147483648
    %v1572 = vmul.f32 %v1571, 1.442695
    %v1573 = vpow.pop %v1572
    %v1574 = vadd.f32 %v1573, 1.0
    %v1575 = vrcp.pop %v1574
    %v1576 = vmul.f32 1.0, %v1575
    %v1577 = vxor.u32 %v1498, 2147483648
    %v1578 = vmul.f32 %v1577, 1.442695
    %v1579 = vpow.pop %v1578
    %v1580 = vadd.f32 %v1579, 1.0
    %v1581 = vrcp.pop %v1580
    %v1582 = vmul.f32 1.0, %v1581
    %v1583 = vtanh.pop %v1567
    %v1584 = vxor.u32 %v1569, 2147483648
    %v1585 = vmul.f32 %v1584, 1.442695
    %v1586 = vpow.pop %v1585
    %v1587 = vadd.f32 %v1586, 1.0
    %v1588 = vrcp.pop %v1587
    %v1589 = vmul.f32 1.0, %v1588
    %v1590 = vmul.f32 %v1582, %v1411
    %v1591 = vmul.f32 %v1576, %v1583
    %v1592 = vadd.f32 %v1590, %v1591
    %v1593 = vtanh.pop %v1592
    %v1594 = vmul.f32 %v1589, %v1593
    %s1595 = scalar_lea.vmem %s0, 64
    %v1596 = vld [vmem:[%s1595] sm:$0xff]
    %1598 = vset.pattern.permute.xlu0 0
    %1599 = vperm.xlu0 %1598, %v1596
    %v1600 = vpop.permute.xlu0 %1599
    %v1602 = vmul.f32 %v1600, %v52
    %v1603 = vmul.f32 %v1600, %v56
    %v1604 = vmul.f32 %v1600, %v60
    %v1605 = vmul.f32 %v1600, %v64
    %v1606 = vadd.f32 %v1602, %v77
    %v1607 = vadd.f32 %v1603, %v81
    %v1608 = vadd.f32 %v1604, %v85
    %v1609 = vadd.f32 %v1605, %v89
    %1610 = vmatprep.subr.mxu0 %v99
    %1611 = vmatpush1.msra.mxu0 %v98
    %1612 = vmatprep.subr.mxu0 %v103
    %1613 = vmatpush1.msra.mxu0 %v102
    %1614 = vmatprep.subr.mxu0 %v107
    %1615 = vmatpush1.msra.mxu0 %v106
    %1616 = vmatprep.subr.mxu0 %v111
    %1617 = vmatpush1.msra.mxu0 %v110
    %1618 = vmatprep.subr.mxu0 %v115
    %1619 = vmatpush1.msra.mxu0 %v114
    %1620 = vmatprep.subr.mxu0 %v119
    %1621 = vmatpush1.msra.mxu0 %v118
    %1622 = vmatprep.subr.mxu0 %v123
    %1623 = vmatpush1.msra.mxu0 %v122
    %1624 = vmatprep.subr.mxu0 %v127
    %1625 = vmatpush1.msra.mxu0 %v126
    %1626 = vmatprep.subr.mxu0 %v131
    %1627 = vmatpush1.msra.mxu0 %v130
    %1628 = vmatprep.subr.mxu0 %v135
    %1629 = vmatpush1.msra.mxu0 %v134
    %1630 = vmatprep.subr.mxu0 %v139
    %1631 = vmatpush1.msra.mxu0 %v138
    %1632 = vmatprep.subr.mxu0 %v143
    %1633 = vmatpush1.msra.mxu0 %v142
    %1634 = vmatprep.subr.mxu0 %v147
    %1635 = vmatpush1.msra.mxu0 %v146
    %1636 = vmatprep.subr.mxu0 %v151
    %1637 = vmatpush1.msra.mxu0 %v150
    %1638 = vmatprep.subr.mxu0 %v155
    %1639 = vmatpush1.msra.mxu0 %v154
    %1640 = vmatprep.subr.mxu0 %v159
    %1641 = vmatpush1.msra.mxu0 %v158
    %1642 = vmatprep.subr.mxu0 0.0
    %1643 = vmatpush1.msra.mxu0 0.0
    %1644 = vmatprep.subr.mxu0 0.0
    %1645 = vmatpush1.msra.mxu0 0.0
    %1646 = vmatprep.subr.mxu0 0.0
    %1647 = vmatpush1.msra.mxu0 0.0
    %1648 = vmatprep.subr.mxu0 0.0
    %1649 = vmatpush1.msra.mxu0 0.0
    %1650 = vmatprep.subr.mxu0 0.0
    %1651 = vmatpush1.msra.mxu0 0.0
    %1652 = vmatprep.subr.mxu0 0.0
    %1653 = vmatpush1.msra.mxu0 0.0
    %1654 = vmatprep.subr.mxu0 0.0
    %1655 = vmatpush1.msra.mxu0 0.0
    %1656 = vmatprep.subr.mxu0 0.0
    %1657 = vmatpush1.msra.mxu0 0.0
    %1658 = vmatprep.subr.mxu0 0.0
    %1659 = vmatpush1.msra.mxu0 0.0
    %1660 = vmatprep.subr.mxu0 0.0
    %1661 = vmatpush1.msra.mxu0 0.0
    %1662 = vmatprep.subr.mxu0 0.0
    %1663 = vmatpush1.msra.mxu0 0.0
    %1664 = vmatprep.subr.mxu0 0.0
    %1665 = vmatpush1.msra.mxu0 0.0
    %1666 = vmatprep.subr.mxu0 0.0
    %1667 = vmatpush1.msra.mxu0 0.0
    %1668 = vmatprep.subr.mxu0 0.0
    %1669 = vmatpush1.msra.mxu0 0.0
    %1670 = vmatprep.subr.mxu0 0.0
    %1671 = vmatpush1.msra.mxu0 0.0
    %1672 = vmatprep.subr.mxu0 0.0
    %1673 = vmatpush1.msra.mxu0 0.0
    %1674 = vmatprep.mubr.f32.mxu0 0.0
    %1675 = vmatmul.mubr.f32.gmra.mrb[0].mxu0 %v1594
    %v1676 = vpop.f32.mrb[0].mxu0
    %v1677 = vadd.f32 %v1606, %v1676
    %v1678 = vpop.f32.mrb[0].mxu0
    %v1679 = vadd.f32 %v1607, %v1678
    %1680 = vdwg.mxu0
    %1681 = vmatprep.subr.mxu0 %v101
    %1682 = vmatpush1.msra.mxu0 %v100
    %1683 = vmatprep.subr.mxu0 %v105
    %1684 = vmatpush1.msra.mxu0 %v104
    %1685 = vmatprep.subr.mxu0 %v109
    %1686 = vmatpush1.msra.mxu0 %v108
    %1687 = vmatprep.subr.mxu0 %v113
    %1688 = vmatpush1.msra.mxu0 %v112
    %1689 = vmatprep.subr.mxu0 %v117
    %1690 = vmatpush1.msra.mxu0 %v116
    %1691 = vmatprep.subr.mxu0 %v121
    %1692 = vmatpush1.msra.mxu0 %v120
    %1693 = vmatprep.subr.mxu0 %v125
    %1694 = vmatpush1.msra.mxu0 %v124
    %1695 = vmatprep.subr.mxu0 %v129
    %1696 = vmatpush1.msra.mxu0 %v128
    %1697 = vmatprep.subr.mxu0 %v133
    %1698 = vmatpush1.msra.mxu0 %v132
    %1699 = vmatprep.subr.mxu0 %v137
    %1700 = vmatpush1.msra.mxu0 %v136
    %1701 = vmatprep.subr.mxu0 %v141
    %1702 = vmatpush1.msra.mxu0 %v140
    %1703 = vmatprep.subr.mxu0 %v145
    %1704 = vmatpush1.msra.mxu0 %v144
    %1705 = vmatprep.subr.mxu0 %v149
    %1706 = vmatpush1.msra.mxu0 %v148
    %1707 = vmatprep.subr.mxu0 %v153
    %1708 = vmatpush1.msra.mxu0 %v152
    %1709 = vmatprep.subr.mxu0 %v157
    %1710 = vmatpush1.msra.mxu0 %v156
    %1711 = vmatprep.subr.mxu0 %v161
    %1712 = vmatpush1.msra.mxu0 %v160
    %1713 = vmatprep.subr.mxu0 0.0
    %1714 = vmatpush1.msra.mxu0 0.0
    %1715 = vmatprep.subr.mxu0 0.0
    %1716 = vmatpush1.msra.mxu0 0.0
    %1717 = vmatprep.subr.mxu0 0.0
    %1718 = vmatpush1.msra.mxu0 0.0
    %1719 = vmatprep.subr.mxu0 0.0
    %1720 = vmatpush1.msra.mxu0 0.0
    %1721 = vmatprep.subr.mxu0 0.0
    %1722 = vmatpush1.msra.mxu0 0.0
    %1723 = vmatprep.subr.mxu0 0.0
    %1724 = vmatpush1.msra.mxu0 0.0
    %1725 = vmatprep.subr.mxu0 0.0
    %1726 = vmatpush1.msra.mxu0 0.0
    %1727 = vmatprep.subr.mxu0 0.0
    %1728 = vmatpush1.msra.mxu0 0.0
    %1729 = vmatprep.subr.mxu0 0.0
    %1730 = vmatpush1.msra.mxu0 0.0
    %1731 = vmatprep.subr.mxu0 0.0
    %1732 = vmatpush1.msra.mxu0 0.0
    %1733 = vmatprep.subr.mxu0 0.0
    %1734 = vmatpush1.msra.mxu0 0.0
    %1735 = vmatprep.subr.mxu0 0.0
    %1736 = vmatpush1.msra.mxu0 0.0
    %1737 = vmatprep.subr.mxu0 0.0
    %1738 = vmatpush1.msra.mxu0 0.0
    %1739 = vmatprep.subr.mxu0 0.0
    %1740 = vmatpush1.msra.mxu0 0.0
    %1741 = vmatprep.subr.mxu0 0.0
    %1742 = vmatpush1.msra.mxu0 0.0
    %1743 = vmatprep.subr.mxu0 0.0
    %1744 = vmatpush1.msra.mxu0 0.0
    %1745 = vmatprep.mubr.f32.mxu0 0.0
    %1746 = vmatmul.mubr.f32.gmra.mrb[0].mxu0 %v1594
    %v1747 = vpop.f32.mrb[0].mxu0
    %v1748 = vadd.f32 %v1608, %v1747
    %v1749 = vpop.f32.mrb[0].mxu0
    %v1750 = vadd.f32 %v1609, %v1749
    %1751 = vdwg.mxu0
    %v1752 = vxor.u32 %v1677, 2147483648
    %v1753 = vmul.f32 %v1752, 1.442695
    %v1754 = vpow.pop %v1753
    %v1755 = vadd.f32 %v1754, 1.0
    %v1756 = vrcp.pop %v1755
    %v1757 = vmul.f32 1.0, %v1756
    %v1758 = vxor.u32 %v1679, 2147483648
    %v1759 = vmul.f32 %v1758, 1.442695
    %v1760 = vpow.pop %v1759
    %v1761 = vadd.f32 %v1760, 1.0
    %v1762 = vrcp.pop %v1761
    %v1763 = vmul.f32 1.0, %v1762
    %v1764 = vtanh.pop %v1748
    %v1765 = vxor.u32 %v1750, 2147483648
    %v1766 = vmul.f32 %v1765, 1.442695
    %v1767 = vpow.pop %v1766
    %v1768 = vadd.f32 %v1767, 1.0
    %v1769 = vrcp.pop %v1768
    %v1770 = vmul.f32 1.0, %v1769
    %v1771 = vmul.f32 %v1763, %v1592
    %v1772 = vmul.f32 %v1757, %v1764
    %v1773 = vadd.f32 %v1771, %v1772
    %v1774 = vtanh.pop %v1773
    %v1775 = vmul.f32 %v1770, %v1774
    %s1776 = scalar_lea.vmem %s0, 72
    %v1777 = vld [vmem:[%s1776] sm:$0xff]
    %1779 = vset.pattern.permute.xlu0 0
    %1780 = vperm.xlu0 %1779, %v1777
    %v1781 = vpop.permute.xlu0 %1780
    %v1783 = vmul.f32 %v1781, %v52
    %v1784 = vmul.f32 %v1781, %v56
    %v1785 = vmul.f32 %v1781, %v60
    %v1786 = vmul.f32 %v1781, %v64
    %v1787 = vadd.f32 %v1783, %v77
    %v1788 = vadd.f32 %v1784, %v81
    %v1789 = vadd.f32 %v1785, %v85
    %v1790 = vadd.f32 %v1786, %v89
    %1791 = vmatprep.subr.mxu0 %v99
    %1792 = vmatpush1.msra.mxu0 %v98
    %1793 = vmatprep.subr.mxu0 %v103
    %1794 = vmatpush1.msra.mxu0 %v102
    %1795 = vmatprep.subr.mxu0 %v107
    %1796 = vmatpush1.msra.mxu0 %v106
    %1797 = vmatprep.subr.mxu0 %v111
    %1798 = vmatpush1.msra.mxu0 %v110
    %1799 = vmatprep.subr.mxu0 %v115
    %1800 = vmatpush1.msra.mxu0 %v114
    %1801 = vmatprep.subr.mxu0 %v119
    %1802 = vmatpush1.msra.mxu0 %v118
    %1803 = vmatprep.subr.mxu0 %v123
    %1804 = vmatpush1.msra.mxu0 %v122
    %1805 = vmatprep.subr.mxu0 %v127
    %1806 = vmatpush1.msra.mxu0 %v126
    %1807 = vmatprep.subr.mxu0 %v131
    %1808 = vmatpush1.msra.mxu0 %v130
    %1809 = vmatprep.subr.mxu0 %v135
    %1810 = vmatpush1.msra.mxu0 %v134
    %1811 = vmatprep.subr.mxu0 %v139
    %1812 = vmatpush1.msra.mxu0 %v138
    %1813 = vmatprep.subr.mxu0 %v143
    %1814 = vmatpush1.msra.mxu0 %v142
    %1815 = vmatprep.subr.mxu0 %v147
    %1816 = vmatpush1.msra.mxu0 %v146
    %1817 = vmatprep.subr.mxu0 %v151
    %1818 = vmatpush1.msra.mxu0 %v150
    %1819 = vmatprep.subr.mxu0 %v155
    %1820 = vmatpush1.msra.mxu0 %v154
    %1821 = vmatprep.subr.mxu0 %v159
    %1822 = vmatpush1.msra.mxu0 %v158
    %1823 = vmatprep.subr.mxu0 0.0
    %1824 = vmatpush1.msra.mxu0 0.0
    %1825 = vmatprep.subr.mxu0 0.0
    %1826 = vmatpush1.msra.mxu0 0.0
    %1827 = vmatprep.subr.mxu0 0.0
    %1828 = vmatpush1.msra.mxu0 0.0
    %1829 = vmatprep.subr.mxu0 0.0
    %1830 = vmatpush1.msra.mxu0 0.0
    %1831 = vmatprep.subr.mxu0 0.0
    %1832 = vmatpush1.msra.mxu0 0.0
    %1833 = vmatprep.subr.mxu0 0.0
    %1834 = vmatpush1.msra.mxu0 0.0
    %1835 = vmatprep.subr.mxu0 0.0
    %1836 = vmatpush1.msra.mxu0 0.0
    %1837 = vmatprep.subr.mxu0 0.0
    %1838 = vmatpush1.msra.mxu0 0.0
    %1839 = vmatprep.subr.mxu0 0.0
    %1840 = vmatpush1.msra.mxu0 0.0
    %1841 = vmatprep.subr.mxu0 0.0
    %1842 = vmatpush1.msra.mxu0 0.0
    %1843 = vmatprep.subr.mxu0 0.0
    %1844 = vmatpush1.msra.mxu0 0.0
    %1845 = vmatprep.subr.mxu0 0.0
    %1846 = vmatpush1.msra.mxu0 0.0
    %1847 = vmatprep.subr.mxu0 0.0
    %1848 = vmatpush1.msra.mxu0 0.0
    %1849 = vmatprep.subr.mxu0 0.0
    %1850 = vmatpush1.msra.mxu0 0.0
    %1851 = vmatprep.subr.mxu0 0.0
    %1852 = vmatpush1.msra.mxu0 0.0
    %1853 = vmatprep.subr.mxu0 0.0
    %1854 = vmatpush1.msra.mxu0 0.0
    %1855 = vmatprep.mubr.f32.mxu0 0.0
    %1856 = vmatmul.mubr.f32.gmra.mrb[0].mxu0 %v1775
    %v1857 = vpop.f32.mrb[0].mxu0
    %v1858 = vadd.f32 %v1787, %v1857
    %v1859 = vpop.f32.mrb[0].mxu0
    %v1860 = vadd.f32 %v1788, %v1859
    %1861 = vdwg.mxu0
    %1862 = vmatprep.subr.mxu0 %v101
    %1863 = vmatpush1.msra.mxu0 %v100
    %1864 = vmatprep.subr.mxu0 %v105
    %1865 = vmatpush1.msra.mxu0 %v104
    %1866 = vmatprep.subr.mxu0 %v109
    %1867 = vmatpush1.msra.mxu0 %v108
    %1868 = vmatprep.subr.mxu0 %v113
    %1869 = vmatpush1.msra.mxu0 %v112
    %1870 = vmatprep.subr.mxu0 %v117
    %1871 = vmatpush1.msra.mxu0 %v116
    %1872 = vmatprep.subr.mxu0 %v121
    %1873 = vmatpush1.msra.mxu0 %v120
    %1874 = vmatprep.subr.mxu0 %v125
    %1875 = vmatpush1.msra.mxu0 %v124
    %1876 = vmatprep.subr.mxu0 %v129
    %1877 = vmatpush1.msra.mxu0 %v128
    %1878 = vmatprep.subr.mxu0 %v133
    %1879 = vmatpush1.msra.mxu0 %v132
    %1880 = vmatprep.subr.mxu0 %v137
    %1881 = vmatpush1.msra.mxu0 %v136
    %1882 = vmatprep.subr.mxu0 %v141
    %1883 = vmatpush1.msra.mxu0 %v140
    %1884 = vmatprep.subr.mxu0 %v145
    %1885 = vmatpush1.msra.mxu0 %v144
    %1886 = vmatprep.subr.mxu0 %v149
    %1887 = vmatpush1.msra.mxu0 %v148
    %1888 = vmatprep.subr.mxu0 %v153
    %1889 = vmatpush1.msra.mxu0 %v152
    %1890 = vmatprep.subr.mxu0 %v157
    %1891 = vmatpush1.msra.mxu0 %v156
    %1892 = vmatprep.subr.mxu0 %v161
    %1893 = vmatpush1.msra.mxu0 %v160
    %1894 = vmatprep.subr.mxu0 0.0
    %1895 = vmatpush1.msra.mxu0 0.0
    %1896 = vmatprep.subr.mxu0 0.0
    %1897 = vmatpush1.msra.mxu0 0.0
    %1898 = vmatprep.subr.mxu0 0.0
    %1899 = vmatpush1.msra.mxu0 0.0
    %1900 = vmatprep.subr.mxu0 0.0
    %1901 = vmatpush1.msra.mxu0 0.0
    %1902 = vmatprep.subr.mxu0 0.0
    %1903 = vmatpush1.msra.mxu0 0.0
    %1904 = vmatprep.subr.mxu0 0.0
    %1905 = vmatpush1.msra.mxu0 0.0
    %1906 = vmatprep.subr.mxu0 0.0
    %1907 = vmatpush1.msra.mxu0 0.0
    %1908 = vmatprep.subr.mxu0 0.0
    %1909 = vmatpush1.msra.mxu0 0.0
    %1910 = vmatprep.subr.mxu0 0.0
    %1911 = vmatpush1.msra.mxu0 0.0
    %1912 = vmatprep.subr.mxu0 0.0
    %1913 = vmatpush1.msra.mxu0 0.0
    %1914 = vmatprep.subr.mxu0 0.0
    %1915 = vmatpush1.msra.mxu0 0.0
    %1916 = vmatprep.subr.mxu0 0.0
    %1917 = vmatpush1.msra.mxu0 0.0
    %1918 = vmatprep.subr.mxu0 0.0
    %1919 = vmatpush1.msra.mxu0 0.0
    %1920 = vmatprep.subr.mxu0 0.0
    %1921 = vmatpush1.msra.mxu0 0.0
    %1922 = vmatprep.subr.mxu0 0.0
    %1923 = vmatpush1.msra.mxu0 0.0
    %1924 = vmatprep.subr.mxu0 0.0
    %1925 = vmatpush1.msra.mxu0 0.0
    %1926 = vmatprep.mubr.f32.mxu0 0.0
    %1927 = vmatmul.mubr.f32.gmra.mrb[0].mxu0 %v1775
    %v1928 = vpop.f32.mrb[0].mxu0
    %v1929 = vadd.f32 %v1789, %v1928
    %v1930 = vpop.f32.mrb[0].mxu0
    %v1931 = vadd.f32 %v1790, %v1930
    %1932 = vdwg.mxu0
    %v1933 = vxor.u32 %v1858, 2147483648
    %v1934 = vmul.f32 %v1933, 1.442695
    %v1935 = vpow.pop %v1934
    %v1936 = vadd.f32 %v1935, 1.0
    %v1937 = vrcp.pop %v1936
    %v1938 = vmul.f32 1.0, %v1937
    %v1939 = vxor.u32 %v1860, 2147483648
    %v1940 = vmul.f32 %v1939, 1.442695
    %v1941 = vpow.pop %v1940
    %v1942 = vadd.f32 %v1941, 1.0
    %v1943 = vrcp.pop %v1942
    %v1944 = vmul.f32 1.0, %v1943
    %v1945 = vtanh.pop %v1929
    %v1946 = vxor.u32 %v1931, 2147483648
    %v1947 = vmul.f32 %v1946, 1.442695
    %v1948 = vpow.pop %v1947
    %v1949 = vadd.f32 %v1948, 1.0
    %v1950 = vrcp.pop %v1949
    %v1951 = vmul.f32 1.0, %v1950
    %v1952 = vmul.f32 %v1944, %v1773
    %v1953 = vmul.f32 %v1938, %v1945
    %v1954 = vadd.f32 %v1952, %v1953
    %v1955 = vtanh.pop %v1954
    %v1956 = vmul.f32 %v1951, %v1955
    %s1957 = scalar_lea.vmem %s0, 80
    %v1958 = vld [vmem:[%s1957] sm:$0xff]
    %1960 = vset.pattern.permute.xlu0 0
    %1961 = vperm.xlu0 %1960, %v1958
    %v1962 = vpop.permute.xlu0 %1961
    %v1964 = vmul.f32 %v1962, %v52
    %v1965 = vmul.f32 %v1962, %v56
    %v1966 = vmul.f32 %v1962, %v60
    %v1967 = vmul.f32 %v1962, %v64
    %v1968 = vadd.f32 %v1964, %v77
    %v1969 = vadd.f32 %v1965, %v81
    %v1970 = vadd.f32 %v1966, %v85
    %v1971 = vadd.f32 %v1967, %v89
    %1972 = vmatprep.subr.mxu0 %v99
    %1973 = vmatpush1.msra.mxu0 %v98
    %1974 = vmatprep.subr.mxu0 %v103
    %1975 = vmatpush1.msra.mxu0 %v102
    %1976 = vmatprep.subr.mxu0 %v107
    %1977 = vmatpush1.msra.mxu0 %v106
    %1978 = vmatprep.subr.mxu0 %v111
    %1979 = vmatpush1.msra.mxu0 %v110
    %1980 = vmatprep.subr.mxu0 %v115
    %1981 = vmatpush1.msra.mxu0 %v114
    %1982 = vmatprep.subr.mxu0 %v119
    %1983 = vmatpush1.msra.mxu0 %v118
    %1984 = vmatprep.subr.mxu0 %v123
    %1985 = vmatpush1.msra.mxu0 %v122
    %1986 = vmatprep.subr.mxu0 %v127
    %1987 = vmatpush1.msra.mxu0 %v126
    %1988 = vmatprep.subr.mxu0 %v131
    %1989 = vmatpush1.msra.mxu0 %v130
    %1990 = vmatprep.subr.mxu0 %v135
    %1991 = vmatpush1.msra.mxu0 %v134
    %1992 = vmatprep.subr.mxu0 %v139
    %1993 = vmatpush1.msra.mxu0 %v138
    %1994 = vmatprep.subr.mxu0 %v143
    %1995 = vmatpush1.msra.mxu0 %v142
    %1996 = vmatprep.subr.mxu0 %v147
    %1997 = vmatpush1.msra.mxu0 %v146
    %1998 = vmatprep.subr.mxu0 %v151
    %1999 = vmatpush1.msra.mxu0 %v150
    %2000 = vmatprep.subr.mxu0 %v155
    %2001 = vmatpush1.msra.mxu0 %v154
    %2002 = vmatprep.subr.mxu0 %v159
    %2003 = vmatpush1.msra.mxu0 %v158
    %2004 = vmatprep.subr.mxu0 0.0
    %2005 = vmatpush1.msra.mxu0 0.0
    %2006 = vmatprep.subr.mxu0 0.0
    %2007 = vmatpush1.msra.mxu0 0.0
    %2008 = vmatprep.subr.mxu0 0.0
    %2009 = vmatpush1.msra.mxu0 0.0
    %2010 = vmatprep.subr.mxu0 0.0
    %2011 = vmatpush1.msra.mxu0 0.0
    %2012 = vmatprep.subr.mxu0 0.0
    %2013 = vmatpush1.msra.mxu0 0.0
    %2014 = vmatprep.subr.mxu0 0.0
    %2015 = vmatpush1.msra.mxu0 0.0
    %2016 = vmatprep.subr.mxu0 0.0
    %2017 = vmatpush1.msra.mxu0 0.0
    %2018 = vmatprep.subr.mxu0 0.0
    %2019 = vmatpush1.msra.mxu0 0.0
    %2020 = vmatprep.subr.mxu0 0.0
    %2021 = vmatpush1.msra.mxu0 0.0
    %2022 = vmatprep.subr.mxu0 0.0
    %2023 = vmatpush1.msra.mxu0 0.0
    %2024 = vmatprep.subr.mxu0 0.0
    %2025 = vmatpush1.msra.mxu0 0.0
    %2026 = vmatprep.subr.mxu0 0.0
    %2027 = vmatpush1.msra.mxu0 0.0
    %2028 = vmatprep.subr.mxu0 0.0
    %2029 = vmatpush1.msra.mxu0 0.0
    %2030 = vmatprep.subr.mxu0 0.0
    %2031 = vmatpush1.msra.mxu0 0.0
    %2032 = vmatprep.subr.mxu0 0.0
    %2033 = vmatpush1.msra.mxu0 0.0
    %2034 = vmatprep.subr.mxu0 0.0
    %2035 = vmatpush1.msra.mxu0 0.0
    %2036 = vmatprep.mubr.f32.mxu0 0.0
    %2037 = vmatmul.mubr.f32.gmra.mrb[0].mxu0 %v1956
    %v2038 = vpop.f32.mrb[0].mxu0
    %v2039 = vadd.f32 %v1968, %v2038
    %v2040 = vpop.f32.mrb[0].mxu0
    %v2041 = vadd.f32 %v1969, %v2040
    %2042 = vdwg.mxu0
    %2043 = vmatprep.subr.mxu0 %v101
    %2044 = vmatpush1.msra.mxu0 %v100
    %2045 = vmatprep.subr.mxu0 %v105
    %2046 = vmatpush1.msra.mxu0 %v104
    %2047 = vmatprep.subr.mxu0 %v109
    %2048 = vmatpush1.msra.mxu0 %v108
    %2049 = vmatprep.subr.mxu0 %v113
    %2050 = vmatpush1.msra.mxu0 %v112
    %2051 = vmatprep.subr.mxu0 %v117
    %2052 = vmatpush1.msra.mxu0 %v116
    %2053 = vmatprep.subr.mxu0 %v121
    %2054 = vmatpush1.msra.mxu0 %v120
    %2055 = vmatprep.subr.mxu0 %v125
    %2056 = vmatpush1.msra.mxu0 %v124
    %2057 = vmatprep.subr.mxu0 %v129
    %2058 = vmatpush1.msra.mxu0 %v128
    %2059 = vmatprep.subr.mxu0 %v133
    %2060 = vmatpush1.msra.mxu0 %v132
    %2061 = vmatprep.subr.mxu0 %v137
    %2062 = vmatpush1.msra.mxu0 %v136
    %2063 = vmatprep.subr.mxu0 %v141
    %2064 = vmatpush1.msra.mxu0 %v140
    %2065 = vmatprep.subr.mxu0 %v145
    %2066 = vmatpush1.msra.mxu0 %v144
    %2067 = vmatprep.subr.mxu0 %v149
    %2068 = vmatpush1.msra.mxu0 %v148
    %2069 = vmatprep.subr.mxu0 %v153
    %2070 = vmatpush1.msra.mxu0 %v152
    %2071 = vmatprep.subr.mxu0 %v157
    %2072 = vmatpush1.msra.mxu0 %v156
    %2073 = vmatprep.subr.mxu0 %v161
    %2074 = vmatpush1.msra.mxu0 %v160
    %2075 = vmatprep.subr.mxu0 0.0
    %2076 = vmatpush1.msra.mxu0 0.0
    %2077 = vmatprep.subr.mxu0 0.0
    %2078 = vmatpush1.msra.mxu0 0.0
    %2079 = vmatprep.subr.mxu0 0.0
    %2080 = vmatpush1.msra.mxu0 0.0
    %2081 = vmatprep.subr.mxu0 0.0
    %2082 = vmatpush1.msra.mxu0 0.0
    %2083 = vmatprep.subr.mxu0 0.0
    %2084 = vmatpush1.msra.mxu0 0.0
    %2085 = vmatprep.subr.mxu0 0.0
    %2086 = vmatpush1.msra.mxu0 0.0
    %2087 = vmatprep.subr.mxu0 0.0
    %2088 = vmatpush1.msra.mxu0 0.0
    %2089 = vmatprep.subr.mxu0 0.0
    %2090 = vmatpush1.msra.mxu0 0.0
    %2091 = vmatprep.subr.mxu0 0.0
    %2092 = vmatpush1.msra.mxu0 0.0
    %2093 = vmatprep.subr.mxu0 0.0
    %2094 = vmatpush1.msra.mxu0 0.0
    %2095 = vmatprep.subr.mxu0 0.0
    %2096 = vmatpush1.msra.mxu0 0.0
    %2097 = vmatprep.subr.mxu0 0.0
    %2098 = vmatpush1.msra.mxu0 0.0
    %2099 = vmatprep.subr.mxu0 0.0
    %2100 = vmatpush1.msra.mxu0 0.0
    %2101 = vmatprep.subr.mxu0 0.0
    %2102 = vmatpush1.msra.mxu0 0.0
    %2103 = vmatprep.subr.mxu0 0.0
    %2104 = vmatpush1.msra.mxu0 0.0
    %2105 = vmatprep.subr.mxu0 0.0
    %2106 = vmatpush1.msra.mxu0 0.0
    %2107 = vmatprep.mubr.f32.mxu0 0.0
    %2108 = vmatmul.mubr.f32.gmra.mrb[0].mxu0 %v1956
    %v2109 = vpop.f32.mrb[0].mxu0
    %v2110 = vadd.f32 %v1970, %v2109
    %v2111 = vpop.f32.mrb[0].mxu0
    %v2112 = vadd.f32 %v1971, %v2111
    %2113 = vdwg.mxu0
    %v2114 = vxor.u32 %v2039, 2147483648
    %v2115 = vmul.f32 %v2114, 1.442695
    %v2116 = vpow.pop %v2115
    %v2117 = vadd.f32 %v2116, 1.0
    %v2118 = vrcp.pop %v2117
    %v2119 = vmul.f32 1.0, %v2118
    %v2120 = vxor.u32 %v2041, 2147483648
    %v2121 = vmul.f32 %v2120, 1.442695
    %v2122 = vpow.pop %v2121
    %v2123 = vadd.f32 %v2122, 1.0
    %v2124 = vrcp.pop %v2123
    %v2125 = vmul.f32 1.0, %v2124
    %v2126 = vtanh.pop %v2110
    %v2127 = vxor.u32 %v2112, 2147483648
    %v2128 = vmul.f32 %v2127, 1.442695
    %v2129 = vpow.pop %v2128
    %v2130 = vadd.f32 %v2129, 1.0
    %v2131 = vrcp.pop %v2130
    %v2132 = vmul.f32 1.0, %v2131
    %v2133 = vmul.f32 %v2125, %v1954
    %v2134 = vmul.f32 %v2119, %v2126
    %v2135 = vadd.f32 %v2133, %v2134
    %v2136 = vtanh.pop %v2135
    %v2137 = vmul.f32 %v2132, %v2136
    %s2138 = scalar_lea.vmem %s0, 88
    %v2139 = vld [vmem:[%s2138] sm:$0xff]
    %2141 = vset.pattern.permute.xlu0 0
    %2142 = vperm.xlu0 %2141, %v2139
    %v2143 = vpop.permute.xlu0 %2142
    %v2145 = vmul.f32 %v2143, %v52
    %v2146 = vmul.f32 %v2143, %v56
    %v2147 = vmul.f32 %v2143, %v60
    %v2148 = vmul.f32 %v2143, %v64
    %v2149 = vadd.f32 %v2145, %v77
    %v2150 = vadd.f32 %v2146, %v81
    %v2151 = vadd.f32 %v2147, %v85
    %v2152 = vadd.f32 %v2148, %v89
    %2153 = vmatprep.subr.mxu0 %v99
    %2154 = vmatpush1.msra.mxu0 %v98
    %2155 = vmatprep.subr.mxu0 %v103
    %2156 = vmatpush1.msra.mxu0 %v102
    %2157 = vmatprep.subr.mxu0 %v107
    %2158 = vmatpush1.msra.mxu0 %v106
    %2159 = vmatprep.subr.mxu0 %v111
    %2160 = vmatpush1.msra.mxu0 %v110
    %2161 = vmatprep.subr.mxu0 %v115
    %2162 = vmatpush1.msra.mxu0 %v114
    %2163 = vmatprep.subr.mxu0 %v119
    %2164 = vmatpush1.msra.mxu0 %v118
    %2165 = vmatprep.subr.mxu0 %v123
    %2166 = vmatpush1.msra.mxu0 %v122
    %2167 = vmatprep.subr.mxu0 %v127
    %2168 = vmatpush1.msra.mxu0 %v126
    %2169 = vmatprep.subr.mxu0 %v131
    %2170 = vmatpush1.msra.mxu0 %v130
    %2171 = vmatprep.subr.mxu0 %v135
    %2172 = vmatpush1.msra.mxu0 %v134
    %2173 = vmatprep.subr.mxu0 %v139
    %2174 = vmatpush1.msra.mxu0 %v138
    %2175 = vmatprep.subr.mxu0 %v143
    %2176 = vmatpush1.msra.mxu0 %v142
    %2177 = vmatprep.subr.mxu0 %v147
    %2178 = vmatpush1.msra.mxu0 %v146
    %2179 = vmatprep.subr.mxu0 %v151
    %2180 = vmatpush1.msra.mxu0 %v150
    %2181 = vmatprep.subr.mxu0 %v155
    %2182 = vmatpush1.msra.mxu0 %v154
    %2183 = vmatprep.subr.mxu0 %v159
    %2184 = vmatpush1.msra.mxu0 %v158
    %2185 = vmatprep.subr.mxu0 0.0
    %2186 = vmatpush1.msra.mxu0 0.0
    %2187 = vmatprep.subr.mxu0 0.0
    %2188 = vmatpush1.msra.mxu0 0.0
    %2189 = vmatprep.subr.mxu0 0.0
    %2190 = vmatpush1.msra.mxu0 0.0
    %2191 = vmatprep.subr.mxu0 0.0
    %2192 = vmatpush1.msra.mxu0 0.0
    %2193 = vmatprep.subr.mxu0 0.0
    %2194 = vmatpush1.msra.mxu0 0.0
    %2195 = vmatprep.subr.mxu0 0.0
    %2196 = vmatpush1.msra.mxu0 0.0
    %2197 = vmatprep.subr.mxu0 0.0
    %2198 = vmatpush1.msra.mxu0 0.0
    %2199 = vmatprep.subr.mxu0 0.0
    %2200 = vmatpush1.msra.mxu0 0.0
    %2201 = vmatprep.subr.mxu0 0.0
    %2202 = vmatpush1.msra.mxu0 0.0
    %2203 = vmatprep.subr.mxu0 0.0
    %2204 = vmatpush1.msra.mxu0 0.0
    %2205 = vmatprep.subr.mxu0 0.0
    %2206 = vmatpush1.msra.mxu0 0.0
    %2207 = vmatprep.subr.mxu0 0.0
    %2208 = vmatpush1.msra.mxu0 0.0
    %2209 = vmatprep.subr.mxu0 0.0
    %2210 = vmatpush1.msra.mxu0 0.0
    %2211 = vmatprep.subr.mxu0 0.0
    %2212 = vmatpush1.msra.mxu0 0.0
    %2213 = vmatprep.subr.mxu0 0.0
    %2214 = vmatpush1.msra.mxu0 0.0
    %2215 = vmatprep.subr.mxu0 0.0
    %2216 = vmatpush1.msra.mxu0 0.0
    %2217 = vmatprep.mubr.f32.mxu0 0.0
    %2218 = vmatmul.mubr.f32.gmra.mrb[0].mxu0 %v2137
    %v2219 = vpop.f32.mrb[0].mxu0
    %v2220 = vadd.f32 %v2149, %v2219
    %v2221 = vpop.f32.mrb[0].mxu0
    %v2222 = vadd.f32 %v2150, %v2221
    %2223 = vdwg.mxu0
    %2224 = vmatprep.subr.mxu0 %v101
    %2225 = vmatpush1.msra.mxu0 %v100
    %2226 = vmatprep.subr.mxu0 %v105
    %2227 = vmatpush1.msra.mxu0 %v104
    %2228 = vmatprep.subr.mxu0 %v109
    %2229 = vmatpush1.msra.mxu0 %v108
    %2230 = vmatprep.subr.mxu0 %v113
    %2231 = vmatpush1.msra.mxu0 %v112
    %2232 = vmatprep.subr.mxu0 %v117
    %2233 = vmatpush1.msra.mxu0 %v116
    %2234 = vmatprep.subr.mxu0 %v121
    %2235 = vmatpush1.msra.mxu0 %v120
    %2236 = vmatprep.subr.mxu0 %v125
    %2237 = vmatpush1.msra.mxu0 %v124
    %2238 = vmatprep.subr.mxu0 %v129
    %2239 = vmatpush1.msra.mxu0 %v128
    %2240 = vmatprep.subr.mxu0 %v133
    %2241 = vmatpush1.msra.mxu0 %v132
    %2242 = vmatprep.subr.mxu0 %v137
    %2243 = vmatpush1.msra.mxu0 %v136
    %2244 = vmatprep.subr.mxu0 %v141
    %2245 = vmatpush1.msra.mxu0 %v140
    %2246 = vmatprep.subr.mxu0 %v145
    %2247 = vmatpush1.msra.mxu0 %v144
    %2248 = vmatprep.subr.mxu0 %v149
    %2249 = vmatpush1.msra.mxu0 %v148
    %2250 = vmatprep.subr.mxu0 %v153
    %2251 = vmatpush1.msra.mxu0 %v152
    %2252 = vmatprep.subr.mxu0 %v157
    %2253 = vmatpush1.msra.mxu0 %v156
    %2254 = vmatprep.subr.mxu0 %v161
    %2255 = vmatpush1.msra.mxu0 %v160
    %2256 = vmatprep.subr.mxu0 0.0
    %2257 = vmatpush1.msra.mxu0 0.0
    %2258 = vmatprep.subr.mxu0 0.0
    %2259 = vmatpush1.msra.mxu0 0.0
    %2260 = vmatprep.subr.mxu0 0.0
    %2261 = vmatpush1.msra.mxu0 0.0
    %2262 = vmatprep.subr.mxu0 0.0
    %2263 = vmatpush1.msra.mxu0 0.0
    %2264 = vmatprep.subr.mxu0 0.0
    %2265 = vmatpush1.msra.mxu0 0.0
    %2266 = vmatprep.subr.mxu0 0.0
    %2267 = vmatpush1.msra.mxu0 0.0
    %2268 = vmatprep.subr.mxu0 0.0
    %2269 = vmatpush1.msra.mxu0 0.0
    %2270 = vmatprep.subr.mxu0 0.0
    %2271 = vmatpush1.msra.mxu0 0.0
    %2272 = vmatprep.subr.mxu0 0.0
    %2273 = vmatpush1.msra.mxu0 0.0
    %2274 = vmatprep.subr.mxu0 0.0
    %2275 = vmatpush1.msra.mxu0 0.0
    %2276 = vmatprep.subr.mxu0 0.0
    %2277 = vmatpush1.msra.mxu0 0.0
    %2278 = vmatprep.subr.mxu0 0.0
    %2279 = vmatpush1.msra.mxu0 0.0
    %2280 = vmatprep.subr.mxu0 0.0
    %2281 = vmatpush1.msra.mxu0 0.0
    %2282 = vmatprep.subr.mxu0 0.0
    %2283 = vmatpush1.msra.mxu0 0.0
    %2284 = vmatprep.subr.mxu0 0.0
    %2285 = vmatpush1.msra.mxu0 0.0
    %2286 = vmatprep.subr.mxu0 0.0
    %2287 = vmatpush1.msra.mxu0 0.0
    %2288 = vmatprep.mubr.f32.mxu0 0.0
    %2289 = vmatmul.mubr.f32.gmra.mrb[0].mxu0 %v2137
    %v2290 = vpop.f32.mrb[0].mxu0
    %v2291 = vadd.f32 %v2151, %v2290
    %v2292 = vpop.f32.mrb[0].mxu0
    %v2293 = vadd.f32 %v2152, %v2292
    %2294 = vdwg.mxu0
    %v2295 = vxor.u32 %v2220, 2147483648
    %v2296 = vmul.f32 %v2295, 1.442695
    %v2297 = vpow.pop %v2296
    %v2298 = vadd.f32 %v2297, 1.0
    %v2299 = vrcp.pop %v2298
    %v2300 = vmul.f32 1.0, %v2299
    %v2301 = vxor.u32 %v2222, 2147483648
    %v2302 = vmul.f32 %v2301, 1.442695
    %v2303 = vpow.pop %v2302
    %v2304 = vadd.f32 %v2303, 1.0
    %v2305 = vrcp.pop %v2304
    %v2306 = vmul.f32 1.0, %v2305
    %v2307 = vtanh.pop %v2291
    %v2308 = vxor.u32 %v2293, 2147483648
    %v2309 = vmul.f32 %v2308, 1.442695
    %v2310 = vpow.pop %v2309
    %v2311 = vadd.f32 %v2310, 1.0
    %v2312 = vrcp.pop %v2311
    %v2313 = vmul.f32 1.0, %v2312
    %v2314 = vmul.f32 %v2306, %v2135
    %v2315 = vmul.f32 %v2300, %v2307
    %v2316 = vadd.f32 %v2314, %v2315
    %v2317 = vtanh.pop %v2316
    %v2318 = vmul.f32 %v2313, %v2317
    %s2319 = scalar_lea.vmem %s0, 96
    %v2320 = vld [vmem:[%s2319] sm:$0xff]
    %2322 = vset.pattern.permute.xlu0 0
    %2323 = vperm.xlu0 %2322, %v2320
    %v2324 = vpop.permute.xlu0 %2323
    %v2326 = vmul.f32 %v2324, %v52
    %v2327 = vmul.f32 %v2324, %v56
    %v2328 = vmul.f32 %v2324, %v60
    %v2329 = vmul.f32 %v2324, %v64
    %v2330 = vadd.f32 %v2326, %v77
    %v2331 = vadd.f32 %v2327, %v81
    %v2332 = vadd.f32 %v2328, %v85
    %v2333 = vadd.f32 %v2329, %v89
    %2334 = vmatprep.subr.mxu0 %v99
    %2335 = vmatpush1.msra.mxu0 %v98
    %2336 = vmatprep.subr.mxu0 %v103
    %2337 = vmatpush1.msra.mxu0 %v102
    %2338 = vmatprep.subr.mxu0 %v107
    %2339 = vmatpush1.msra.mxu0 %v106
    %2340 = vmatprep.subr.mxu0 %v111
    %2341 = vmatpush1.msra.mxu0 %v110
    %2342 = vmatprep.subr.mxu0 %v115
    %2343 = vmatpush1.msra.mxu0 %v114
    %2344 = vmatprep.subr.mxu0 %v119
    %2345 = vmatpush1.msra.mxu0 %v118
    %2346 = vmatprep.subr.mxu0 %v123
    %2347 = vmatpush1.msra.mxu0 %v122
    %2348 = vmatprep.subr.mxu0 %v127
    %2349 = vmatpush1.msra.mxu0 %v126
    %2350 = vmatprep.subr.mxu0 %v131
    %2351 = vmatpush1.msra.mxu0 %v130
    %2352 = vmatprep.subr.mxu0 %v135
    %2353 = vmatpush1.msra.mxu0 %v134
    %2354 = vmatprep.subr.mxu0 %v139
    %2355 = vmatpush1.msra.mxu0 %v138
    %2356 = vmatprep.subr.mxu0 %v143
    %2357 = vmatpush1.msra.mxu0 %v142
    %2358 = vmatprep.subr.mxu0 %v147
    %2359 = vmatpush1.msra.mxu0 %v146
    %2360 = vmatprep.subr.mxu0 %v151
    %2361 = vmatpush1.msra.mxu0 %v150
    %2362 = vmatprep.subr.mxu0 %v155
    %2363 = vmatpush1.msra.mxu0 %v154
    %2364 = vmatprep.subr.mxu0 %v159
    %2365 = vmatpush1.msra.mxu0 %v158
    %2366 = vmatprep.subr.mxu0 0.0
    %2367 = vmatpush1.msra.mxu0 0.0
    %2368 = vmatprep.subr.mxu0 0.0
    %2369 = vmatpush1.msra.mxu0 0.0
    %2370 = vmatprep.subr.mxu0 0.0
    %2371 = vmatpush1.msra.mxu0 0.0
    %2372 = vmatprep.subr.mxu0 0.0
    %2373 = vmatpush1.msra.mxu0 0.0
    %2374 = vmatprep.subr.mxu0 0.0
    %2375 = vmatpush1.msra.mxu0 0.0
    %2376 = vmatprep.subr.mxu0 0.0
    %2377 = vmatpush1.msra.mxu0 0.0
    %2378 = vmatprep.subr.mxu0 0.0
    %2379 = vmatpush1.msra.mxu0 0.0
    %2380 = vmatprep.subr.mxu0 0.0
    %2381 = vmatpush1.msra.mxu0 0.0
    %2382 = vmatprep.subr.mxu0 0.0
    %2383 = vmatpush1.msra.mxu0 0.0
    %2384 = vmatprep.subr.mxu0 0.0
    %2385 = vmatpush1.msra.mxu0 0.0
    %2386 = vmatprep.subr.mxu0 0.0
    %2387 = vmatpush1.msra.mxu0 0.0
    %2388 = vmatprep.subr.mxu0 0.0
    %2389 = vmatpush1.msra.mxu0 0.0
    %2390 = vmatprep.subr.mxu0 0.0
    %2391 = vmatpush1.msra.mxu0 0.0
    %2392 = vmatprep.subr.mxu0 0.0
    %2393 = vmatpush1.msra.mxu0 0.0
    %2394 = vmatprep.subr.mxu0 0.0
    %2395 = vmatpush1.msra.mxu0 0.0
    %2396 = vmatprep.subr.mxu0 0.0
    %2397 = vmatpush1.msra.mxu0 0.0
    %2398 = vmatprep.mubr.f32.mxu0 0.0
    %2399 = vmatmul.mubr.f32.gmra.mrb[0].mxu0 %v2318
    %v2400 = vpop.f32.mrb[0].mxu0
    %v2401 = vadd.f32 %v2330, %v2400
    %v2402 = vpop.f32.mrb[0].mxu0
    %v2403 = vadd.f32 %v2331, %v2402
    %2404 = vdwg.mxu0
    %2405 = vmatprep.subr.mxu0 %v101
    %2406 = vmatpush1.msra.mxu0 %v100
    %2407 = vmatprep.subr.mxu0 %v105
    %2408 = vmatpush1.msra.mxu0 %v104
    %2409 = vmatprep.subr.mxu0 %v109
    %2410 = vmatpush1.msra.mxu0 %v108
    %2411 = vmatprep.subr.mxu0 %v113
    %2412 = vmatpush1.msra.mxu0 %v112
    %2413 = vmatprep.subr.mxu0 %v117
    %2414 = vmatpush1.msra.mxu0 %v116
    %2415 = vmatprep.subr.mxu0 %v121
    %2416 = vmatpush1.msra.mxu0 %v120
    %2417 = vmatprep.subr.mxu0 %v125
    %2418 = vmatpush1.msra.mxu0 %v124
    %2419 = vmatprep.subr.mxu0 %v129
    %2420 = vmatpush1.msra.mxu0 %v128
    %2421 = vmatprep.subr.mxu0 %v133
    %2422 = vmatpush1.msra.mxu0 %v132
    %2423 = vmatprep.subr.mxu0 %v137
    %2424 = vmatpush1.msra.mxu0 %v136
    %2425 = vmatprep.subr.mxu0 %v141
    %2426 = vmatpush1.msra.mxu0 %v140
    %2427 = vmatprep.subr.mxu0 %v145
    %2428 = vmatpush1.msra.mxu0 %v144
    %2429 = vmatprep.subr.mxu0 %v149
    %2430 = vmatpush1.msra.mxu0 %v148
    %2431 = vmatprep.subr.mxu0 %v153
    %2432 = vmatpush1.msra.mxu0 %v152
    %2433 = vmatprep.subr.mxu0 %v157
    %2434 = vmatpush1.msra.mxu0 %v156
    %2435 = vmatprep.subr.mxu0 %v161
    %2436 = vmatpush1.msra.mxu0 %v160
    %2437 = vmatprep.subr.mxu0 0.0
    %2438 = vmatpush1.msra.mxu0 0.0
    %2439 = vmatprep.subr.mxu0 0.0
    %2440 = vmatpush1.msra.mxu0 0.0
    %2441 = vmatprep.subr.mxu0 0.0
    %2442 = vmatpush1.msra.mxu0 0.0
    %2443 = vmatprep.subr.mxu0 0.0
    %2444 = vmatpush1.msra.mxu0 0.0
    %2445 = vmatprep.subr.mxu0 0.0
    %2446 = vmatpush1.msra.mxu0 0.0
    %2447 = vmatprep.subr.mxu0 0.0
    %2448 = vmatpush1.msra.mxu0 0.0
    %2449 = vmatprep.subr.mxu0 0.0
    %2450 = vmatpush1.msra.mxu0 0.0
    %2451 = vmatprep.subr.mxu0 0.0
    %2452 = vmatpush1.msra.mxu0 0.0
    %2453 = vmatprep.subr.mxu0 0.0
    %2454 = vmatpush1.msra.mxu0 0.0
    %2455 = vmatprep.subr.mxu0 0.0
    %2456 = vmatpush1.msra.mxu0 0.0
    %2457 = vmatprep.subr.mxu0 0.0
    %2458 = vmatpush1.msra.mxu0 0.0
    %2459 = vmatprep.subr.mxu0 0.0
    %2460 = vmatpush1.msra.mxu0 0.0
    %2461 = vmatprep.subr.mxu0 0.0
    %2462 = vmatpush1.msra.mxu0 0.0
    %2463 = vmatprep.subr.mxu0 0.0
    %2464 = vmatpush1.msra.mxu0 0.0
    %2465 = vmatprep.subr.mxu0 0.0
    %2466 = vmatpush1.msra.mxu0 0.0
    %2467 = vmatprep.subr.mxu0 0.0
    %2468 = vmatpush1.msra.mxu0 0.0
    %2469 = vmatprep.mubr.f32.mxu0 0.0
    %2470 = vmatmul.mubr.f32.gmra.mrb[0].mxu0 %v2318
    %v2471 = vpop.f32.mrb[0].mxu0
    %v2472 = vadd.f32 %v2332, %v2471
    %v2473 = vpop.f32.mrb[0].mxu0
    %v2474 = vadd.f32 %v2333, %v2473
    %2475 = vdwg.mxu0
    %v2476 = vxor.u32 %v2401, 2147483648
    %v2477 = vmul.f32 %v2476, 1.442695
    %v2478 = vpow.pop %v2477
    %v2479 = vadd.f32 %v2478, 1.0
    %v2480 = vrcp.pop %v2479
    %v2481 = vmul.f32 1.0, %v2480
    %v2482 = vxor.u32 %v2403, 2147483648
    %v2483 = vmul.f32 %v2482, 1.442695
    %v2484 = vpow.pop %v2483
    %v2485 = vadd.f32 %v2484, 1.0
    %v2486 = vrcp.pop %v2485
    %v2487 = vmul.f32 1.0, %v2486
    %v2488 = vtanh.pop %v2472
    %v2489 = vxor.u32 %v2474, 2147483648
    %v2490 = vmul.f32 %v2489, 1.442695
    %v2491 = vpow.pop %v2490
    %v2492 = vadd.f32 %v2491, 1.0
    %v2493 = vrcp.pop %v2492
    %v2494 = vmul.f32 1.0, %v2493
    %v2495 = vmul.f32 %v2487, %v2316
    %v2496 = vmul.f32 %v2481, %v2488
    %v2497 = vadd.f32 %v2495, %v2496
    %v2498 = vtanh.pop %v2497
    %v2499 = vmul.f32 %v2494, %v2498
    %s2500 = scalar_lea.vmem %s0, 104
    %v2501 = vld [vmem:[%s2500] sm:$0xff]
    %2503 = vset.pattern.permute.xlu0 0
    %2504 = vperm.xlu0 %2503, %v2501
    %v2505 = vpop.permute.xlu0 %2504
    %v2507 = vmul.f32 %v2505, %v52
    %v2508 = vmul.f32 %v2505, %v56
    %v2509 = vmul.f32 %v2505, %v60
    %v2510 = vmul.f32 %v2505, %v64
    %v2511 = vadd.f32 %v2507, %v77
    %v2512 = vadd.f32 %v2508, %v81
    %v2513 = vadd.f32 %v2509, %v85
    %v2514 = vadd.f32 %v2510, %v89
    %2515 = vmatprep.subr.mxu0 %v99
    %2516 = vmatpush1.msra.mxu0 %v98
    %2517 = vmatprep.subr.mxu0 %v103
    %2518 = vmatpush1.msra.mxu0 %v102
    %2519 = vmatprep.subr.mxu0 %v107
    %2520 = vmatpush1.msra.mxu0 %v106
    %2521 = vmatprep.subr.mxu0 %v111
    %2522 = vmatpush1.msra.mxu0 %v110
    %2523 = vmatprep.subr.mxu0 %v115
    %2524 = vmatpush1.msra.mxu0 %v114
    %2525 = vmatprep.subr.mxu0 %v119
    %2526 = vmatpush1.msra.mxu0 %v118
    %2527 = vmatprep.subr.mxu0 %v123
    %2528 = vmatpush1.msra.mxu0 %v122
    %2529 = vmatprep.subr.mxu0 %v127
    %2530 = vmatpush1.msra.mxu0 %v126
    %2531 = vmatprep.subr.mxu0 %v131
    %2532 = vmatpush1.msra.mxu0 %v130
    %2533 = vmatprep.subr.mxu0 %v135
    %2534 = vmatpush1.msra.mxu0 %v134
    %2535 = vmatprep.subr.mxu0 %v139
    %2536 = vmatpush1.msra.mxu0 %v138
    %2537 = vmatprep.subr.mxu0 %v143
    %2538 = vmatpush1.msra.mxu0 %v142
    %2539 = vmatprep.subr.mxu0 %v147
    %2540 = vmatpush1.msra.mxu0 %v146
    %2541 = vmatprep.subr.mxu0 %v151
    %2542 = vmatpush1.msra.mxu0 %v150
    %2543 = vmatprep.subr.mxu0 %v155
    %2544 = vmatpush1.msra.mxu0 %v154
    %2545 = vmatprep.subr.mxu0 %v159
    %2546 = vmatpush1.msra.mxu0 %v158
    %2547 = vmatprep.subr.mxu0 0.0
    %2548 = vmatpush1.msra.mxu0 0.0
    %2549 = vmatprep.subr.mxu0 0.0
    %2550 = vmatpush1.msra.mxu0 0.0
    %2551 = vmatprep.subr.mxu0 0.0
    %2552 = vmatpush1.msra.mxu0 0.0
    %2553 = vmatprep.subr.mxu0 0.0
    %2554 = vmatpush1.msra.mxu0 0.0
    %2555 = vmatprep.subr.mxu0 0.0
    %2556 = vmatpush1.msra.mxu0 0.0
    %2557 = vmatprep.subr.mxu0 0.0
    %2558 = vmatpush1.msra.mxu0 0.0
    %2559 = vmatprep.subr.mxu0 0.0
    %2560 = vmatpush1.msra.mxu0 0.0
    %2561 = vmatprep.subr.mxu0 0.0
    %2562 = vmatpush1.msra.mxu0 0.0
    %2563 = vmatprep.subr.mxu0 0.0
    %2564 = vmatpush1.msra.mxu0 0.0
    %2565 = vmatprep.subr.mxu0 0.0
    %2566 = vmatpush1.msra.mxu0 0.0
    %2567 = vmatprep.subr.mxu0 0.0
    %2568 = vmatpush1.msra.mxu0 0.0
    %2569 = vmatprep.subr.mxu0 0.0
    %2570 = vmatpush1.msra.mxu0 0.0
    %2571 = vmatprep.subr.mxu0 0.0
    %2572 = vmatpush1.msra.mxu0 0.0
    %2573 = vmatprep.subr.mxu0 0.0
    %2574 = vmatpush1.msra.mxu0 0.0
    %2575 = vmatprep.subr.mxu0 0.0
    %2576 = vmatpush1.msra.mxu0 0.0
    %2577 = vmatprep.subr.mxu0 0.0
    %2578 = vmatpush1.msra.mxu0 0.0
    %2579 = vmatprep.mubr.f32.mxu0 0.0
    %2580 = vmatmul.mubr.f32.gmra.mrb[0].mxu0 %v2499
    %v2581 = vpop.f32.mrb[0].mxu0
    %v2582 = vadd.f32 %v2511, %v2581
    %v2583 = vpop.f32.mrb[0].mxu0
    %v2584 = vadd.f32 %v2512, %v2583
    %2585 = vdwg.mxu0
    %2586 = vmatprep.subr.mxu0 %v101
    %2587 = vmatpush1.msra.mxu0 %v100
    %2588 = vmatprep.subr.mxu0 %v105
    %2589 = vmatpush1.msra.mxu0 %v104
    %2590 = vmatprep.subr.mxu0 %v109
    %2591 = vmatpush1.msra.mxu0 %v108
    %2592 = vmatprep.subr.mxu0 %v113
    %2593 = vmatpush1.msra.mxu0 %v112
    %2594 = vmatprep.subr.mxu0 %v117
    %2595 = vmatpush1.msra.mxu0 %v116
    %2596 = vmatprep.subr.mxu0 %v121
    %2597 = vmatpush1.msra.mxu0 %v120
    %2598 = vmatprep.subr.mxu0 %v125
    %2599 = vmatpush1.msra.mxu0 %v124
    %2600 = vmatprep.subr.mxu0 %v129
    %2601 = vmatpush1.msra.mxu0 %v128
    %2602 = vmatprep.subr.mxu0 %v133
    %2603 = vmatpush1.msra.mxu0 %v132
    %2604 = vmatprep.subr.mxu0 %v137
    %2605 = vmatpush1.msra.mxu0 %v136
    %2606 = vmatprep.subr.mxu0 %v141
    %2607 = vmatpush1.msra.mxu0 %v140
    %2608 = vmatprep.subr.mxu0 %v145
    %2609 = vmatpush1.msra.mxu0 %v144
    %2610 = vmatprep.subr.mxu0 %v149
    %2611 = vmatpush1.msra.mxu0 %v148
    %2612 = vmatprep.subr.mxu0 %v153
    %2613 = vmatpush1.msra.mxu0 %v152
    %2614 = vmatprep.subr.mxu0 %v157
    %2615 = vmatpush1.msra.mxu0 %v156
    %2616 = vmatprep.subr.mxu0 %v161
    %2617 = vmatpush1.msra.mxu0 %v160
    %2618 = vmatprep.subr.mxu0 0.0
    %2619 = vmatpush1.msra.mxu0 0.0
    %2620 = vmatprep.subr.mxu0 0.0
    %2621 = vmatpush1.msra.mxu0 0.0
    %2622 = vmatprep.subr.mxu0 0.0
    %2623 = vmatpush1.msra.mxu0 0.0
    %2624 = vmatprep.subr.mxu0 0.0
    %2625 = vmatpush1.msra.mxu0 0.0
    %2626 = vmatprep.subr.mxu0 0.0
    %2627 = vmatpush1.msra.mxu0 0.0
    %2628 = vmatprep.subr.mxu0 0.0
    %2629 = vmatpush1.msra.mxu0 0.0
    %2630 = vmatprep.subr.mxu0 0.0
    %2631 = vmatpush1.msra.mxu0 0.0
    %2632 = vmatprep.subr.mxu0 0.0
    %2633 = vmatpush1.msra.mxu0 0.0
    %2634 = vmatprep.subr.mxu0 0.0
    %2635 = vmatpush1.msra.mxu0 0.0
    %2636 = vmatprep.subr.mxu0 0.0
    %2637 = vmatpush1.msra.mxu0 0.0
    %2638 = vmatprep.subr.mxu0 0.0
    %2639 = vmatpush1.msra.mxu0 0.0
    %2640 = vmatprep.subr.mxu0 0.0
    %2641 = vmatpush1.msra.mxu0 0.0
    %2642 = vmatprep.subr.mxu0 0.0
    %2643 = vmatpush1.msra.mxu0 0.0
    %2644 = vmatprep.subr.mxu0 0.0
    %2645 = vmatpush1.msra.mxu0 0.0
    %2646 = vmatprep.subr.mxu0 0.0
    %2647 = vmatpush1.msra.mxu0 0.0
    %2648 = vmatprep.subr.mxu0 0.0
    %2649 = vmatpush1.msra.mxu0 0.0
    %2650 = vmatprep.mubr.f32.mxu0 0.0
    %2651 = vmatmul.mubr.f32.gmra.mrb[0].mxu0 %v2499
    %v2652 = vpop.f32.mrb[0].mxu0
    %v2653 = vadd.f32 %v2513, %v2652
    %v2654 = vpop.f32.mrb[0].mxu0
    %v2655 = vadd.f32 %v2514, %v2654
    %2656 = vdwg.mxu0
    %v2657 = vxor.u32 %v2582, 2147483648
    %v2658 = vmul.f32 %v2657, 1.442695
    %v2659 = vpow.pop %v2658
    %v2660 = vadd.f32 %v2659, 1.0
    %v2661 = vrcp.pop %v2660
    %v2662 = vmul.f32 1.0, %v2661
    %v2663 = vxor.u32 %v2584, 2147483648
    %v2664 = vmul.f32 %v2663, 1.442695
    %v2665 = vpow.pop %v2664
    %v2666 = vadd.f32 %v2665, 1.0
    %v2667 = vrcp.pop %v2666
    %v2668 = vmul.f32 1.0, %v2667
    %v2669 = vtanh.pop %v2653
    %v2670 = vxor.u32 %v2655, 2147483648
    %v2671 = vmul.f32 %v2670, 1.442695
    %v2672 = vpow.pop %v2671
    %v2673 = vadd.f32 %v2672, 1.0
    %v2674 = vrcp.pop %v2673
    %v2675 = vmul.f32 1.0, %v2674
    %v2676 = vmul.f32 %v2668, %v2497
    %v2677 = vmul.f32 %v2662, %v2669
    %v2678 = vadd.f32 %v2676, %v2677
    %v2679 = vtanh.pop %v2678
    %v2680 = vmul.f32 %v2675, %v2679
    %s2681 = scalar_lea.vmem %s0, 112
    %v2682 = vld [vmem:[%s2681] sm:$0xff]
    %2684 = vset.pattern.permute.xlu0 0
    %2685 = vperm.xlu0 %2684, %v2682
    %v2686 = vpop.permute.xlu0 %2685
    %v2688 = vmul.f32 %v2686, %v52
    %v2689 = vmul.f32 %v2686, %v56
    %v2690 = vmul.f32 %v2686, %v60
    %v2691 = vmul.f32 %v2686, %v64
    %v2692 = vadd.f32 %v2688, %v77
    %v2693 = vadd.f32 %v2689, %v81
    %v2694 = vadd.f32 %v2690, %v85
    %v2695 = vadd.f32 %v2691, %v89
    %2696 = vmatprep.subr.mxu0 %v99
    %2697 = vmatpush1.msra.mxu0 %v98
    %2698 = vmatprep.subr.mxu0 %v103
    %2699 = vmatpush1.msra.mxu0 %v102
    %2700 = vmatprep.subr.mxu0 %v107
    %2701 = vmatpush1.msra.mxu0 %v106
    %2702 = vmatprep.subr.mxu0 %v111
    %2703 = vmatpush1.msra.mxu0 %v110
    %2704 = vmatprep.subr.mxu0 %v115
    %2705 = vmatpush1.msra.mxu0 %v114
    %2706 = vmatprep.subr.mxu0 %v119
    %2707 = vmatpush1.msra.mxu0 %v118
    %2708 = vmatprep.subr.mxu0 %v123
    %2709 = vmatpush1.msra.mxu0 %v122
    %2710 = vmatprep.subr.mxu0 %v127
    %2711 = vmatpush1.msra.mxu0 %v126
    %2712 = vmatprep.subr.mxu0 %v131
    %2713 = vmatpush1.msra.mxu0 %v130
    %2714 = vmatprep.subr.mxu0 %v135
    %2715 = vmatpush1.msra.mxu0 %v134
    %2716 = vmatprep.subr.mxu0 %v139
    %2717 = vmatpush1.msra.mxu0 %v138
    %2718 = vmatprep.subr.mxu0 %v143
    %2719 = vmatpush1.msra.mxu0 %v142
    %2720 = vmatprep.subr.mxu0 %v147
    %2721 = vmatpush1.msra.mxu0 %v146
    %2722 = vmatprep.subr.mxu0 %v151
    %2723 = vmatpush1.msra.mxu0 %v150
    %2724 = vmatprep.subr.mxu0 %v155
    %2725 = vmatpush1.msra.mxu0 %v154
    %2726 = vmatprep.subr.mxu0 %v159
    %2727 = vmatpush1.msra.mxu0 %v158
    %2728 = vmatprep.subr.mxu0 0.0
    %2729 = vmatpush1.msra.mxu0 0.0
    %2730 = vmatprep.subr.mxu0 0.0
    %2731 = vmatpush1.msra.mxu0 0.0
    %2732 = vmatprep.subr.mxu0 0.0
    %2733 = vmatpush1.msra.mxu0 0.0
    %2734 = vmatprep.subr.mxu0 0.0
    %2735 = vmatpush1.msra.mxu0 0.0
    %2736 = vmatprep.subr.mxu0 0.0
    %2737 = vmatpush1.msra.mxu0 0.0
    %2738 = vmatprep.subr.mxu0 0.0
    %2739 = vmatpush1.msra.mxu0 0.0
    %2740 = vmatprep.subr.mxu0 0.0
    %2741 = vmatpush1.msra.mxu0 0.0
    %2742 = vmatprep.subr.mxu0 0.0
    %2743 = vmatpush1.msra.mxu0 0.0
    %2744 = vmatprep.subr.mxu0 0.0
    %2745 = vmatpush1.msra.mxu0 0.0
    %2746 = vmatprep.subr.mxu0 0.0
    %2747 = vmatpush1.msra.mxu0 0.0
    %2748 = vmatprep.subr.mxu0 0.0
    %2749 = vmatpush1.msra.mxu0 0.0
    %2750 = vmatprep.subr.mxu0 0.0
    %2751 = vmatpush1.msra.mxu0 0.0
    %2752 = vmatprep.subr.mxu0 0.0
    %2753 = vmatpush1.msra.mxu0 0.0
    %2754 = vmatprep.subr.mxu0 0.0
    %2755 = vmatpush1.msra.mxu0 0.0
    %2756 = vmatprep.subr.mxu0 0.0
    %2757 = vmatpush1.msra.mxu0 0.0
    %2758 = vmatprep.subr.mxu0 0.0
    %2759 = vmatpush1.msra.mxu0 0.0
    %2760 = vmatprep.mubr.f32.mxu0 0.0
    %2761 = vmatmul.mubr.f32.gmra.mrb[0].mxu0 %v2680
    %v2762 = vpop.f32.mrb[0].mxu0
    %v2763 = vadd.f32 %v2692, %v2762
    %v2764 = vpop.f32.mrb[0].mxu0
    %v2765 = vadd.f32 %v2693, %v2764
    %2766 = vdwg.mxu0
    %2767 = vmatprep.subr.mxu0 %v101
    %2768 = vmatpush1.msra.mxu0 %v100
    %2769 = vmatprep.subr.mxu0 %v105
    %2770 = vmatpush1.msra.mxu0 %v104
    %2771 = vmatprep.subr.mxu0 %v109
    %2772 = vmatpush1.msra.mxu0 %v108
    %2773 = vmatprep.subr.mxu0 %v113
    %2774 = vmatpush1.msra.mxu0 %v112
    %2775 = vmatprep.subr.mxu0 %v117
    %2776 = vmatpush1.msra.mxu0 %v116
    %2777 = vmatprep.subr.mxu0 %v121
    %2778 = vmatpush1.msra.mxu0 %v120
    %2779 = vmatprep.subr.mxu0 %v125
    %2780 = vmatpush1.msra.mxu0 %v124
    %2781 = vmatprep.subr.mxu0 %v129
    %2782 = vmatpush1.msra.mxu0 %v128
    %2783 = vmatprep.subr.mxu0 %v133
    %2784 = vmatpush1.msra.mxu0 %v132
    %2785 = vmatprep.subr.mxu0 %v137
    %2786 = vmatpush1.msra.mxu0 %v136
    %2787 = vmatprep.subr.mxu0 %v141
    %2788 = vmatpush1.msra.mxu0 %v140
    %2789 = vmatprep.subr.mxu0 %v145
    %2790 = vmatpush1.msra.mxu0 %v144
    %2791 = vmatprep.subr.mxu0 %v149
    %2792 = vmatpush1.msra.mxu0 %v148
    %2793 = vmatprep.subr.mxu0 %v153
    %2794 = vmatpush1.msra.mxu0 %v152
    %2795 = vmatprep.subr.mxu0 %v157
    %2796 = vmatpush1.msra.mxu0 %v156
    %2797 = vmatprep.subr.mxu0 %v161
    %2798 = vmatpush1.msra.mxu0 %v160
    %2799 = vmatprep.subr.mxu0 0.0
    %2800 = vmatpush1.msra.mxu0 0.0
    %2801 = vmatprep.subr.mxu0 0.0
    %2802 = vmatpush1.msra.mxu0 0.0
    %2803 = vmatprep.subr.mxu0 0.0
    %2804 = vmatpush1.msra.mxu0 0.0
    %2805 = vmatprep.subr.mxu0 0.0
    %2806 = vmatpush1.msra.mxu0 0.0
    %2807 = vmatprep.subr.mxu0 0.0
    %2808 = vmatpush1.msra.mxu0 0.0
    %2809 = vmatprep.subr.mxu0 0.0
    %2810 = vmatpush1.msra.mxu0 0.0
    %2811 = vmatprep.subr.mxu0 0.0
    %2812 = vmatpush1.msra.mxu0 0.0
    %2813 = vmatprep.subr.mxu0 0.0
    %2814 = vmatpush1.msra.mxu0 0.0
    %2815 = vmatprep.subr.mxu0 0.0
    %2816 = vmatpush1.msra.mxu0 0.0
    %2817 = vmatprep.subr.mxu0 0.0
    %2818 = vmatpush1.msra.mxu0 0.0
    %2819 = vmatprep.subr.mxu0 0.0
    %2820 = vmatpush1.msra.mxu0 0.0
    %2821 = vmatprep.subr.mxu0 0.0
    %2822 = vmatpush1.msra.mxu0 0.0
    %2823 = vmatprep.subr.mxu0 0.0
    %2824 = vmatpush1.msra.mxu0 0.0
    %2825 = vmatprep.subr.mxu0 0.0
    %2826 = vmatpush1.msra.mxu0 0.0
    %2827 = vmatprep.subr.mxu0 0.0
    %2828 = vmatpush1.msra.mxu0 0.0
    %2829 = vmatprep.subr.mxu0 0.0
    %2830 = vmatpush1.msra.mxu0 0.0
    %2831 = vmatprep.mubr.f32.mxu0 0.0
    %2832 = vmatmul.mubr.f32.gmra.mrb[0].mxu0 %v2680
    %v2833 = vpop.f32.mrb[0].mxu0
    %v2834 = vadd.f32 %v2694, %v2833
    %v2835 = vpop.f32.mrb[0].mxu0
    %v2836 = vadd.f32 %v2695, %v2835
    %2837 = vdwg.mxu0
    %v2838 = vxor.u32 %v2763, 2147483648
    %v2839 = vmul.f32 %v2838, 1.442695
    %v2840 = vpow.pop %v2839
    %v2841 = vadd.f32 %v2840, 1.0
    %v2842 = vrcp.pop %v2841
    %v2843 = vmul.f32 1.0, %v2842
    %v2844 = vxor.u32 %v2765, 2147483648
    %v2845 = vmul.f32 %v2844, 1.442695
    %v2846 = vpow.pop %v2845
    %v2847 = vadd.f32 %v2846, 1.0
    %v2848 = vrcp.pop %v2847
    %v2849 = vmul.f32 1.0, %v2848
    %v2850 = vtanh.pop %v2834
    %v2851 = vxor.u32 %v2836, 2147483648
    %v2852 = vmul.f32 %v2851, 1.442695
    %v2853 = vpow.pop %v2852
    %v2854 = vadd.f32 %v2853, 1.0
    %v2855 = vrcp.pop %v2854
    %v2856 = vmul.f32 1.0, %v2855
    %v2857 = vmul.f32 %v2849, %v2678
    %v2858 = vmul.f32 %v2843, %v2850
    %v2859 = vadd.f32 %v2857, %v2858
    %v2860 = vtanh.pop %v2859
    %v2861 = vmul.f32 %v2856, %v2860
    %s2862 = scalar_lea.vmem %s0, 120
    %v2863 = vld [vmem:[%s2862] sm:$0xff]
    %2865 = vset.pattern.permute.xlu0 0
    %2866 = vperm.xlu0 %2865, %v2863
    %v2867 = vpop.permute.xlu0 %2866
    %v2869 = vmul.f32 %v2867, %v52
    %v2870 = vmul.f32 %v2867, %v56
    %v2871 = vmul.f32 %v2867, %v60
    %v2872 = vmul.f32 %v2867, %v64
    %v2873 = vadd.f32 %v2869, %v77
    %v2874 = vadd.f32 %v2870, %v81
    %v2875 = vadd.f32 %v2871, %v85
    %v2876 = vadd.f32 %v2872, %v89
    %2877 = vmatprep.subr.mxu0 %v99
    %2878 = vmatpush1.msra.mxu0 %v98
    %2879 = vmatprep.subr.mxu0 %v103
    %2880 = vmatpush1.msra.mxu0 %v102
    %2881 = vmatprep.subr.mxu0 %v107
    %2882 = vmatpush1.msra.mxu0 %v106
    %2883 = vmatprep.subr.mxu0 %v111
    %2884 = vmatpush1.msra.mxu0 %v110
    %2885 = vmatprep.subr.mxu0 %v115
    %2886 = vmatpush1.msra.mxu0 %v114
    %2887 = vmatprep.subr.mxu0 %v119
    %2888 = vmatpush1.msra.mxu0 %v118
    %2889 = vmatprep.subr.mxu0 %v123
    %2890 = vmatpush1.msra.mxu0 %v122
    %2891 = vmatprep.subr.mxu0 %v127
    %2892 = vmatpush1.msra.mxu0 %v126
    %2893 = vmatprep.subr.mxu0 %v131
    %2894 = vmatpush1.msra.mxu0 %v130
    %2895 = vmatprep.subr.mxu0 %v135
    %2896 = vmatpush1.msra.mxu0 %v134
    %2897 = vmatprep.subr.mxu0 %v139
    %2898 = vmatpush1.msra.mxu0 %v138
    %2899 = vmatprep.subr.mxu0 %v143
    %2900 = vmatpush1.msra.mxu0 %v142
    %2901 = vmatprep.subr.mxu0 %v147
    %2902 = vmatpush1.msra.mxu0 %v146
    %2903 = vmatprep.subr.mxu0 %v151
    %2904 = vmatpush1.msra.mxu0 %v150
    %2905 = vmatprep.subr.mxu0 %v155
    %2906 = vmatpush1.msra.mxu0 %v154
    %2907 = vmatprep.subr.mxu0 %v159
    %2908 = vmatpush1.msra.mxu0 %v158
    %2909 = vmatprep.subr.mxu0 0.0
    %2910 = vmatpush1.msra.mxu0 0.0
    %2911 = vmatprep.subr.mxu0 0.0
    %2912 = vmatpush1.msra.mxu0 0.0
    %2913 = vmatprep.subr.mxu0 0.0
    %2914 = vmatpush1.msra.mxu0 0.0
    %2915 = vmatprep.subr.mxu0 0.0
    %2916 = vmatpush1.msra.mxu0 0.0
    %2917 = vmatprep.subr.mxu0 0.0
    %2918 = vmatpush1.msra.mxu0 0.0
    %2919 = vmatprep.subr.mxu0 0.0
    %2920 = vmatpush1.msra.mxu0 0.0
    %2921 = vmatprep.subr.mxu0 0.0
    %2922 = vmatpush1.msra.mxu0 0.0
    %2923 = vmatprep.subr.mxu0 0.0
    %2924 = vmatpush1.msra.mxu0 0.0
    %2925 = vmatprep.subr.mxu0 0.0
    %2926 = vmatpush1.msra.mxu0 0.0
    %2927 = vmatprep.subr.mxu0 0.0
    %2928 = vmatpush1.msra.mxu0 0.0
    %2929 = vmatprep.subr.mxu0 0.0
    %2930 = vmatpush1.msra.mxu0 0.0
    %2931 = vmatprep.subr.mxu0 0.0
    %2932 = vmatpush1.msra.mxu0 0.0
    %2933 = vmatprep.subr.mxu0 0.0
    %2934 = vmatpush1.msra.mxu0 0.0
    %2935 = vmatprep.subr.mxu0 0.0
    %2936 = vmatpush1.msra.mxu0 0.0
    %2937 = vmatprep.subr.mxu0 0.0
    %2938 = vmatpush1.msra.mxu0 0.0
    %2939 = vmatprep.subr.mxu0 0.0
    %2940 = vmatpush1.msra.mxu0 0.0
    %2941 = vmatprep.mubr.f32.mxu0 0.0
    %2942 = vmatmul.mubr.f32.gmra.mrb[0].mxu0 %v2861
    %v2943 = vpop.f32.mrb[0].mxu0
    %v2944 = vadd.f32 %v2873, %v2943
    %v2945 = vpop.f32.mrb[0].mxu0
    %v2946 = vadd.f32 %v2874, %v2945
    %2947 = vdwg.mxu0
    %2948 = vmatprep.subr.mxu0 %v101
    %2949 = vmatpush1.msra.mxu0 %v100
    %2950 = vmatprep.subr.mxu0 %v105
    %2951 = vmatpush1.msra.mxu0 %v104
    %2952 = vmatprep.subr.mxu0 %v109
    %2953 = vmatpush1.msra.mxu0 %v108
    %2954 = vmatprep.subr.mxu0 %v113
    %2955 = vmatpush1.msra.mxu0 %v112
    %2956 = vmatprep.subr.mxu0 %v117
    %2957 = vmatpush1.msra.mxu0 %v116
    %2958 = vmatprep.subr.mxu0 %v121
    %2959 = vmatpush1.msra.mxu0 %v120
    %2960 = vmatprep.subr.mxu0 %v125
    %2961 = vmatpush1.msra.mxu0 %v124
    %2962 = vmatprep.subr.mxu0 %v129
    %2963 = vmatpush1.msra.mxu0 %v128
    %2964 = vmatprep.subr.mxu0 %v133
    %2965 = vmatpush1.msra.mxu0 %v132
    %2966 = vmatprep.subr.mxu0 %v137
    %2967 = vmatpush1.msra.mxu0 %v136
    %2968 = vmatprep.subr.mxu0 %v141
    %2969 = vmatpush1.msra.mxu0 %v140
    %2970 = vmatprep.subr.mxu0 %v145
    %2971 = vmatpush1.msra.mxu0 %v144
    %2972 = vmatprep.subr.mxu0 %v149
    %2973 = vmatpush1.msra.mxu0 %v148
    %2974 = vmatprep.subr.mxu0 %v153
    %2975 = vmatpush1.msra.mxu0 %v152
    %2976 = vmatprep.subr.mxu0 %v157
    %2977 = vmatpush1.msra.mxu0 %v156
    %2978 = vmatprep.subr.mxu0 %v161
    %2979 = vmatpush1.msra.mxu0 %v160
    %2980 = vmatprep.subr.mxu0 0.0
    %2981 = vmatpush1.msra.mxu0 0.0
    %2982 = vmatprep.subr.mxu0 0.0
    %2983 = vmatpush1.msra.mxu0 0.0
    %2984 = vmatprep.subr.mxu0 0.0
    %2985 = vmatpush1.msra.mxu0 0.0
    %2986 = vmatprep.subr.mxu0 0.0
    %2987 = vmatpush1.msra.mxu0 0.0
    %2988 = vmatprep.subr.mxu0 0.0
    %2989 = vmatpush1.msra.mxu0 0.0
    %2990 = vmatprep.subr.mxu0 0.0
    %2991 = vmatpush1.msra.mxu0 0.0
    %2992 = vmatprep.subr.mxu0 0.0
    %2993 = vmatpush1.msra.mxu0 0.0
    %2994 = vmatprep.subr.mxu0 0.0
    %2995 = vmatpush1.msra.mxu0 0.0
    %2996 = vmatprep.subr.mxu0 0.0
    %2997 = vmatpush1.msra.mxu0 0.0
    %2998 = vmatprep.subr.mxu0 0.0
    %2999 = vmatpush1.msra.mxu0 0.0
    %3000 = vmatprep.subr.mxu0 0.0
    %3001 = vmatpush1.msra.mxu0 0.0
    %3002 = vmatprep.subr.mxu0 0.0
    %3003 = vmatpush1.msra.mxu0 0.0
    %3004 = vmatprep.subr.mxu0 0.0
    %3005 = vmatpush1.msra.mxu0 0.0
    %3006 = vmatprep.subr.mxu0 0.0
    %3007 = vmatpush1.msra.mxu0 0.0
    %3008 = vmatprep.subr.mxu0 0.0
    %3009 = vmatpush1.msra.mxu0 0.0
    %3010 = vmatprep.subr.mxu0 0.0
    %3011 = vmatpush1.msra.mxu0 0.0
    %3012 = vmatprep.mubr.f32.mxu0 0.0
    %3013 = vmatmul.mubr.f32.gmra.mrb[0].mxu0 %v2861
    %v3014 = vpop.f32.mrb[0].mxu0
    %v3015 = vadd.f32 %v2875, %v3014
    %v3016 = vpop.f32.mrb[0].mxu0
    %v3017 = vadd.f32 %v2876, %v3016
    %3018 = vdwg.mxu0
    %v3019 = vxor.u32 %v2944, 2147483648
    %v3020 = vmul.f32 %v3019, 1.442695
    %v3021 = vpow.pop %v3020
    %v3022 = vadd.f32 %v3021, 1.0
    %v3023 = vrcp.pop %v3022
    %v3024 = vmul.f32 1.0, %v3023
    %v3025 = vxor.u32 %v2946, 2147483648
    %v3026 = vmul.f32 %v3025, 1.442695
    %v3027 = vpow.pop %v3026
    %v3028 = vadd.f32 %v3027, 1.0
    %v3029 = vrcp.pop %v3028
    %v3030 = vmul.f32 1.0, %v3029
    %v3031 = vtanh.pop %v3015
    %v3032 = vxor.u32 %v3017, 2147483648
    %v3033 = vmul.f32 %v3032, 1.442695
    %v3034 = vpow.pop %v3033
    %v3035 = vadd.f32 %v3034, 1.0
    %v3036 = vrcp.pop %v3035
    %v3037 = vmul.f32 1.0, %v3036
    %v3038 = vmul.f32 %v3030, %v2859
    %v3039 = vmul.f32 %v3024, %v3031
    %v3040 = vadd.f32 %v3038, %v3039
    %v3041 = vtanh.pop %v3040
    %v3042 = vmul.f32 %v3037, %v3041
    %3043 = vst [vmem:[#allocation2] sm:$0xff] %v3042
    %3044 = vst [vmem:[#allocation3] sm:$0xff] %v3040
    %3045 = vst [vmem:[#allocation7] sm:$0xff] %v3042
    // Predicated region
    $region26: #{tpu_custom_call.1} parent=1 // pred_check
      _
    $region27: #{tpu_custom_call.1} parent=1 // pred_check_branch
      %3047 = sbr.rel (0) target = $region29
    $region28: #{tpu_custom_call.1} parent=1 // pred_region
      %s3049 = ssub.s32 128, 128
      %3050 = vsyncadd [#allocation6], %s3049
      %s3052 = sshll.u32 [#allocation7], 4
      %s3053 = int_to_ptr.vmem [resolvable:$true] %s3052
      %3055 = dma.vmem_to_hbm [thread:$0]  %s3053, 128, %s4, [#allocation6]
    $region29: #{tpu_custom_call.1} parent=1 // pred_fallthru
      _
    // Predicated region
    $region30: #{tpu_custom_call.1} parent=1 // pred_check
      _
    $region31: #{tpu_custom_call.1} parent=1 // pred_check_branch
      %3057 = sbr.rel (0) target = $region33
    $region32: #{tpu_custom_call.1} parent=1 // pred_region
      %3058 = dma.done [#allocation6], 128
    $region33: #{tpu_custom_call.1} parent=1 // pred_fallthru
      _
    %3059 = vsyncpa [#allocation5], 1
    %3060 = vsyncpa [#allocation6], 1

</llo_original>
